<compile_context>
chip_gen: v7x
topology: tpu7x:2x2x1
jax: 0.10.0
libtpu: 0.0.40
codegen_flags: <defaults>
</compile_context>

<pallas_src>
import functools
import math

import jax
import jax.numpy as jnp
from jax.experimental import pallas as pl
from jax.experimental.pallas import tpu as pltpu


def _round_up(a, b):
    return ((a + b - 1) // b) * b


# ---------------------------------------------------------------------------
# Kernels
# ---------------------------------------------------------------------------
def _bn_stats_kernel(x_ref, part_ref):
    """Per-row-tile partial (sum, sum-of-squares) for one-pass BatchNorm stats.

    Padded tail rows are zero so they contribute nothing to either partial.
    """
    x = x_ref[...]                                            # (TP, C) f32
    part_ref[0:1, 0:1, :] = jnp.sum(x, axis=0, keepdims=True)[None]
    part_ref[0:1, 1:2, :] = jnp.sum(x * x, axis=0, keepdims=True)[None]


def _bn_relu_conv1_kernel(x_ref, sc1_ref, sh1_ref, w1_ref, y_ref, part_ref, *,
                          n_rows, masked):
    """BN1 (precomputed scale/shift) + ReLU + 1x1 conv (channel matmul on the MXU),
    fused with the per-tile partial stats needed by BN2.

    y is stored in bf16 (halves the HBM traffic of the largest intermediate); the
    partial stats are taken from the f32 accumulator before the cast.  Rows past
    `n_rows` (zero padding added so the grid divides) are masked out of the stats.
    """
    x = x_ref[...]                                                   # (TP, Cin) f32
    xh = jnp.maximum(x * sc1_ref[...] + sh1_ref[...], 0.0)           # BN1 + ReLU (f32)
    y = jnp.dot(xh.astype(jnp.bfloat16), w1_ref[...],                # bf16 MXU operands
                preferred_element_type=jnp.float32)                  # (TP, Cm) f32 acc
    y_ref[...] = y.astype(y_ref.dtype)                               # bf16 store
    if masked:
        tp, cm = y.shape
        row = jax.lax.broadcasted_iota(jnp.int32, (tp, cm), 0) + pl.program_id(0) * tp
        y = jnp.where(row < n_rows, y, 0.0)
    part_ref[0:1, 0:1, :] = jnp.sum(y, axis=0, keepdims=True)[None]
    part_ref[0:1, 1:2, :] = jnp.sum(y * y, axis=0, keepdims=True)[None]


def _bn_relu_maskedconv2_kernel(y_ref, sc2_ref, sh2_ref, w2_ref, out_ref,
                                pad_ref, halo_ref):
    """BN2 + ReLU + causal KxK MaskedConv2d on one (batch, H-strip) tile.

    Causality: only kernel rows kh <= K//2 are used, i.e. MaskedConv2d semantics
    are enforced here regardless of whether w2 was pre-masked.  The `pad` rows of
    context above the strip are the BN2+ReLU'd last rows of the previous strip,
    carried in halo_ref across the sequential ("arbitrary") strip axis and zeroed
    at the first strip of each image; the batch axis may be "parallel".
    """
    strip = pl.program_id(1)
    th_p, _, cm = pad_ref.shape
    _, th, w, _ = y_ref.shape
    pad = th_p - th
    kk = 2 * pad + 1
    cout = out_ref.shape[2]

    # BN2 + ReLU in f32 (y stored as bf16), then bf16 for the MXU.
    yh = jnp.maximum(y_ref[0].astype(jnp.float32) * sc2_ref[...] + sh2_ref[...],
                     0.0).astype(jnp.bfloat16)                        # (TH, W, Cm)

    @pl.when(strip == 0)
    def _():                                                          # top of the image
        halo_ref[...] = jnp.zeros(halo_ref.shape, halo_ref.dtype)

    # Padded strip buffer: only the left/right pad columns need zeroing — the
    # interior and the top halo rows are fully overwritten right below.
    pad_ref[:, 0:pad, :] = jnp.zeros((th_p, pad, cm), pad_ref.dtype)
    pad_ref[:, pad + w:, :] = jnp.zeros((th_p, pad, cm), pad_ref.dtype)
    pad_ref[0:pad, pad:pad + w, :] = halo_ref[...]
    pad_ref[pad:pad + th, pad:pad + w, :] = yh
    if th >= pad:                                  # context for the next strip
        halo_ref[...] = yh[th - pad:th, :, :]

    # Causal conv as (pad+1)*K per-tap matmuls accumulated in f32
    # (no im2col scratch -> no 6x copy round trip, small VMEM footprint).
    acc = jnp.zeros((th * w, cout), jnp.float32)
    for kh in range(pad + 1):
        for kw in range(kk):
            win = pad_ref[kh:kh + th, kw:kw + w, :].reshape(th * w, cm)
            acc = acc + jnp.dot(win, w2_ref[kh * kk + kw],
                                preferred_element_type=jnp.float32)

    # Lane-dense store: (Cout, TH*W) puts >=128 elements on the lane axis.
    out_ref[...] = jnp.transpose(acc)[None, None, :, :].astype(out_ref.dtype)


# ---------------------------------------------------------------------------
# Wrapper helpers
# ---------------------------------------------------------------------------
def _vmem_limit_bytes():
    """Generation-aware scoped-VMEM limit (~25% headroom, capped at 96 MiB)."""
    try:
        cap = int(pltpu.get_tpu_info().vmem_capacity_bytes)
    except Exception:
        cap = 64 * 1024 * 1024            # conservative (v7x per-core physical)
    return max(32 * 1024 * 1024, min(cap * 3 // 4, 96 * 1024 * 1024))


def _pick_h_tile(H, W, pad, target_rows):
    """Largest divisor TH of H (TH >= pad) with TH*W <= target_rows, else the
    smallest legal divisor.  More strips -> DMA pipelining / better megacore
    balance for pass 3; TH*W is the matmul M per strip."""
    divs = [d for d in range(1, H + 1) if H % d == 0 and d >= max(1, pad)]
    if not divs:
        divs = [H]
    fit = [d for d in divs if d * W <= target_rows]
    return max(fit) if fit else min(divs)


# ---------------------------------------------------------------------------
# Wrapper
# ---------------------------------------------------------------------------
def dense_layer_mask_forward(x_nchw, w1_oihw, w2_oihw, g1, b1, g2, b2,
                             mask=None, eps=1e-5, row_tile=1024,
                             strip_target_rows=512):
    """x_nchw: (N, Cin, H, W). Returns (N, Cin + growth, H, W) like the torch module.

    `mask` is accepted for API parity with _DenseBlock.forward_mask but IGNORED
    (MaskedConv2d swallows it via *args); causality is realised by summing only
    kernel rows kh <= K//2, matching MaskedConv2d even if an unmasked w2 is passed.
    """
    # TODO(synk): F.dropout (drop_rate > 0) not implemented — module default
    # drop_rate=0 makes it a no-op.
    del mask
    x_nchw = x_nchw.astype(jnp.float32)
    N, Cin, H, W = x_nchw.shape
    Cm = w1_oihw.shape[0]
    Cout, _, K, _ = w2_oihw.shape
    pad = K // 2
    assert pad >= 1, "kernel_size must be >= 3 (module default is 3)"
    P = N * H * W

    # NHWC puts channels on the 128-lane axis inside the kernels.
    # TODO(synk): in a full DenseNet block keep activations NHWC end-to-end and
    # fuse the next layer's BN1 stats into this layer's pass 3.
    x_nhwc = jnp.transpose(x_nchw, (0, 2, 3, 1))
    x2 = x_nhwc.reshape(P, Cin)

    # Row tiling for the memory-bound passes: pad P up to a tile multiple (zero
    # tail rows, masked out of the BN2 stats) rather than requiring an exact
    # divisor or falling back to a whole-array block.
    TP = min(_round_up(int(row_tile), 16), _round_up(P, 16))
    P_pad = _round_up(P, TP)
    G = P_pad // TP
    if P_pad != P:
        x2 = jnp.pad(x2, ((0, P_pad - P), (0, 0)))

    vmem_limit = _vmem_limit_bytes()
    cparams_1d = pltpu.CompilerParams(dimension_semantics=("parallel",),
                                      vmem_limit_bytes=vmem_limit)

    # conv1 weight as (Cin, Cm); conv2 causal taps as ((K//2+1)*K, Cm, Cout).
    # Both kept in bf16 as MXU operands (accumulation stays f32).
    w1 = jnp.transpose(w1_oihw[:, :, 0, 0], (1, 0)).astype(jnp.bfloat16)
    w2r = jnp.transpose(w2_oihw[:, :, :pad + 1, :], (2, 3, 1, 0)) \
             .reshape((pad + 1) * K, Cm, Cout).astype(jnp.bfloat16)

    # ---- pass 1: BN1 batch statistics (per-tile partials, reduced below) ----
    part1 = pl.pallas_call(
        _bn_stats_kernel,
        out_shape=jax.ShapeDtypeStruct((G, 2, Cin), jnp.float32),
        grid=(G,),
        in_specs=[pl.BlockSpec((TP, Cin), lambda i: (i, 0))],
        out_specs=pl.BlockSpec((1, 2, Cin), lambda i: (i, 0, 0)),
        compiler_params=cparams_1d,
    )(x2)
    s1 = jnp.sum(part1, axis=0)                       # (2, Cin)
    mean1 = s1[0] / P
    # NOTE: one-pass E[x^2]-E[x]^2 in f32 (training-mode biased variance); fine
    # for roughly zero-mean activations.
    var1 = s1[1] / P - mean1 * mean1
    scale1 = g1.astype(jnp.float32) * jax.lax.rsqrt(var1 + eps)
    shift1 = b1.astype(jnp.float32) - mean1 * scale1

    # ---- pass 2: BN1+ReLU+1x1 conv (bf16 y output), fused BN2 partial stats ----
    kern2 = functools.partial(_bn_relu_conv1_kernel, n_rows=P, masked=(P_pad != P))
    y2, part2 = pl.pallas_call(
        kern2,
        out_shape=(jax.ShapeDtypeStruct((P_pad, Cm), jnp.bfloat16),
                   jax.ShapeDtypeStruct((G, 2, Cm), jnp.float32)),
        grid=(G,),
        in_specs=[pl.BlockSpec((TP, Cin), lambda i: (i, 0)),
                  pl.BlockSpec((1, Cin), lambda i: (0, 0)),
                  pl.BlockSpec((1, Cin), lambda i: (0, 0)),
                  pl.BlockSpec((Cin, Cm), lambda i: (0, 0))],
        out_specs=(pl.BlockSpec((TP, Cm), lambda i: (i, 0)),
                   pl.BlockSpec((1, 2, Cm), lambda i: (i, 0, 0))),
        compiler_params=cparams_1d,
    )(x2, scale1.reshape(1, Cin), shift1.reshape(1, Cin), w1)
    s2 = jnp.sum(part2, axis=0)
    mean2 = s2[0] / P
    var2 = s2[1] / P - mean2 * mean2
    scale2 = g2.astype(jnp.float32) * jax.lax.rsqrt(var2 + eps)
    shift2 = b2.astype(jnp.float32) - mean2 * scale2

    # ---- pass 3: BN2+ReLU + causal KxK MaskedConv2d over (batch, H-strip) ----
    TH = _pick_h_tile(H, W, pad, int(strip_target_rows))
    n_strips = H // TH
    y4 = y2[:P].reshape(N, H, W, Cm)          # bf16: read back at half the traffic
    nf = pl.pallas_call(
        _bn_relu_maskedconv2_kernel,
        out_shape=jax.ShapeDtypeStruct((N, n_strips, Cout, TH * W), jnp.float32),
        grid=(N, n_strips),
        in_specs=[pl.BlockSpec((1, TH, W, Cm), lambda n, h: (n, h, 0, 0)),
                  pl.BlockSpec((1, Cm), lambda n, h: (0, 0)),
                  pl.BlockSpec((1, Cm), lambda n, h: (0, 0)),
                  pl.BlockSpec(((pad + 1) * K, Cm, Cout), lambda n, h: (0, 0, 0))],
        out_specs=pl.BlockSpec((1, 1, Cout, TH * W), lambda n, h: (n, h, 0, 0)),
        scratch_shapes=[pltpu.VMEM((TH + pad, W + 2 * pad, Cm), jnp.bfloat16),
                        pltpu.VMEM((pad, W, Cm), jnp.bfloat16)],
        compiler_params=pltpu.CompilerParams(
            dimension_semantics=("parallel", "arbitrary"),
            vmem_limit_bytes=vmem_limit),
    )(y4, scale2.reshape(1, Cm), shift2.reshape(1, Cm), w2r)

    # Lane-dense kernel output (N, n_strips, Cout, TH*W) -> NCHW new_features;
    # the residual concat stays in the wrapper (the kernel never re-writes x).
    new_feat = jnp.transpose(nf.reshape(N, n_strips, Cout, TH, W),
                             (0, 2, 1, 3, 4)).reshape(N, Cout, H, W)
    return jnp.concatenate([x_nchw, new_feat], axis=1)


# ---------------------------------------------------------------------------
# Pure-JAX NCHW reference mirroring the PyTorch ops.
# ---------------------------------------------------------------------------
def _reference_forward(x, w1, w2, g1, b1, g2, b2, eps=1e-5):
    def bn_relu(t, g, b):
        m = jnp.mean(t, axis=(0, 2, 3), keepdims=True)
        v = jnp.mean((t - m) ** 2, axis=(0, 2, 3), keepdims=True)
        t = (t - m) * jax.lax.rsqrt(v + eps) * g.reshape(1, -1, 1, 1) \
            + b.reshape(1, -1, 1, 1)
        return jnp.maximum(t, 0.0)

    dn = ('NCHW', 'OIHW', 'NCHW')
    h = bn_relu(x, g1, b1)
    h = jax.lax.conv_general_dilated(h, w1, (1, 1), 'VALID', dimension_numbers=dn)
    h = bn_relu(h, g2, b2)
    K = w2.shape[2]
    p = K // 2
    h = jax.lax.conv_general_dilated(h, w2, (1, 1), [(p, p), (p, p)],
                                     dimension_numbers=dn)
    return jnp.concatenate([x, h], axis=1)


if __name__ == "__main__":
    # Module hyper-parameters (small, consistent with the torch module defaults).
    num_input_features, growth_rate, bn_size, kernel_size, drop_rate = 8, 8, 4, 3, 0
    Cin = num_input_features
    Cm = bn_size * growth_rate          # 32
    Cout = growth_rate                  # 8
    K = kernel_size
    N, H, W = 2, 16, 16

    key = jax.random.PRNGKey(0)
    kx, k1, k2 = jax.random.split(key, 3)
    x = jax.random.normal(kx, (N, Cin, H, W), jnp.float32)

    # Deterministic weight init exactly as in the module's __init__ (bias=False).
    std1 = math.sqrt(2.0 / num_input_features)
    std2 = math.sqrt(2.0 * (1 - drop_rate) /
                     (bn_size * growth_rate * kernel_size * (kernel_size - 1) // 2))
    w1 = std1 * jax.random.normal(k1, (Cm, Cin, 1, 1), jnp.float32)   # conv1 (OIHW)
    w2 = std2 * jax.random.normal(k2, (Cout, Cm, K, K), jnp.float32)  # conv2 (OIHW)
    # MaskedConv2d zeroes the kernel rows that would look at future target rows.
    w2 = w2.at[:, :, K // 2 + 1:, :].set(0.0)

    # BatchNorm2d default affine params (weight=1, bias=0).
    g1, b1 = jnp.ones((Cin,), jnp.float32), jnp.zeros((Cin,), jnp.float32)
    g2, b2 = jnp.ones((Cm,), jnp.float32), jnp.zeros((Cm,), jnp.float32)

    ref = _reference_forward(x, w1, w2, g1, b1, g2, b2)

    # Default tiling (single H strip at this small size).
    fwd = jax.jit(dense_layer_mask_forward)
    out = jax.block_until_ready(fwd(x, w1, w2, g1, b1, g2, b2))
    assert out.shape == (N, Cin + Cout, H, W), out.shape
    err = float(jnp.max(jnp.abs(out - ref)))
    # bf16 MXU operands + bf16 y intermediate (f32 accumulation/stats) -> ~1e-2-scale
    # absolute error on new_features.
    assert jnp.allclose(out, ref, rtol=2e-2, atol=6e-2), err

    # Small strips + non-dividing row tiles: exercises the multi-strip halo carry
    # and the padded/masked row-tile path on the same shapes.
    fwd_small = jax.jit(functools.partial(dense_layer_mask_forward,
                                          row_tile=192, strip_target_rows=128))
    out2 = jax.block_until_ready(fwd_small(x, w1, w2, g1, b1, g2, b2))
    err2 = float(jnp.max(jnp.abs(out2 - ref)))
    assert jnp.allclose(out2, ref, rtol=2e-2, atol=6e-2), err2

    print("KERNEL_OK")
</pallas_src>

<mosaic_0001>
module attributes {stable_mosaic.version = 11 : i64} {
  func.func @_bn_stats_kernel(%arg0: i32, %arg1: memref<512x8xf32, #tpu.memory_space<vmem>>, %arg2: memref<1x2x8xf32, #tpu.memory_space<vmem>>) attributes {dimension_semantics = [#tpu.dimension_semantics<parallel>], iteration_bounds = array<i64: 1>, scalar_prefetch = 0 : i64, scratch_operands = 0 : i64, tpu.core_type = #tpu.core_type<tc>, window_params = [{transform_indices = @transform_0, window_bounds = array<i64: 512, 8>}, {transform_indices = @transform_1, window_bounds = array<i64: 1, 2, 8>}]} {
    %c0 = arith.constant 0 : index
    %c0_0 = arith.constant 0 : index
    %0 = vector.load %arg1[%c0, %c0_0] : memref<512x8xf32, #tpu.memory_space<vmem>>, vector<512x8xf32>
    %cst = arith.constant dense<0.000000e+00> : vector<8xf32>
    %1 = vector.multi_reduction <add>, %0, %cst [0] : vector<512x8xf32> to vector<8xf32>
    %2 = vector.shape_cast %1 : vector<8xf32> to vector<1x8xf32>
    %3 = vector.shape_cast %2 : vector<1x8xf32> to vector<1x1x8xf32>
    %c0_1 = arith.constant 0 : index
    %c0_2 = arith.constant 0 : index
    %c0_3 = arith.constant 0 : index
    %4 = vector.load %arg2[%c0_1, %c0_2, %c0_3] : memref<1x2x8xf32, #tpu.memory_space<vmem>>, vector<1x1x8xf32>
    tpu.vector_store %arg2[%c0_1, %c0_2, %c0_3], %3 {strides = array<i32>} : memref<1x2x8xf32, #tpu.memory_space<vmem>>, vector<1x1x8xf32>,
    %5 = arith.mulf %0, %0 : vector<512x8xf32>
    %cst_4 = arith.constant dense<0.000000e+00> : vector<8xf32>
    %6 = vector.multi_reduction <add>, %5, %cst_4 [0] : vector<512x8xf32> to vector<8xf32>
    %7 = vector.shape_cast %6 : vector<8xf32> to vector<1x8xf32>
    %8 = vector.shape_cast %7 : vector<1x8xf32> to vector<1x1x8xf32>
    %c0_5 = arith.constant 0 : index
    %c1 = arith.constant 1 : index
    %c0_6 = arith.constant 0 : index
    %9 = vector.load %arg2[%c0_5, %c1, %c0_6] : memref<1x2x8xf32, #tpu.memory_space<vmem>>, vector<1x1x8xf32>
    tpu.vector_store %arg2[%c0_5, %c1, %c0_6], %8 {strides = array<i32>} : memref<1x2x8xf32, #tpu.memory_space<vmem>>, vector<1x1x8xf32>,
    return
  }
  func.func @transform_0(%arg0: i32) -> (i32, i32) {
    %c0_i32 = arith.constant 0 : i32
    %c0_i32_0 = arith.constant 0 : i32
    return %arg0, %c0_i32 : i32, i32
  }
  func.func @transform_1(%arg0: i32) -> (i32, i32, i32) {
    %c0_i32 = arith.constant 0 : i32
    %c0_i32_0 = arith.constant 0 : i32
    %c0_i32_1 = arith.constant 0 : i32
    return %arg0, %c0_i32, %c0_i32_0 : i32, i32, i32
  }
}

module attributes {stable_mosaic.version = 11 : i64} {
  func.func @_bn_relu_conv1_kernel(%arg0: i32, %arg1: memref<512x8xf32, #tpu.memory_space<vmem>>, %arg2: memref<1x8xf32, #tpu.memory_space<vmem>>, %arg3: memref<1x8xf32, #tpu.memory_space<vmem>>, %arg4: memref<8x32xbf16, #tpu.memory_space<vmem>>, %arg5: memref<512x32xbf16, #tpu.memory_space<vmem>>, %arg6: memref<1x2x32xf32, #tpu.memory_space<vmem>>) attributes {dimension_semantics = [#tpu.dimension_semantics<parallel>], iteration_bounds = array<i64: 1>, scalar_prefetch = 0 : i64, scratch_operands = 0 : i64, tpu.core_type = #tpu.core_type<tc>, window_params = [{transform_indices = @transform_0, window_bounds = array<i64: 512, 8>}, {pipeline_mode = #tpu.pipeline_mode<synchronous>, transform_indices = @transform_1, window_bounds = array<i64: 1, 8>}, {pipeline_mode = #tpu.pipeline_mode<synchronous>, transform_indices = @transform_2, window_bounds = array<i64: 1, 8>}, {pipeline_mode = #tpu.pipeline_mode<synchronous>, transform_indices = @transform_3, window_bounds = array<i64: 8, 32>}, {transform_indices = @transform_4, window_bounds = array<i64: 512, 32>}, {transform_indices = @transform_5, window_bounds = array<i64: 1, 2, 32>}]} {
    %c0 = arith.constant 0 : index
    %c0_0 = arith.constant 0 : index
    %0 = vector.load %arg1[%c0, %c0_0] : memref<512x8xf32, #tpu.memory_space<vmem>>, vector<512x8xf32>
    %c0_1 = arith.constant 0 : index
    %c0_2 = arith.constant 0 : index
    %1 = vector.load %arg2[%c0_1, %c0_2] : memref<1x8xf32, #tpu.memory_space<vmem>>, vector<1x8xf32>
    %2 = vector.broadcast %1 : vector<1x8xf32> to vector<512x8xf32>
    %3 = arith.mulf %0, %2 : vector<512x8xf32>
    %c0_3 = arith.constant 0 : index
    %c0_4 = arith.constant 0 : index
    %4 = vector.load %arg3[%c0_3, %c0_4] : memref<1x8xf32, #tpu.memory_space<vmem>>, vector<1x8xf32>
    %5 = vector.broadcast %4 : vector<1x8xf32> to vector<512x8xf32>
    %6 = arith.addf %3, %5 : vector<512x8xf32>
    %cst = arith.constant 0.000000e+00 : f32
    %7 = vector.broadcast %cst : f32 to vector<512x8xf32>
    %8 = arith.maximumf %6, %7 : vector<512x8xf32>
    %9 = arith.truncf %8 : vector<512x8xf32> to vector<512x8xbf16>
    %c0_5 = arith.constant 0 : index
    %c0_6 = arith.constant 0 : index
    %10 = vector.load %arg4[%c0_5, %c0_6] : memref<8x32xbf16, #tpu.memory_space<vmem>>, vector<8x32xbf16>
    %cst_7 = arith.constant dense<0.000000e+00> : vector<512x32xf32>
    %11 = tpu.matmul %9, %10, %cst_7 {dimension_numbers = #tpu.dot_dimension_numbers<[1], [0], [0], [1], [0, 0, 1, 1], [], []>} : vector<512x8xbf16>, vector<8x32xbf16>, vector<512x32xf32> -> vector<512x32xf32>
    %12 = arith.truncf %11 : vector<512x32xf32> to vector<512x32xbf16>
    %c0_8 = arith.constant 0 : index
    %c0_9 = arith.constant 0 : index
    %13 = vector.load %arg5[%c0_8, %c0_9] : memref<512x32xbf16, #tpu.memory_space<vmem>>, vector<512x32xbf16>
    tpu.vector_store %arg5[%c0_8, %c0_9], %12 {strides = array<i32>} : memref<512x32xbf16, #tpu.memory_space<vmem>>, vector<512x32xbf16>,
    %cst_10 = arith.constant dense<0.000000e+00> : vector<32xf32>
    %14 = vector.multi_reduction <add>, %11, %cst_10 [0] : vector<512x32xf32> to vector<32xf32>
    %15 = vector.shape_cast %14 : vector<32xf32> to vector<1x32xf32>
    %16 = vector.shape_cast %15 : vector<1x32xf32> to vector<1x1x32xf32>
    %c0_11 = arith.constant 0 : index
    %c0_12 = arith.constant 0 : index
    %c0_13 = arith.constant 0 : index
    %17 = vector.load %arg6[%c0_11, %c0_12, %c0_13] : memref<1x2x32xf32, #tpu.memory_space<vmem>>, vector<1x1x32xf32>
    tpu.vector_store %arg6[%c0_11, %c0_12, %c0_13], %16 {strides = array<i32>} : memref<1x2x32xf32, #tpu.memory_space<vmem>>, vector<1x1x32xf32>,
    %18 = arith.mulf %11, %11 : vector<512x32xf32>
    %cst_14 = arith.constant dense<0.000000e+00> : vector<32xf32>
    %19 = vector.multi_reduction <add>, %18, %cst_14 [0] : vector<512x32xf32> to vector<32xf32>
    %20 = vector.shape_cast %19 : vector<32xf32> to vector<1x32xf32>
    %21 = vector.shape_cast %20 : vector<1x32xf32> to vector<1x1x32xf32>
    %c0_15 = arith.constant 0 : index
    %c1 = arith.constant 1 : index
    %c0_16 = arith.constant 0 : index
    %22 = vector.load %arg6[%c0_15, %c1, %c0_16] : memref<1x2x32xf32, #tpu.memory_space<vmem>>, vector<1x1x32xf32>
    tpu.vector_store %arg6[%c0_15, %c1, %c0_16], %21 {strides = array<i32>} : memref<1x2x32xf32, #tpu.memory_space<vmem>>, vector<1x1x32xf32>,
    return
  }
  func.func @transform_0(%arg0: i32) -> (i32, i32) {
    %c0_i32 = arith.constant 0 : i32
    %c0_i32_0 = arith.constant 0 : i32
    return %arg0, %c0_i32 : i32, i32
  }
  func.func @transform_1(%arg0: i32) -> (i32, i32) {
    %c0_i32 = arith.constant 0 : i32
    %c0_i32_0 = arith.constant 0 : i32
    %c0_i32_1 = arith.constant 0 : i32
    return %c0_i32, %c0_i32_0 : i32, i32
  }
  func.func @transform_2(%arg0: i32) -> (i32, i32) {
    %c0_i32 = arith.constant 0 : i32
    %c0_i32_0 = arith.constant 0 : i32
    %c0_i32_1 = arith.constant 0 : i32
    return %c0_i32, %c0_i32_0 : i32, i32
  }
  func.func @transform_3(%arg0: i32) -> (i32, i32) {
    %c0_i32 = arith.constant 0 : i32
    %c0_i32_0 = arith.constant 0 : i32
    %c0_i32_1 = arith.constant 0 : i32
    return %c0_i32, %c0_i32_0 : i32, i32
  }
  func.func @transform_4(%arg0: i32) -> (i32, i32) {
    %c0_i32 = arith.constant 0 : i32
    %c0_i32_0 = arith.constant 0 : i32
    return %arg0, %c0_i32 : i32, i32
  }
  func.func @transform_5(%arg0: i32) -> (i32, i32, i32) {
    %c0_i32 = arith.constant 0 : i32
    %c0_i32_0 = arith.constant 0 : i32
    %c0_i32_1 = arith.constant 0 : i32
    return %arg0, %c0_i32, %c0_i32_0 : i32, i32, i32
  }
}

module attributes {stable_mosaic.version = 11 : i64} {
  func.func @_bn_relu_maskedconv2_kernel(%arg0: i32, %arg1: i32, %arg2: memref<1x16x16x32xbf16, #tpu.memory_space<vmem>>, %arg3: memref<1x32xf32, #tpu.memory_space<vmem>>, %arg4: memref<1x32xf32, #tpu.memory_space<vmem>>, %arg5: memref<6x32x8xbf16, #tpu.memory_space<vmem>>, %arg6: memref<1x1x8x256xf32, #tpu.memory_space<vmem>>, %arg7: memref<17x18x32xbf16, #tpu.memory_space<vmem>>, %arg8: memref<1x16x32xbf16, #tpu.memory_space<vmem>>) attributes {dimension_semantics = [#tpu.dimension_semantics<parallel>, #tpu.dimension_semantics<arbitrary>], iteration_bounds = array<i64: 2, 1>, scalar_prefetch = 0 : i64, scratch_operands = 2 : i64, tpu.core_type = #tpu.core_type<tc>, window_params = [{transform_indices = @transform_0, window_bounds = array<i64: 1, 16, 16, 32>}, {pipeline_mode = #tpu.pipeline_mode<synchronous>, transform_indices = @transform_1, window_bounds = array<i64: 1, 32>}, {pipeline_mode = #tpu.pipeline_mode<synchronous>, transform_indices = @transform_2, window_bounds = array<i64: 1, 32>}, {pipeline_mode = #tpu.pipeline_mode<synchronous>, transform_indices = @transform_3, window_bounds = array<i64: 6, 32, 8>}, {transform_indices = @transform_4, window_bounds = array<i64: 1, 1, 8, 256>}]} {
    %c0 = arith.constant 0 : index
    %c0_0 = arith.constant 0 : index
    %c0_1 = arith.constant 0 : index
    %c0_2 = arith.constant 0 : index
    %0 = vector.load %arg2[%c0, %c0_0, %c0_1, %c0_2] : memref<1x16x16x32xbf16, #tpu.memory_space<vmem>>, vector<1x16x16x32xbf16>
    %1 = vector.shape_cast %0 : vector<1x16x16x32xbf16> to vector<16x16x32xbf16>
    %2 = arith.extf %1 : vector<16x16x32xbf16> to vector<16x16x32xf32>
    %c0_3 = arith.constant 0 : index
    %c0_4 = arith.constant 0 : index
    %3 = vector.load %arg3[%c0_3, %c0_4] : memref<1x32xf32, #tpu.memory_space<vmem>>, vector<1x32xf32>
    %4 = vector.shape_cast %3 : vector<1x32xf32> to vector<1x1x32xf32>
    %5 = vector.broadcast %4 : vector<1x1x32xf32> to vector<16x16x32xf32>
    %6 = arith.mulf %2, %5 : vector<16x16x32xf32>
    %c0_5 = arith.constant 0 : index
    %c0_6 = arith.constant 0 : index
    %7 = vector.load %arg4[%c0_5, %c0_6] : memref<1x32xf32, #tpu.memory_space<vmem>>, vector<1x32xf32>
    %8 = vector.shape_cast %7 : vector<1x32xf32> to vector<1x1x32xf32>
    %9 = vector.broadcast %8 : vector<1x1x32xf32> to vector<16x16x32xf32>
    %10 = arith.addf %6, %9 : vector<16x16x32xf32>
    %cst = arith.constant 0.000000e+00 : f32
    %11 = vector.broadcast %cst : f32 to vector<16x16x32xf32>
    %12 = arith.maximumf %10, %11 : vector<16x16x32xf32>
    %13 = arith.truncf %12 : vector<16x16x32xf32> to vector<16x16x32xbf16>
    %c0_i32 = arith.constant 0 : i32
    %14 = arith.cmpi eq, %arg1, %c0_i32 : i32
    %15 = arith.extui %14 : i1 to i32
    %c0_i32_7 = arith.constant 0 : i32
    %16 = arith.cmpi ne, %15, %c0_i32_7 : i32
    scf.if %16 {
      %cst_69 = arith.constant 0.000000e+00 : bf16
      %66 = vector.broadcast %cst_69 : bf16 to vector<1x16x32xbf16>
      %c0_70 = arith.constant 0 : index
      %c0_71 = arith.constant 0 : index
      %c0_72 = arith.constant 0 : index
      %67 = vector.load %arg8[%c0_70, %c0_71, %c0_72] : memref<1x16x32xbf16, #tpu.memory_space<vmem>>, vector<1x16x32xbf16>
      tpu.vector_store %arg8[%c0_70, %c0_71, %c0_72], %66 {strides = array<i32>} : memref<1x16x32xbf16, #tpu.memory_space<vmem>>, vector<1x16x32xbf16>,
    } else {
    }
    %cst_8 = arith.constant 0.000000e+00 : bf16
    %17 = vector.broadcast %cst_8 : bf16 to vector<17x1x32xbf16>
    %c0_9 = arith.constant 0 : index
    %c0_10 = arith.constant 0 : index
    %c0_11 = arith.constant 0 : index
    %18 = vector.load %arg7[%c0_9, %c0_10, %c0_11] : memref<17x18x32xbf16, #tpu.memory_space<vmem>>, vector<17x1x32xbf16>
    tpu.vector_store %arg7[%c0_9, %c0_10, %c0_11], %17 {strides = array<i32>} : memref<17x18x32xbf16, #tpu.memory_space<vmem>>, vector<17x1x32xbf16>,
    %cst_12 = arith.constant 0.000000e+00 : bf16
    %19 = vector.broadcast %cst_12 : bf16 to vector<17x1x32xbf16>
    %c0_13 = arith.constant 0 : index
    %c17 = arith.constant 17 : index
    %c0_14 = arith.constant 0 : index
    %20 = vector.load %arg7[%c0_13, %c17, %c0_14] : memref<17x18x32xbf16, #tpu.memory_space<vmem>>, vector<17x1x32xbf16>
    tpu.vector_store %arg7[%c0_13, %c17, %c0_14], %19 {strides = array<i32>} : memref<17x18x32xbf16, #tpu.memory_space<vmem>>, vector<17x1x32xbf16>,
    %c0_15 = arith.constant 0 : index
    %c0_16 = arith.constant 0 : index
    %c0_17 = arith.constant 0 : index
    %21 = vector.load %arg8[%c0_15, %c0_16, %c0_17] : memref<1x16x32xbf16, #tpu.memory_space<vmem>>, vector<1x16x32xbf16>
    %c0_18 = arith.constant 0 : index
    %c1 = arith.constant 1 : index
    %c0_19 = arith.constant 0 : index
    %22 = vector.load %arg7[%c0_18, %c1, %c0_19] : memref<17x18x32xbf16, #tpu.memory_space<vmem>>, vector<1x16x32xbf16>
    tpu.vector_store %arg7[%c0_18, %c1, %c0_19], %21 {strides = array<i32>} : memref<17x18x32xbf16, #tpu.memory_space<vmem>>, vector<1x16x32xbf16>,
    %c1_20 = arith.constant 1 : index
    %c1_21 = arith.constant 1 : index
    %c0_22 = arith.constant 0 : index
    %23 = vector.load %arg7[%c1_20, %c1_21, %c0_22] : memref<17x18x32xbf16, #tpu.memory_space<vmem>>, vector<16x16x32xbf16>
    tpu.vector_store %arg7[%c1_20, %c1_21, %c0_22], %13 {strides = array<i32>} : memref<17x18x32xbf16, #tpu.memory_space<vmem>>, vector<16x16x32xbf16>,
    %24 = vector.extract_strided_slice %13 {offsets = [15, 0, 0], sizes = [1, 16, 32], strides = [1, 1, 1]} : vector<16x16x32xbf16> to vector<1x16x32xbf16>
    %c0_23 = arith.constant 0 : index
    %c0_24 = arith.constant 0 : index
    %c0_25 = arith.constant 0 : index
    %25 = vector.load %arg8[%c0_23, %c0_24, %c0_25] : memref<1x16x32xbf16, #tpu.memory_space<vmem>>, vector<1x16x32xbf16>
    tpu.vector_store %arg8[%c0_23, %c0_24, %c0_25], %24 {strides = array<i32>} : memref<1x16x32xbf16, #tpu.memory_space<vmem>>, vector<1x16x32xbf16>,
    %cst_26 = arith.constant 0.000000e+00 : f32
    %26 = vector.broadcast %cst_26 : f32 to vector<256x8xf32>
    %c0_27 = arith.constant 0 : index
    %c0_28 = arith.constant 0 : index
    %c0_29 = arith.constant 0 : index
    %27 = vector.load %arg7[%c0_27, %c0_28, %c0_29] : memref<17x18x32xbf16, #tpu.memory_space<vmem>>, vector<16x16x32xbf16>
    %28 = vector.shape_cast %27 : vector<16x16x32xbf16> to vector<256x32xbf16>
    %c0_30 = arith.constant 0 : index
    %c0_31 = arith.constant 0 : index
    %c0_32 = arith.constant 0 : index
    %29 = vector.load %arg5[%c0_30, %c0_31, %c0_32] : memref<6x32x8xbf16, #tpu.memory_space<vmem>>, vector<1x32x8xbf16>
    %30 = vector.shape_cast %29 : vector<1x32x8xbf16> to vector<32x8xbf16>
    %cst_33 = arith.constant dense<0.000000e+00> : vector<256x8xf32>
    %31 = tpu.matmul %28, %30, %cst_33 {dimension_numbers = #tpu.dot_dimension_numbers<[1], [0], [0], [1], [0, 0, 1, 1], [], []>} : vector<256x32xbf16>, vector<32x8xbf16>, vector<256x8xf32> -> vector<256x8xf32>
    %32 = arith.addf %26, %31 : vector<256x8xf32>
    %c0_34 = arith.constant 0 : index
    %c1_35 = arith.constant 1 : index
    %c0_36 = arith.constant 0 : index
    %33 = vector.load %arg7[%c0_34, %c1_35, %c0_36] : memref<17x18x32xbf16, #tpu.memory_space<vmem>>, vector<16x16x32xbf16>
    %34 = vector.shape_cast %33 : vector<16x16x32xbf16> to vector<256x32xbf16>
    %c1_37 = arith.constant 1 : index
    %c0_38 = arith.constant 0 : index
    %c0_39 = arith.constant 0 : index
    %35 = vector.load %arg5[%c1_37, %c0_38, %c0_39] : memref<6x32x8xbf16, #tpu.memory_space<vmem>>, vector<1x32x8xbf16>
    %36 = vector.shape_cast %35 : vector<1x32x8xbf16> to vector<32x8xbf16>
    %cst_40 = arith.constant dense<0.000000e+00> : vector<256x8xf32>
    %37 = tpu.matmul %34, %36, %cst_40 {dimension_numbers = #tpu.dot_dimension_numbers<[1], [0], [0], [1], [0, 0, 1, 1], [], []>} : vector<256x32xbf16>, vector<32x8xbf16>, vector<256x8xf32> -> vector<256x8xf32>
    %38 = arith.addf %32, %37 : vector<256x8xf32>
    %c0_41 = arith.constant 0 : index
    %c2 = arith.constant 2 : index
    %c0_42 = arith.constant 0 : index
    %39 = vector.load %arg7[%c0_41, %c2, %c0_42] : memref<17x18x32xbf16, #tpu.memory_space<vmem>>, vector<16x16x32xbf16>
    %40 = vector.shape_cast %39 : vector<16x16x32xbf16> to vector<256x32xbf16>
    %c2_43 = arith.constant 2 : index
    %c0_44 = arith.constant 0 : index
    %c0_45 = arith.constant 0 : index
    %41 = vector.load %arg5[%c2_43, %c0_44, %c0_45] : memref<6x32x8xbf16, #tpu.memory_space<vmem>>, vector<1x32x8xbf16>
    %42 = vector.shape_cast %41 : vector<1x32x8xbf16> to vector<32x8xbf16>
    %cst_46 = arith.constant dense<0.000000e+00> : vector<256x8xf32>
    %43 = tpu.matmul %40, %42, %cst_46 {dimension_numbers = #tpu.dot_dimension_numbers<[1], [0], [0], [1], [0, 0, 1, 1], [], []>} : vector<256x32xbf16>, vector<32x8xbf16>, vector<256x8xf32> -> vector<256x8xf32>
    %44 = arith.addf %38, %43 : vector<256x8xf32>
    %c1_47 = arith.constant 1 : index
    %c0_48 = arith.constant 0 : index
    %c0_49 = arith.constant 0 : index
    %45 = vector.load %arg7[%c1_47, %c0_48, %c0_49] : memref<17x18x32xbf16, #tpu.memory_space<vmem>>, vector<16x16x32xbf16>
    %46 = vector.shape_cast %45 : vector<16x16x32xbf16> to vector<256x32xbf16>
    %c3 = arith.constant 3 : index
    %c0_50 = arith.constant 0 : index
    %c0_51 = arith.constant 0 : index
    %47 = vector.load %arg5[%c3, %c0_50, %c0_51] : memref<6x32x8xbf16, #tpu.memory_space<vmem>>, vector<1x32x8xbf16>
    %48 = vector.shape_cast %47 : vector<1x32x8xbf16> to vector<32x8xbf16>
    %cst_52 = arith.constant dense<0.000000e+00> : vector<256x8xf32>
    %49 = tpu.matmul %46, %48, %cst_52 {dimension_numbers = #tpu.dot_dimension_numbers<[1], [0], [0], [1], [0, 0, 1, 1], [], []>} : vector<256x32xbf16>, vector<32x8xbf16>, vector<256x8xf32> -> vector<256x8xf32>
    %50 = arith.addf %44, %49 : vector<256x8xf32>
    %c1_53 = arith.constant 1 : index
    %c1_54 = arith.constant 1 : index
    %c0_55 = arith.constant 0 : index
    %51 = vector.load %arg7[%c1_53, %c1_54, %c0_55] : memref<17x18x32xbf16, #tpu.memory_space<vmem>>, vector<16x16x32xbf16>
    %52 = vector.shape_cast %51 : vector<16x16x32xbf16> to vector<256x32xbf16>
    %c4 = arith.constant 4 : index
    %c0_56 = arith.constant 0 : index
    %c0_57 = arith.constant 0 : index
    %53 = vector.load %arg5[%c4, %c0_56, %c0_57] : memref<6x32x8xbf16, #tpu.memory_space<vmem>>, vector<1x32x8xbf16>
    %54 = vector.shape_cast %53 : vector<1x32x8xbf16> to vector<32x8xbf16>
    %cst_58 = arith.constant dense<0.000000e+00> : vector<256x8xf32>
    %55 = tpu.matmul %52, %54, %cst_58 {dimension_numbers = #tpu.dot_dimension_numbers<[1], [0], [0], [1], [0, 0, 1, 1], [], []>} : vector<256x32xbf16>, vector<32x8xbf16>, vector<256x8xf32> -> vector<256x8xf32>
    %56 = arith.addf %50, %55 : vector<256x8xf32>
    %c1_59 = arith.constant 1 : index
    %c2_60 = arith.constant 2 : index
    %c0_61 = arith.constant 0 : index
    %57 = vector.load %arg7[%c1_59, %c2_60, %c0_61] : memref<17x18x32xbf16, #tpu.memory_space<vmem>>, vector<16x16x32xbf16>
    %58 = vector.shape_cast %57 : vector<16x16x32xbf16> to vector<256x32xbf16>
    %c5 = arith.constant 5 : index
    %c0_62 = arith.constant 0 : index
    %c0_63 = arith.constant 0 : index
    %59 = vector.load %arg5[%c5, %c0_62, %c0_63] : memref<6x32x8xbf16, #tpu.memory_space<vmem>>, vector<1x32x8xbf16>
    %60 = vector.shape_cast %59 : vector<1x32x8xbf16> to vector<32x8xbf16>
    %cst_64 = arith.constant dense<0.000000e+00> : vector<256x8xf32>
    %61 = tpu.matmul %58, %60, %cst_64 {dimension_numbers = #tpu.dot_dimension_numbers<[1], [0], [0], [1], [0, 0, 1, 1], [], []>} : vector<256x32xbf16>, vector<32x8xbf16>, vector<256x8xf32> -> vector<256x8xf32>
    %62 = arith.addf %56, %61 : vector<256x8xf32>
    %63 = tpu.transpose %62, [1, 0] : vector<256x8xf32> -> vector<8x256xf32>
    %64 = vector.shape_cast %63 : vector<8x256xf32> to vector<1x1x8x256xf32>
    %c0_65 = arith.constant 0 : index
    %c0_66 = arith.constant 0 : index
    %c0_67 = arith.constant 0 : index
    %c0_68 = arith.constant 0 : index
    %65 = vector.load %arg6[%c0_65, %c0_66, %c0_67, %c0_68] : memref<1x1x8x256xf32, #tpu.memory_space<vmem>>, vector<1x1x8x256xf32>
    tpu.vector_store %arg6[%c0_65, %c0_66, %c0_67, %c0_68], %64 {strides = array<i32>} : memref<1x1x8x256xf32, #tpu.memory_space<vmem>>, vector<1x1x8x256xf32>,
    return
  }
  func.func @transform_0(%arg0: i32, %arg1: i32) -> (i32, i32, i32, i32) {
    %c0_i32 = arith.constant 0 : i32
    %c0_i32_0 = arith.constant 0 : i32
    %c0_i32_1 = arith.constant 0 : i32
    return %arg0, %arg1, %c0_i32, %c0_i32_0 : i32, i32, i32, i32
  }
  func.func @transform_1(%arg0: i32, %arg1: i32) -> (i32, i32) {
    %c0_i32 = arith.constant 0 : i32
    %c0_i32_0 = arith.constant 0 : i32
    %c0_i32_1 = arith.constant 0 : i32
    return %c0_i32, %c0_i32_0 : i32, i32
  }
  func.func @transform_2(%arg0: i32, %arg1: i32) -> (i32, i32) {
    %c0_i32 = arith.constant 0 : i32
    %c0_i32_0 = arith.constant 0 : i32
    %c0_i32_1 = arith.constant 0 : i32
    return %c0_i32, %c0_i32_0 : i32, i32
  }
  func.func @transform_3(%arg0: i32, %arg1: i32) -> (i32, i32, i32) {
    %c0_i32 = arith.constant 0 : i32
    %c0_i32_0 = arith.constant 0 : i32
    %c0_i32_1 = arith.constant 0 : i32
    %c0_i32_2 = arith.constant 0 : i32
    return %c0_i32, %c0_i32_0, %c0_i32_1 : i32, i32, i32
  }
  func.func @transform_4(%arg0: i32, %arg1: i32) -> (i32, i32, i32, i32) {
    %c0_i32 = arith.constant 0 : i32
    %c0_i32_0 = arith.constant 0 : i32
    %c0_i32_1 = arith.constant 0 : i32
    return %arg0, %arg1, %c0_i32, %c0_i32_0 : i32, i32, i32, i32
  }
}

</mosaic_0001>

<llo_original>
// kernel: dense_layer_mask_forward.3
$region0: #{dense_layer_mask_forward.3}
  #allocation0 [shape = 'u32[]', space=smem, size = 0x4, offset = 0x4, fixed_abs, tag = 'smem constant byte address 0x4 - core index']
  #allocation1 [shape = 'u32[144,128]{1,0:T(1,128)}', space=vmem, size = 0x12000, scoped, tag = 'internal scratch']
  %s0 = inlined_call_operand.vmem [shape: f32[512,8], index: 0, kind: input, shape index: {}]
  %s1 = inlined_call_operand.vmem [shape: f32[1,2,8], index: 1, kind: output, shape index: {}]
  %s2 = sld [smem:[#allocation0]]
  $region14: #{dense_layer_mask_forward.3} parent=0
    _
  %s4 = ssub.s32 1, %s2
  %s5 = scalar_select 0, %s4, %s2
  // Predicated region
  $region2: #{dense_layer_mask_forward.3} parent=0 // pred_check
    _
  $region3: #{dense_layer_mask_forward.3} parent=0 // pred_check_branch
    %7 = sbr.rel (0) target = $region5
  $region4: #{dense_layer_mask_forward.3} parent=0 // pred_region
    _
  $region5: #{dense_layer_mask_forward.3} parent=0 // pred_fallthru
    _
  %v8 = vld [vmem:[%s0] sm:$0xff]
  %v9 = vld [vmem:[%s0 + $0x8] sm:$0xff]
  %v10 = vld [vmem:[%s0 + $0x10] sm:$0xff]
  %v11 = vld [vmem:[%s0 + $0x18] sm:$0xff]
  %v12 = vld [vmem:[%s0 + $0x20] sm:$0xff]
  %v13 = vld [vmem:[%s0 + $0x28] sm:$0xff]
  %v14 = vld [vmem:[%s0 + $0x30] sm:$0xff]
  %v15 = vld [vmem:[%s0 + $0x38] sm:$0xff]
  %v16 = vld [vmem:[%s0 + $0x40] sm:$0xff]
  %v17 = vld [vmem:[%s0 + $0x48] sm:$0xff]
  %v18 = vld [vmem:[%s0 + $0x50] sm:$0xff]
  %v19 = vld [vmem:[%s0 + $0x58] sm:$0xff]
  %v20 = vld [vmem:[%s0 + $0x60] sm:$0xff]
  %v21 = vld [vmem:[%s0 + $0x68] sm:$0xff]
  %v22 = vld [vmem:[%s0 + $0x70] sm:$0xff]
  %v23 = vld [vmem:[%s0 + $0x78] sm:$0xff]
  %v24 = vld [vmem:[%s0 + $0x80] sm:$0xff]
  %v25 = vld [vmem:[%s0 + $0x88] sm:$0xff]
  %v26 = vld [vmem:[%s0 + $0x90] sm:$0xff]
  %v27 = vld [vmem:[%s0 + $0x98] sm:$0xff]
  %v28 = vld [vmem:[%s0 + $0xa0] sm:$0xff]
  %v29 = vld [vmem:[%s0 + $0xa8] sm:$0xff]
  %v30 = vld [vmem:[%s0 + $0xb0] sm:$0xff]
  %v31 = vld [vmem:[%s0 + $0xb8] sm:$0xff]
  %v32 = vld [vmem:[%s0 + $0xc0] sm:$0xff]
  %v33 = vld [vmem:[%s0 + $0xc8] sm:$0xff]
  %v34 = vld [vmem:[%s0 + $0xd0] sm:$0xff]
  %v35 = vld [vmem:[%s0 + $0xd8] sm:$0xff]
  %v36 = vld [vmem:[%s0 + $0xe0] sm:$0xff]
  %v37 = vld [vmem:[%s0 + $0xe8] sm:$0xff]
  %v38 = vld [vmem:[%s0 + $0xf0] sm:$0xff]
  %v39 = vld [vmem:[%s0 + $0xf8] sm:$0xff]
  %v40 = vld [vmem:[%s0 + $0x100] sm:$0xff]
  %v41 = vld [vmem:[%s0 + $0x108] sm:$0xff]
  %v42 = vld [vmem:[%s0 + $0x110] sm:$0xff]
  %v43 = vld [vmem:[%s0 + $0x118] sm:$0xff]
  %v44 = vld [vmem:[%s0 + $0x120] sm:$0xff]
  %v45 = vld [vmem:[%s0 + $0x128] sm:$0xff]
  %v46 = vld [vmem:[%s0 + $0x130] sm:$0xff]
  %v47 = vld [vmem:[%s0 + $0x138] sm:$0xff]
  %v48 = vld [vmem:[%s0 + $0x140] sm:$0xff]
  %v49 = vld [vmem:[%s0 + $0x148] sm:$0xff]
  %v50 = vld [vmem:[%s0 + $0x150] sm:$0xff]
  %v51 = vld [vmem:[%s0 + $0x158] sm:$0xff]
  %v52 = vld [vmem:[%s0 + $0x160] sm:$0xff]
  %v53 = vld [vmem:[%s0 + $0x168] sm:$0xff]
  %v54 = vld [vmem:[%s0 + $0x170] sm:$0xff]
  %v55 = vld [vmem:[%s0 + $0x178] sm:$0xff]
  %v56 = vld [vmem:[%s0 + $0x180] sm:$0xff]
  %v57 = vld [vmem:[%s0 + $0x188] sm:$0xff]
  %v58 = vld [vmem:[%s0 + $0x190] sm:$0xff]
  %v59 = vld [vmem:[%s0 + $0x198] sm:$0xff]
  %v60 = vld [vmem:[%s0 + $0x1a0] sm:$0xff]
  %v61 = vld [vmem:[%s0 + $0x1a8] sm:$0xff]
  %v62 = vld [vmem:[%s0 + $0x1b0] sm:$0xff]
  %v63 = vld [vmem:[%s0 + $0x1b8] sm:$0xff]
  %v64 = vld [vmem:[%s0 + $0x1c0] sm:$0xff]
  %v65 = vld [vmem:[%s0 + $0x1c8] sm:$0xff]
  %v66 = vld [vmem:[%s0 + $0x1d0] sm:$0xff]
  %v67 = vld [vmem:[%s0 + $0x1d8] sm:$0xff]
  %v68 = vld [vmem:[%s0 + $0x1e0] sm:$0xff]
  %v69 = vld [vmem:[%s0 + $0x1e8] sm:$0xff]
  %v70 = vld [vmem:[%s0 + $0x1f0] sm:$0xff]
  %v71 = vld [vmem:[%s0 + $0x1f8] sm:$0xff]
  %vm72 = vcmask 64512
  %v73 = vsel %vm72, %v8, 0.0
  %v74 = vsel %vm72, %v9, 0.0
  %v75 = vadd.f32 %v73, %v74
  %v76 = vsel %vm72, %v10, 0.0
  %v77 = vadd.f32 %v75, %v76
  %v78 = vsel %vm72, %v11, 0.0
  %v79 = vadd.f32 %v77, %v78
  %v80 = vsel %vm72, %v12, 0.0
  %v81 = vadd.f32 %v79, %v80
  %v82 = vsel %vm72, %v13, 0.0
  %v83 = vadd.f32 %v81, %v82
  %v84 = vsel %vm72, %v14, 0.0
  %v85 = vadd.f32 %v83, %v84
  %v86 = vsel %vm72, %v15, 0.0
  %v87 = vadd.f32 %v85, %v86
  %v88 = vsel %vm72, %v16, 0.0
  %v89 = vadd.f32 %v87, %v88
  %v90 = vsel %vm72, %v17, 0.0
  %v91 = vadd.f32 %v89, %v90
  %v92 = vsel %vm72, %v18, 0.0
  %v93 = vadd.f32 %v91, %v92
  %v94 = vsel %vm72, %v19, 0.0
  %v95 = vadd.f32 %v93, %v94
  %v96 = vsel %vm72, %v20, 0.0
  %v97 = vadd.f32 %v95, %v96
  %v98 = vsel %vm72, %v21, 0.0
  %v99 = vadd.f32 %v97, %v98
  %v100 = vsel %vm72, %v22, 0.0
  %v101 = vadd.f32 %v99, %v100
  %v102 = vsel %vm72, %v23, 0.0
  %v103 = vadd.f32 %v101, %v102
  %v104 = vsel %vm72, %v24, 0.0
  %v105 = vadd.f32 %v103, %v104
  %v106 = vsel %vm72, %v25, 0.0
  %v107 = vadd.f32 %v105, %v106
  %v108 = vsel %vm72, %v26, 0.0
  %v109 = vadd.f32 %v107, %v108
  %v110 = vsel %vm72, %v27, 0.0
  %v111 = vadd.f32 %v109, %v110
  %v112 = vsel %vm72, %v28, 0.0
  %v113 = vadd.f32 %v111, %v112
  %v114 = vsel %vm72, %v29, 0.0
  %v115 = vadd.f32 %v113, %v114
  %v116 = vsel %vm72, %v30, 0.0
  %v117 = vadd.f32 %v115, %v116
  %v118 = vsel %vm72, %v31, 0.0
  %v119 = vadd.f32 %v117, %v118
  %v120 = vsel %vm72, %v32, 0.0
  %v121 = vadd.f32 %v119, %v120
  %v122 = vsel %vm72, %v33, 0.0
  %v123 = vadd.f32 %v121, %v122
  %v124 = vsel %vm72, %v34, 0.0
  %v125 = vadd.f32 %v123, %v124
  %v126 = vsel %vm72, %v35, 0.0
  %v127 = vadd.f32 %v125, %v126
  %v128 = vsel %vm72, %v36, 0.0
  %v129 = vadd.f32 %v127, %v128
  %v130 = vsel %vm72, %v37, 0.0
  %v131 = vadd.f32 %v129, %v130
  %v132 = vsel %vm72, %v38, 0.0
  %v133 = vadd.f32 %v131, %v132
  %v134 = vsel %vm72, %v39, 0.0
  %v135 = vadd.f32 %v133, %v134
  %v136 = vsel %vm72, %v40, 0.0
  %v137 = vadd.f32 %v135, %v136
  %v138 = vsel %vm72, %v41, 0.0
  %v139 = vadd.f32 %v137, %v138
  %v140 = vsel %vm72, %v42, 0.0
  %v141 = vadd.f32 %v139, %v140
  %v142 = vsel %vm72, %v43, 0.0
  %v143 = vadd.f32 %v141, %v142
  %v144 = vsel %vm72, %v44, 0.0
  %v145 = vadd.f32 %v143, %v144
  %v146 = vsel %vm72, %v45, 0.0
  %v147 = vadd.f32 %v145, %v146
  %v148 = vsel %vm72, %v46, 0.0
  %v149 = vadd.f32 %v147, %v148
  %v150 = vsel %vm72, %v47, 0.0
  %v151 = vadd.f32 %v149, %v150
  %v152 = vsel %vm72, %v48, 0.0
  %v153 = vadd.f32 %v151, %v152
  %v154 = vsel %vm72, %v49, 0.0
  %v155 = vadd.f32 %v153, %v154
  %v156 = vsel %vm72, %v50, 0.0
  %v157 = vadd.f32 %v155, %v156
  %v158 = vsel %vm72, %v51, 0.0
  %v159 = vadd.f32 %v157, %v158
  %v160 = vsel %vm72, %v52, 0.0
  %v161 = vadd.f32 %v159, %v160
  %v162 = vsel %vm72, %v53, 0.0
  %v163 = vadd.f32 %v161, %v162
  %v164 = vsel %vm72, %v54, 0.0
  %v165 = vadd.f32 %v163, %v164
  %v166 = vsel %vm72, %v55, 0.0
  %v167 = vadd.f32 %v165, %v166
  %v168 = vsel %vm72, %v56, 0.0
  %v169 = vadd.f32 %v167, %v168
  %v170 = vsel %vm72, %v57, 0.0
  %v171 = vadd.f32 %v169, %v170
  %v172 = vsel %vm72, %v58, 0.0
  %v173 = vadd.f32 %v171, %v172
  %v174 = vsel %vm72, %v59, 0.0
  %v175 = vadd.f32 %v173, %v174
  %v176 = vsel %vm72, %v60, 0.0
  %v177 = vadd.f32 %v175, %v176
  %v178 = vsel %vm72, %v61, 0.0
  %v179 = vadd.f32 %v177, %v178
  %v180 = vsel %vm72, %v62, 0.0
  %v181 = vadd.f32 %v179, %v180
  %v182 = vsel %vm72, %v63, 0.0
  %v183 = vadd.f32 %v181, %v182
  %v184 = vsel %vm72, %v64, 0.0
  %v185 = vadd.f32 %v183, %v184
  %v186 = vsel %vm72, %v65, 0.0
  %v187 = vadd.f32 %v185, %v186
  %v188 = vsel %vm72, %v66, 0.0
  %v189 = vadd.f32 %v187, %v188
  %v190 = vsel %vm72, %v67, 0.0
  %v191 = vadd.f32 %v189, %v190
  %v192 = vsel %vm72, %v68, 0.0
  %v193 = vadd.f32 %v191, %v192
  %v194 = vsel %vm72, %v69, 0.0
  %v195 = vadd.f32 %v193, %v194
  %v196 = vsel %vm72, %v70, 0.0
  %v197 = vadd.f32 %v195, %v196
  %v198 = vsel %vm72, %v71, 0.0
  %v199 = vadd.f32 %v197, %v198
  %v200 = vrot.slane %v199, 4
  %v201 = vadd.f32 %v199, %v200
  %v202 = vrot.slane %v201, 2
  %v203 = vadd.f32 %v201, %v202
  %v204 = vrot.slane %v203, 1
  %v205 = vadd.f32 %v203, %v204
  %vm206 = vcmask 57344
  %207 = vst.msk [vmem:[%s1] sm:$0x1] %vm206, %v205
  %v208 = vmul.f32 %v8, %v8
  %v209 = vmul.f32 %v9, %v9
  %v210 = vmul.f32 %v10, %v10
  %v211 = vmul.f32 %v11, %v11
  %v212 = vmul.f32 %v12, %v12
  %v213 = vmul.f32 %v13, %v13
  %v214 = vmul.f32 %v14, %v14
  %v215 = vmul.f32 %v15, %v15
  %v216 = vmul.f32 %v16, %v16
  %v217 = vmul.f32 %v17, %v17
  %v218 = vmul.f32 %v18, %v18
  %v219 = vmul.f32 %v19, %v19
  %v220 = vmul.f32 %v20, %v20
  %v221 = vmul.f32 %v21, %v21
  %v222 = vmul.f32 %v22, %v22
  %v223 = vmul.f32 %v23, %v23
  %v224 = vmul.f32 %v24, %v24
  %v225 = vmul.f32 %v25, %v25
  %v226 = vmul.f32 %v26, %v26
  %v227 = vmul.f32 %v27, %v27
  %v228 = vmul.f32 %v28, %v28
  %v229 = vmul.f32 %v29, %v29
  %v230 = vmul.f32 %v30, %v30
  %v231 = vmul.f32 %v31, %v31
  %v232 = vmul.f32 %v32, %v32
  %v233 = vmul.f32 %v33, %v33
  %v234 = vmul.f32 %v34, %v34
  %v235 = vmul.f32 %v35, %v35
  %v236 = vmul.f32 %v36, %v36
  %v237 = vmul.f32 %v37, %v37
  %v238 = vmul.f32 %v38, %v38
  %v239 = vmul.f32 %v39, %v39
  %v240 = vmul.f32 %v40, %v40
  %v241 = vmul.f32 %v41, %v41
  %v242 = vmul.f32 %v42, %v42
  %v243 = vmul.f32 %v43, %v43
  %v244 = vmul.f32 %v44, %v44
  %v245 = vmul.f32 %v45, %v45
  %v246 = vmul.f32 %v46, %v46
  %v247 = vmul.f32 %v47, %v47
  %v248 = vmul.f32 %v48, %v48
  %v249 = vmul.f32 %v49, %v49
  %v250 = vmul.f32 %v50, %v50
  %v251 = vmul.f32 %v51, %v51
  %v252 = vmul.f32 %v52, %v52
  %v253 = vmul.f32 %v53, %v53
  %v254 = vmul.f32 %v54, %v54
  %v255 = vmul.f32 %v55, %v55
  %v256 = vmul.f32 %v56, %v56
  %v257 = vmul.f32 %v57, %v57
  %v258 = vmul.f32 %v58, %v58
  %v259 = vmul.f32 %v59, %v59
  %v260 = vmul.f32 %v60, %v60
  %v261 = vmul.f32 %v61, %v61
  %v262 = vmul.f32 %v62, %v62
  %v263 = vmul.f32 %v63, %v63
  %v264 = vmul.f32 %v64, %v64
  %v265 = vmul.f32 %v65, %v65
  %v266 = vmul.f32 %v66, %v66
  %v267 = vmul.f32 %v67, %v67
  %v268 = vmul.f32 %v68, %v68
  %v269 = vmul.f32 %v69, %v69
  %v270 = vmul.f32 %v70, %v70
  %v271 = vmul.f32 %v71, %v71
  %v272 = vsel %vm72, %v208, 0.0
  %v273 = vsel %vm72, %v209, 0.0
  %v274 = vadd.f32 %v272, %v273
  %v275 = vsel %vm72, %v210, 0.0
  %v276 = vadd.f32 %v274, %v275
  %v277 = vsel %vm72, %v211, 0.0
  %v278 = vadd.f32 %v276, %v277
  %v279 = vsel %vm72, %v212, 0.0
  %v280 = vadd.f32 %v278, %v279
  %v281 = vsel %vm72, %v213, 0.0
  %v282 = vadd.f32 %v280, %v281
  %v283 = vsel %vm72, %v214, 0.0
  %v284 = vadd.f32 %v282, %v283
  %v285 = vsel %vm72, %v215, 0.0
  %v286 = vadd.f32 %v284, %v285
  %v287 = vsel %vm72, %v216, 0.0
  %v288 = vadd.f32 %v286, %v287
  %v289 = vsel %vm72, %v217, 0.0
  %v290 = vadd.f32 %v288, %v289
  %v291 = vsel %vm72, %v218, 0.0
  %v292 = vadd.f32 %v290, %v291
  %v293 = vsel %vm72, %v219, 0.0
  %v294 = vadd.f32 %v292, %v293
  %v295 = vsel %vm72, %v220, 0.0
  %v296 = vadd.f32 %v294, %v295
  %v297 = vsel %vm72, %v221, 0.0
  %v298 = vadd.f32 %v296, %v297
  %v299 = vsel %vm72, %v222, 0.0
  %v300 = vadd.f32 %v298, %v299
  %v301 = vsel %vm72, %v223, 0.0
  %v302 = vadd.f32 %v300, %v301
  %v303 = vsel %vm72, %v224, 0.0
  %v304 = vadd.f32 %v302, %v303
  %v305 = vsel %vm72, %v225, 0.0
  %v306 = vadd.f32 %v304, %v305
  %v307 = vsel %vm72, %v226, 0.0
  %v308 = vadd.f32 %v306, %v307
  %v309 = vsel %vm72, %v227, 0.0
  %v310 = vadd.f32 %v308, %v309
  %v311 = vsel %vm72, %v228, 0.0
  %v312 = vadd.f32 %v310, %v311
  %v313 = vsel %vm72, %v229, 0.0
  %v314 = vadd.f32 %v312, %v313
  %v315 = vsel %vm72, %v230, 0.0
  %v316 = vadd.f32 %v314, %v315
  %v317 = vsel %vm72, %v231, 0.0
  %v318 = vadd.f32 %v316, %v317
  %v319 = vsel %vm72, %v232, 0.0
  %v320 = vadd.f32 %v318, %v319
  %v321 = vsel %vm72, %v233, 0.0
  %v322 = vadd.f32 %v320, %v321
  %v323 = vsel %vm72, %v234, 0.0
  %v324 = vadd.f32 %v322, %v323
  %v325 = vsel %vm72, %v235, 0.0
  %v326 = vadd.f32 %v324, %v325
  %v327 = vsel %vm72, %v236, 0.0
  %v328 = vadd.f32 %v326, %v327
  %v329 = vsel %vm72, %v237, 0.0
  %v330 = vadd.f32 %v328, %v329
  %v331 = vsel %vm72, %v238, 0.0
  %v332 = vadd.f32 %v330, %v331
  %v333 = vsel %vm72, %v239, 0.0
  %v334 = vadd.f32 %v332, %v333
  %v335 = vsel %vm72, %v240, 0.0
  %v336 = vadd.f32 %v334, %v335
  %v337 = vsel %vm72, %v241, 0.0
  %v338 = vadd.f32 %v336, %v337
  %v339 = vsel %vm72, %v242, 0.0
  %v340 = vadd.f32 %v338, %v339
  %v341 = vsel %vm72, %v243, 0.0
  %v342 = vadd.f32 %v340, %v341
  %v343 = vsel %vm72, %v244, 0.0
  %v344 = vadd.f32 %v342, %v343
  %v345 = vsel %vm72, %v245, 0.0
  %v346 = vadd.f32 %v344, %v345
  %v347 = vsel %vm72, %v246, 0.0
  %v348 = vadd.f32 %v346, %v347
  %v349 = vsel %vm72, %v247, 0.0
  %v350 = vadd.f32 %v348, %v349
  %v351 = vsel %vm72, %v248, 0.0
  %v352 = vadd.f32 %v350, %v351
  %v353 = vsel %vm72, %v249, 0.0
  %v354 = vadd.f32 %v352, %v353
  %v355 = vsel %vm72, %v250, 0.0
  %v356 = vadd.f32 %v354, %v355
  %v357 = vsel %vm72, %v251, 0.0
  %v358 = vadd.f32 %v356, %v357
  %v359 = vsel %vm72, %v252, 0.0
  %v360 = vadd.f32 %v358, %v359
  %v361 = vsel %vm72, %v253, 0.0
  %v362 = vadd.f32 %v360, %v361
  %v363 = vsel %vm72, %v254, 0.0
  %v364 = vadd.f32 %v362, %v363
  %v365 = vsel %vm72, %v255, 0.0
  %v366 = vadd.f32 %v364, %v365
  %v367 = vsel %vm72, %v256, 0.0
  %v368 = vadd.f32 %v366, %v367
  %v369 = vsel %vm72, %v257, 0.0
  %v370 = vadd.f32 %v368, %v369
  %v371 = vsel %vm72, %v258, 0.0
  %v372 = vadd.f32 %v370, %v371
  %v373 = vsel %vm72, %v259, 0.0
  %v374 = vadd.f32 %v372, %v373
  %v375 = vsel %vm72, %v260, 0.0
  %v376 = vadd.f32 %v374, %v375
  %v377 = vsel %vm72, %v261, 0.0
  %v378 = vadd.f32 %v376, %v377
  %v379 = vsel %vm72, %v262, 0.0
  %v380 = vadd.f32 %v378, %v379
  %v381 = vsel %vm72, %v263, 0.0
  %v382 = vadd.f32 %v380, %v381
  %v383 = vsel %vm72, %v264, 0.0
  %v384 = vadd.f32 %v382, %v383
  %v385 = vsel %vm72, %v265, 0.0
  %v386 = vadd.f32 %v384, %v385
  %v387 = vsel %vm72, %v266, 0.0
  %v388 = vadd.f32 %v386, %v387
  %v389 = vsel %vm72, %v267, 0.0
  %v390 = vadd.f32 %v388, %v389
  %v391 = vsel %vm72, %v268, 0.0
  %v392 = vadd.f32 %v390, %v391
  %v393 = vsel %vm72, %v269, 0.0
  %v394 = vadd.f32 %v392, %v393
  %v395 = vsel %vm72, %v270, 0.0
  %v396 = vadd.f32 %v394, %v395
  %v397 = vsel %vm72, %v271, 0.0
  %v398 = vadd.f32 %v396, %v397
  %v399 = vrot.slane %v398, 4
  %v400 = vadd.f32 %v398, %v399
  %v401 = vrot.slane %v400, 2
  %v402 = vadd.f32 %v400, %v401
  %v403 = vrot.slane %v402, 1
  %v404 = vadd.f32 %v402, %v403
  %405 = vst.msk [vmem:[%s1 + $0x1] sm:$0x1] %vm206, %v404
  // Predicated region
  $region6: #{dense_layer_mask_forward.3} parent=0 // pred_check
    _
  $region7: #{dense_layer_mask_forward.3} parent=0 // pred_check_branch
    %407 = sbr.rel (0) target = $region9
  $region8: #{dense_layer_mask_forward.3} parent=0 // pred_region
    _
  $region9: #{dense_layer_mask_forward.3} parent=0 // pred_fallthru
    _
  // Predicated region
  $region10: #{dense_layer_mask_forward.3} parent=0 // pred_check
    _
  $region11: #{dense_layer_mask_forward.3} parent=0 // pred_check_branch
    %409 = sbr.rel (0) target = $region13
  $region12: #{dense_layer_mask_forward.3} parent=0 // pred_region
    _
  $region13: #{dense_layer_mask_forward.3} parent=0 // pred_fallthru
    _

// kernel: dense_layer_mask_forward.4
$region0: #{dense_layer_mask_forward.4}
  #allocation0 [shape = 'u32[]', space=smem, size = 0x4, offset = 0x4, fixed_abs, tag = 'smem constant byte address 0x4 - core index']
  #allocation1 [shape = 'u32[144,128]{1,0:T(1,128)}', space=vmem, size = 0x12000, scoped, tag = 'internal scratch']
  %s0 = inlined_call_operand.vmem [shape: f32[512,8], index: 0, kind: input, shape index: {}]
  %s1 = inlined_call_operand.vmem [shape: f32[1,8], index: 1, kind: input, shape index: {}]
  %s2 = inlined_call_operand.vmem [shape: f32[1,8], index: 2, kind: input, shape index: {}]
  %s3 = inlined_call_operand.vmem [shape: bf16[8,32], index: 3, kind: input, shape index: {}]
  %s4 = inlined_call_operand.vmem [shape: bf16[512,32], index: 4, kind: output, shape index: {0}]
  %s5 = inlined_call_operand.vmem [shape: f32[1,2,32], index: 5, kind: output, shape index: {1}]
  %6 = xla_tuple %s4, %s5
  %s7 = sld [smem:[#allocation0]]
  $region34: #{dense_layer_mask_forward.4} parent=0
    _
  %s9 = ssub.s32 1, %s7
  %s10 = scalar_select 0, %s9, %s7
  // Predicated region
  $region2: #{dense_layer_mask_forward.4} parent=0 // pred_check
    _
  $region3: #{dense_layer_mask_forward.4} parent=0 // pred_check_branch
    %12 = sbr.rel (0) target = $region5
  $region4: #{dense_layer_mask_forward.4} parent=0 // pred_region
    _
  $region5: #{dense_layer_mask_forward.4} parent=0 // pred_fallthru
    _
  // Predicated region
  $region6: #{dense_layer_mask_forward.4} parent=0 // pred_check
    _
  $region7: #{dense_layer_mask_forward.4} parent=0 // pred_check_branch
    %14 = sbr.rel (0) target = $region9
  $region8: #{dense_layer_mask_forward.4} parent=0 // pred_region
    _
  $region9: #{dense_layer_mask_forward.4} parent=0 // pred_fallthru
    _
  // Predicated region
  $region10: #{dense_layer_mask_forward.4} parent=0 // pred_check
    _
  $region11: #{dense_layer_mask_forward.4} parent=0 // pred_check_branch
    %16 = sbr.rel (0) target = $region13
  $region12: #{dense_layer_mask_forward.4} parent=0 // pred_region
    _
  $region13: #{dense_layer_mask_forward.4} parent=0 // pred_fallthru
    _
  // Predicated region
  $region14: #{dense_layer_mask_forward.4} parent=0 // pred_check
    _
  $region15: #{dense_layer_mask_forward.4} parent=0 // pred_check_branch
    %18 = sbr.rel (0) target = $region17
  $region16: #{dense_layer_mask_forward.4} parent=0 // pred_region
    _
  $region17: #{dense_layer_mask_forward.4} parent=0 // pred_fallthru
    _
  %v20 = vld [vmem:[%s0] sm:$0xff]
  %v21 = vld [vmem:[%s0 + $0x8] sm:$0xff]
  %v22 = vld [vmem:[%s0 + $0x10] sm:$0xff]
  %v23 = vld [vmem:[%s0 + $0x18] sm:$0xff]
  %v24 = vld [vmem:[%s0 + $0x20] sm:$0xff]
  %v25 = vld [vmem:[%s0 + $0x28] sm:$0xff]
  %v26 = vld [vmem:[%s0 + $0x30] sm:$0xff]
  %v27 = vld [vmem:[%s0 + $0x38] sm:$0xff]
  %v28 = vld [vmem:[%s0 + $0x40] sm:$0xff]
  %v29 = vld [vmem:[%s0 + $0x48] sm:$0xff]
  %v30 = vld [vmem:[%s0 + $0x50] sm:$0xff]
  %v31 = vld [vmem:[%s0 + $0x58] sm:$0xff]
  %v32 = vld [vmem:[%s0 + $0x60] sm:$0xff]
  %v33 = vld [vmem:[%s0 + $0x68] sm:$0xff]
  %v34 = vld [vmem:[%s0 + $0x70] sm:$0xff]
  %v35 = vld [vmem:[%s0 + $0x78] sm:$0xff]
  %v36 = vld [vmem:[%s0 + $0x80] sm:$0xff]
  %v37 = vld [vmem:[%s0 + $0x88] sm:$0xff]
  %v38 = vld [vmem:[%s0 + $0x90] sm:$0xff]
  %v39 = vld [vmem:[%s0 + $0x98] sm:$0xff]
  %v40 = vld [vmem:[%s0 + $0xa0] sm:$0xff]
  %v41 = vld [vmem:[%s0 + $0xa8] sm:$0xff]
  %v42 = vld [vmem:[%s0 + $0xb0] sm:$0xff]
  %v43 = vld [vmem:[%s0 + $0xb8] sm:$0xff]
  %v44 = vld [vmem:[%s0 + $0xc0] sm:$0xff]
  %v45 = vld [vmem:[%s0 + $0xc8] sm:$0xff]
  %v46 = vld [vmem:[%s0 + $0xd0] sm:$0xff]
  %v47 = vld [vmem:[%s0 + $0xd8] sm:$0xff]
  %v48 = vld [vmem:[%s0 + $0xe0] sm:$0xff]
  %v49 = vld [vmem:[%s0 + $0xe8] sm:$0xff]
  %v50 = vld [vmem:[%s0 + $0xf0] sm:$0xff]
  %v51 = vld [vmem:[%s0 + $0xf8] sm:$0xff]
  %v52 = vld [vmem:[%s0 + $0x100] sm:$0xff]
  %v53 = vld [vmem:[%s0 + $0x108] sm:$0xff]
  %v54 = vld [vmem:[%s0 + $0x110] sm:$0xff]
  %v55 = vld [vmem:[%s0 + $0x118] sm:$0xff]
  %v56 = vld [vmem:[%s0 + $0x120] sm:$0xff]
  %v57 = vld [vmem:[%s0 + $0x128] sm:$0xff]
  %v58 = vld [vmem:[%s0 + $0x130] sm:$0xff]
  %v59 = vld [vmem:[%s0 + $0x138] sm:$0xff]
  %v60 = vld [vmem:[%s0 + $0x140] sm:$0xff]
  %v61 = vld [vmem:[%s0 + $0x148] sm:$0xff]
  %v62 = vld [vmem:[%s0 + $0x150] sm:$0xff]
  %v63 = vld [vmem:[%s0 + $0x158] sm:$0xff]
  %v64 = vld [vmem:[%s0 + $0x160] sm:$0xff]
  %v65 = vld [vmem:[%s0 + $0x168] sm:$0xff]
  %v66 = vld [vmem:[%s0 + $0x170] sm:$0xff]
  %v67 = vld [vmem:[%s0 + $0x178] sm:$0xff]
  %v68 = vld [vmem:[%s0 + $0x180] sm:$0xff]
  %v69 = vld [vmem:[%s0 + $0x188] sm:$0xff]
  %v70 = vld [vmem:[%s0 + $0x190] sm:$0xff]
  %v71 = vld [vmem:[%s0 + $0x198] sm:$0xff]
  %v72 = vld [vmem:[%s0 + $0x1a0] sm:$0xff]
  %v73 = vld [vmem:[%s0 + $0x1a8] sm:$0xff]
  %v74 = vld [vmem:[%s0 + $0x1b0] sm:$0xff]
  %v75 = vld [vmem:[%s0 + $0x1b8] sm:$0xff]
  %v76 = vld [vmem:[%s0 + $0x1c0] sm:$0xff]
  %v77 = vld [vmem:[%s0 + $0x1c8] sm:$0xff]
  %v78 = vld [vmem:[%s0 + $0x1d0] sm:$0xff]
  %v79 = vld [vmem:[%s0 + $0x1d8] sm:$0xff]
  %v80 = vld [vmem:[%s0 + $0x1e0] sm:$0xff]
  %v81 = vld [vmem:[%s0 + $0x1e8] sm:$0xff]
  %v82 = vld [vmem:[%s0 + $0x1f0] sm:$0xff]
  %v83 = vld [vmem:[%s0 + $0x1f8] sm:$0xff]
  %v84 = vld [vmem:[%s1] sm:$0x1]
  %v86 = vlaneseq
  %v87 = vshrl.u32 %v86, 7
  %v88 = vsub.s32 0, %v87
  %v89 = vrot.slane %v84, %v88
  %v91 = vmul.f32 %v20, %v89
  %v92 = vmul.f32 %v21, %v89
  %v93 = vmul.f32 %v22, %v89
  %v94 = vmul.f32 %v23, %v89
  %v95 = vmul.f32 %v24, %v89
  %v96 = vmul.f32 %v25, %v89
  %v97 = vmul.f32 %v26, %v89
  %v98 = vmul.f32 %v27, %v89
  %v99 = vmul.f32 %v28, %v89
  %v100 = vmul.f32 %v29, %v89
  %v101 = vmul.f32 %v30, %v89
  %v102 = vmul.f32 %v31, %v89
  %v103 = vmul.f32 %v32, %v89
  %v104 = vmul.f32 %v33, %v89
  %v105 = vmul.f32 %v34, %v89
  %v106 = vmul.f32 %v35, %v89
  %v107 = vmul.f32 %v36, %v89
  %v108 = vmul.f32 %v37, %v89
  %v109 = vmul.f32 %v38, %v89
  %v110 = vmul.f32 %v39, %v89
  %v111 = vmul.f32 %v40, %v89
  %v112 = vmul.f32 %v41, %v89
  %v113 = vmul.f32 %v42, %v89
  %v114 = vmul.f32 %v43, %v89
  %v115 = vmul.f32 %v44, %v89
  %v116 = vmul.f32 %v45, %v89
  %v117 = vmul.f32 %v46, %v89
  %v118 = vmul.f32 %v47, %v89
  %v119 = vmul.f32 %v48, %v89
  %v120 = vmul.f32 %v49, %v89
  %v121 = vmul.f32 %v50, %v89
  %v122 = vmul.f32 %v51, %v89
  %v123 = vmul.f32 %v52, %v89
  %v124 = vmul.f32 %v53, %v89
  %v125 = vmul.f32 %v54, %v89
  %v126 = vmul.f32 %v55, %v89
  %v127 = vmul.f32 %v56, %v89
  %v128 = vmul.f32 %v57, %v89
  %v129 = vmul.f32 %v58, %v89
  %v130 = vmul.f32 %v59, %v89
  %v131 = vmul.f32 %v60, %v89
  %v132 = vmul.f32 %v61, %v89
  %v133 = vmul.f32 %v62, %v89
  %v134 = vmul.f32 %v63, %v89
  %v135 = vmul.f32 %v64, %v89
  %v136 = vmul.f32 %v65, %v89
  %v137 = vmul.f32 %v66, %v89
  %v138 = vmul.f32 %v67, %v89
  %v139 = vmul.f32 %v68, %v89
  %v140 = vmul.f32 %v69, %v89
  %v141 = vmul.f32 %v70, %v89
  %v142 = vmul.f32 %v71, %v89
  %v143 = vmul.f32 %v72, %v89
  %v144 = vmul.f32 %v73, %v89
  %v145 = vmul.f32 %v74, %v89
  %v146 = vmul.f32 %v75, %v89
  %v147 = vmul.f32 %v76, %v89
  %v148 = vmul.f32 %v77, %v89
  %v149 = vmul.f32 %v78, %v89
  %v150 = vmul.f32 %v79, %v89
  %v151 = vmul.f32 %v80, %v89
  %v152 = vmul.f32 %v81, %v89
  %v153 = vmul.f32 %v82, %v89
  %v154 = vmul.f32 %v83, %v89
  %v155 = vld [vmem:[%s2] sm:$0x1]
  %v157 = vlaneseq
  %v158 = vshrl.u32 %v157, 7
  %v159 = vsub.s32 0, %v158
  %v160 = vrot.slane %v155, %v159
  %v162 = vadd.f32 %v91, %v160
  %v163 = vadd.f32 %v92, %v160
  %v164 = vadd.f32 %v93, %v160
  %v165 = vadd.f32 %v94, %v160
  %v166 = vadd.f32 %v95, %v160
  %v167 = vadd.f32 %v96, %v160
  %v168 = vadd.f32 %v97, %v160
  %v169 = vadd.f32 %v98, %v160
  %v170 = vadd.f32 %v99, %v160
  %v171 = vadd.f32 %v100, %v160
  %v172 = vadd.f32 %v101, %v160
  %v173 = vadd.f32 %v102, %v160
  %v174 = vadd.f32 %v103, %v160
  %v175 = vadd.f32 %v104, %v160
  %v176 = vadd.f32 %v105, %v160
  %v177 = vadd.f32 %v106, %v160
  %v178 = vadd.f32 %v107, %v160
  %v179 = vadd.f32 %v108, %v160
  %v180 = vadd.f32 %v109, %v160
  %v181 = vadd.f32 %v110, %v160
  %v182 = vadd.f32 %v111, %v160
  %v183 = vadd.f32 %v112, %v160
  %v184 = vadd.f32 %v113, %v160
  %v185 = vadd.f32 %v114, %v160
  %v186 = vadd.f32 %v115, %v160
  %v187 = vadd.f32 %v116, %v160
  %v188 = vadd.f32 %v117, %v160
  %v189 = vadd.f32 %v118, %v160
  %v190 = vadd.f32 %v119, %v160
  %v191 = vadd.f32 %v120, %v160
  %v192 = vadd.f32 %v121, %v160
  %v193 = vadd.f32 %v122, %v160
  %v194 = vadd.f32 %v123, %v160
  %v195 = vadd.f32 %v124, %v160
  %v196 = vadd.f32 %v125, %v160
  %v197 = vadd.f32 %v126, %v160
  %v198 = vadd.f32 %v127, %v160
  %v199 = vadd.f32 %v128, %v160
  %v200 = vadd.f32 %v129, %v160
  %v201 = vadd.f32 %v130, %v160
  %v202 = vadd.f32 %v131, %v160
  %v203 = vadd.f32 %v132, %v160
  %v204 = vadd.f32 %v133, %v160
  %v205 = vadd.f32 %v134, %v160
  %v206 = vadd.f32 %v135, %v160
  %v207 = vadd.f32 %v136, %v160
  %v208 = vadd.f32 %v137, %v160
  %v209 = vadd.f32 %v138, %v160
  %v210 = vadd.f32 %v139, %v160
  %v211 = vadd.f32 %v140, %v160
  %v212 = vadd.f32 %v141, %v160
  %v213 = vadd.f32 %v142, %v160
  %v214 = vadd.f32 %v143, %v160
  %v215 = vadd.f32 %v144, %v160
  %v216 = vadd.f32 %v145, %v160
  %v217 = vadd.f32 %v146, %v160
  %v218 = vadd.f32 %v147, %v160
  %v219 = vadd.f32 %v148, %v160
  %v220 = vadd.f32 %v149, %v160
  %v221 = vadd.f32 %v150, %v160
  %v222 = vadd.f32 %v151, %v160
  %v223 = vadd.f32 %v152, %v160
  %v224 = vadd.f32 %v153, %v160
  %v225 = vadd.f32 %v154, %v160
  %v226 = vmax.f32 %v162, 0.0
  %v227 = vmax.f32 %v163, 0.0
  %v228 = vmax.f32 %v164, 0.0
  %v229 = vmax.f32 %v165, 0.0
  %v230 = vmax.f32 %v166, 0.0
  %v231 = vmax.f32 %v167, 0.0
  %v232 = vmax.f32 %v168, 0.0
  %v233 = vmax.f32 %v169, 0.0
  %v234 = vmax.f32 %v170, 0.0
  %v235 = vmax.f32 %v171, 0.0
  %v236 = vmax.f32 %v172, 0.0
  %v237 = vmax.f32 %v173, 0.0
  %v238 = vmax.f32 %v174, 0.0
  %v239 = vmax.f32 %v175, 0.0
  %v240 = vmax.f32 %v176, 0.0
  %v241 = vmax.f32 %v177, 0.0
  %v242 = vmax.f32 %v178, 0.0
  %v243 = vmax.f32 %v179, 0.0
  %v244 = vmax.f32 %v180, 0.0
  %v245 = vmax.f32 %v181, 0.0
  %v246 = vmax.f32 %v182, 0.0
  %v247 = vmax.f32 %v183, 0.0
  %v248 = vmax.f32 %v184, 0.0
  %v249 = vmax.f32 %v185, 0.0
  %v250 = vmax.f32 %v186, 0.0
  %v251 = vmax.f32 %v187, 0.0
  %v252 = vmax.f32 %v188, 0.0
  %v253 = vmax.f32 %v189, 0.0
  %v254 = vmax.f32 %v190, 0.0
  %v255 = vmax.f32 %v191, 0.0
  %v256 = vmax.f32 %v192, 0.0
  %v257 = vmax.f32 %v193, 0.0
  %v258 = vmax.f32 %v194, 0.0
  %v259 = vmax.f32 %v195, 0.0
  %v260 = vmax.f32 %v196, 0.0
  %v261 = vmax.f32 %v197, 0.0
  %v262 = vmax.f32 %v198, 0.0
  %v263 = vmax.f32 %v199, 0.0
  %v264 = vmax.f32 %v200, 0.0
  %v265 = vmax.f32 %v201, 0.0
  %v266 = vmax.f32 %v202, 0.0
  %v267 = vmax.f32 %v203, 0.0
  %v268 = vmax.f32 %v204, 0.0
  %v269 = vmax.f32 %v205, 0.0
  %v270 = vmax.f32 %v206, 0.0
  %v271 = vmax.f32 %v207, 0.0
  %v272 = vmax.f32 %v208, 0.0
  %v273 = vmax.f32 %v209, 0.0
  %v274 = vmax.f32 %v210, 0.0
  %v275 = vmax.f32 %v211, 0.0
  %v276 = vmax.f32 %v212, 0.0
  %v277 = vmax.f32 %v213, 0.0
  %v278 = vmax.f32 %v214, 0.0
  %v279 = vmax.f32 %v215, 0.0
  %v280 = vmax.f32 %v216, 0.0
  %v281 = vmax.f32 %v217, 0.0
  %v282 = vmax.f32 %v218, 0.0
  %v283 = vmax.f32 %v219, 0.0
  %v284 = vmax.f32 %v220, 0.0
  %v285 = vmax.f32 %v221, 0.0
  %v286 = vmax.f32 %v222, 0.0
  %v287 = vmax.f32 %v223, 0.0
  %v288 = vmax.f32 %v224, 0.0
  %v289 = vmax.f32 %v225, 0.0
  %v290 = vpack.c.bf16 %v227, %v226
  %v291 = vpack.c.bf16 %v229, %v228
  %v292 = vpack.c.bf16 %v231, %v230
  %v293 = vpack.c.bf16 %v233, %v232
  %v294 = vpack.c.bf16 %v235, %v234
  %v295 = vpack.c.bf16 %v237, %v236
  %v296 = vpack.c.bf16 %v239, %v238
  %v297 = vpack.c.bf16 %v241, %v240
  %v298 = vpack.c.bf16 %v243, %v242
  %v299 = vpack.c.bf16 %v245, %v244
  %v300 = vpack.c.bf16 %v247, %v246
  %v301 = vpack.c.bf16 %v249, %v248
  %v302 = vpack.c.bf16 %v251, %v250
  %v303 = vpack.c.bf16 %v253, %v252
  %v304 = vpack.c.bf16 %v255, %v254
  %v305 = vpack.c.bf16 %v257, %v256
  %v306 = vpack.c.bf16 %v259, %v258
  %v307 = vpack.c.bf16 %v261, %v260
  %v308 = vpack.c.bf16 %v263, %v262
  %v309 = vpack.c.bf16 %v265, %v264
  %v310 = vpack.c.bf16 %v267, %v266
  %v311 = vpack.c.bf16 %v269, %v268
  %v312 = vpack.c.bf16 %v271, %v270
  %v313 = vpack.c.bf16 %v273, %v272
  %v314 = vpack.c.bf16 %v275, %v274
  %v315 = vpack.c.bf16 %v277, %v276
  %v316 = vpack.c.bf16 %v279, %v278
  %v317 = vpack.c.bf16 %v281, %v280
  %v318 = vpack.c.bf16 %v283, %v282
  %v319 = vpack.c.bf16 %v285, %v284
  %v320 = vpack.c.bf16 %v287, %v286
  %v321 = vpack.c.bf16 %v289, %v288
  %v322 = vld [vmem:[%s3] sm:$0xf]
  %vm323 = vcmask 64512
  %v325 = vsel %vm323, %v290, 0
  %v328 = vsel %vm323, %v291, 0
  %v331 = vsel %vm323, %v292, 0
  %v334 = vsel %vm323, %v293, 0
  %v337 = vsel %vm323, %v294, 0
  %v340 = vsel %vm323, %v295, 0
  %v343 = vsel %vm323, %v296, 0
  %v346 = vsel %vm323, %v297, 0
  %v349 = vsel %vm323, %v298, 0
  %v352 = vsel %vm323, %v299, 0
  %v355 = vsel %vm323, %v300, 0
  %v358 = vsel %vm323, %v301, 0
  %v361 = vsel %vm323, %v302, 0
  %v364 = vsel %vm323, %v303, 0
  %v367 = vsel %vm323, %v304, 0
  %v370 = vsel %vm323, %v305, 0
  %v373 = vsel %vm323, %v306, 0
  %v376 = vsel %vm323, %v307, 0
  %v379 = vsel %vm323, %v308, 0
  %v382 = vsel %vm323, %v309, 0
  %v385 = vsel %vm323, %v310, 0
  %v388 = vsel %vm323, %v311, 0
  %v391 = vsel %vm323, %v312, 0
  %v394 = vsel %vm323, %v313, 0
  %v397 = vsel %vm323, %v314, 0
  %v400 = vsel %vm323, %v315, 0
  %v403 = vsel %vm323, %v316, 0
  %v406 = vsel %vm323, %v317, 0
  %v409 = vsel %vm323, %v318, 0
  %v412 = vsel %vm323, %v319, 0
  %v415 = vsel %vm323, %v320, 0
  %v418 = vsel %vm323, %v321, 0
  %vm420 = vcmask 1043456
  %v422 = vsel %vm420, %v322, 0
  %424 = vmatprep.subr.bf16.mxu0 0
  %425 = vmatpush1.bf16.msra.mxu0 %v422
  %426 = vmatprep.subr.bf16.mxu0 0
  %427 = vmatpush1.bf16.msra.mxu0 0
  %428 = vmatprep.subr.bf16.mxu0 0
  %429 = vmatpush1.bf16.msra.mxu0 0
  %430 = vmatprep.subr.bf16.mxu0 0
  %431 = vmatpush1.bf16.msra.mxu0 0
  %432 = vmatprep.subr.bf16.mxu0 0
  %433 = vmatpush1.bf16.msra.mxu0 0
  %434 = vmatprep.subr.bf16.mxu0 0
  %435 = vmatpush1.bf16.msra.mxu0 0
  %436 = vmatprep.subr.bf16.mxu0 0
  %437 = vmatpush1.bf16.msra.mxu0 0
  %438 = vmatprep.subr.bf16.mxu0 0
  %439 = vmatpush1.bf16.msra.mxu0 0
  %440 = vmatprep.subr.bf16.mxu0 0
  %441 = vmatpush1.bf16.msra.mxu0 0
  %442 = vmatprep.subr.bf16.mxu0 0
  %443 = vmatpush1.bf16.msra.mxu0 0
  %444 = vmatprep.subr.bf16.mxu0 0
  %445 = vmatpush1.bf16.msra.mxu0 0
  %446 = vmatprep.subr.bf16.mxu0 0
  %447 = vmatpush1.bf16.msra.mxu0 0
  %448 = vmatprep.subr.bf16.mxu0 0
  %449 = vmatpush1.bf16.msra.mxu0 0
  %450 = vmatprep.subr.bf16.mxu0 0
  %451 = vmatpush1.bf16.msra.mxu0 0
  %452 = vmatprep.subr.bf16.mxu0 0
  %453 = vmatpush1.bf16.msra.mxu0 0
  %454 = vmatprep.subr.bf16.mxu0 0
  %455 = vmatpush1.bf16.msra.mxu0 0
  %456 = vmatprep.mubr.bf16.mxu0 0
  %457 = vmatmul.mubr.bf16.gmra.mrb[0].mxu0 %v325
  %v458 = vpop.f32.mrb[0].mxu0
  %v459 = vadd.f32 0.0, %v458
  %v460 = vpop.f32.mrb[0].mxu0
  %v461 = vpop.f32.mrb[0].mxu0
  %v462 = vadd.f32 0.0, %v461
  %v463 = vpop.f32.mrb[0].mxu0
  %464 = vmatprep.mubr.bf16.mxu0 0
  %465 = vmatmul.mubr.bf16.gmra.mrb[0].mxu0 %v328
  %v466 = vpop.f32.mrb[0].mxu0
  %v467 = vadd.f32 0.0, %v466
  %v468 = vpop.f32.mrb[0].mxu0
  %v469 = vpop.f32.mrb[0].mxu0
  %v470 = vadd.f32 0.0, %v469
  %v471 = vpop.f32.mrb[0].mxu0
  %472 = vmatprep.mubr.bf16.mxu0 0
  %473 = vmatmul.mubr.bf16.gmra.mrb[0].mxu0 %v331
  %v474 = vpop.f32.mrb[0].mxu0
  %v475 = vadd.f32 0.0, %v474
  %v476 = vpop.f32.mrb[0].mxu0
  %v477 = vpop.f32.mrb[0].mxu0
  %v478 = vadd.f32 0.0, %v477
  %v479 = vpop.f32.mrb[0].mxu0
  %480 = vmatprep.mubr.bf16.mxu0 0
  %481 = vmatmul.mubr.bf16.gmra.mrb[0].mxu0 %v334
  %v482 = vpop.f32.mrb[0].mxu0
  %v483 = vadd.f32 0.0, %v482
  %v484 = vpop.f32.mrb[0].mxu0
  %v485 = vpop.f32.mrb[0].mxu0
  %v486 = vadd.f32 0.0, %v485
  %v487 = vpop.f32.mrb[0].mxu0
  %488 = vmatprep.mubr.bf16.mxu0 0
  %489 = vmatmul.mubr.bf16.gmra.mrb[0].mxu0 %v337
  %v490 = vpop.f32.mrb[0].mxu0
  %v491 = vadd.f32 0.0, %v490
  %v492 = vpop.f32.mrb[0].mxu0
  %v493 = vpop.f32.mrb[0].mxu0
  %v494 = vadd.f32 0.0, %v493
  %v495 = vpop.f32.mrb[0].mxu0
  %496 = vmatprep.mubr.bf16.mxu0 0
  %497 = vmatmul.mubr.bf16.gmra.mrb[0].mxu0 %v340
  %v498 = vpop.f32.mrb[0].mxu0
  %v499 = vadd.f32 0.0, %v498
  %v500 = vpop.f32.mrb[0].mxu0
  %v501 = vpop.f32.mrb[0].mxu0
  %v502 = vadd.f32 0.0, %v501
  %v503 = vpop.f32.mrb[0].mxu0
  %504 = vmatprep.mubr.bf16.mxu0 0
  %505 = vmatmul.mubr.bf16.gmra.mrb[0].mxu0 %v343
  %v506 = vpop.f32.mrb[0].mxu0
  %v507 = vadd.f32 0.0, %v506
  %v508 = vpop.f32.mrb[0].mxu0
  %v509 = vpop.f32.mrb[0].mxu0
  %v510 = vadd.f32 0.0, %v509
  %v511 = vpop.f32.mrb[0].mxu0
  %512 = vmatprep.mubr.bf16.mxu0 0
  %513 = vmatmul.mubr.bf16.gmra.mrb[0].mxu0 %v346
  %v514 = vpop.f32.mrb[0].mxu0
  %v515 = vadd.f32 0.0, %v514
  %v516 = vpop.f32.mrb[0].mxu0
  %v517 = vpop.f32.mrb[0].mxu0
  %v518 = vadd.f32 0.0, %v517
  %v519 = vpop.f32.mrb[0].mxu0
  %520 = vmatprep.mubr.bf16.mxu0 0
  %521 = vmatmul.mubr.bf16.gmra.mrb[0].mxu0 %v349
  %v522 = vpop.f32.mrb[0].mxu0
  %v523 = vadd.f32 0.0, %v522
  %v524 = vpop.f32.mrb[0].mxu0
  %v525 = vpop.f32.mrb[0].mxu0
  %v526 = vadd.f32 0.0, %v525
  %v527 = vpop.f32.mrb[0].mxu0
  %528 = vmatprep.mubr.bf16.mxu0 0
  %529 = vmatmul.mubr.bf16.gmra.mrb[0].mxu0 %v352
  %v530 = vpop.f32.mrb[0].mxu0
  %v531 = vadd.f32 0.0, %v530
  %v532 = vpop.f32.mrb[0].mxu0
  %v533 = vpop.f32.mrb[0].mxu0
  %v534 = vadd.f32 0.0, %v533
  %v535 = vpop.f32.mrb[0].mxu0
  %536 = vmatprep.mubr.bf16.mxu0 0
  %537 = vmatmul.mubr.bf16.gmra.mrb[0].mxu0 %v355
  %v538 = vpop.f32.mrb[0].mxu0
  %v539 = vadd.f32 0.0, %v538
  %v540 = vpop.f32.mrb[0].mxu0
  %v541 = vpop.f32.mrb[0].mxu0
  %v542 = vadd.f32 0.0, %v541
  %v543 = vpop.f32.mrb[0].mxu0
  %544 = vmatprep.mubr.bf16.mxu0 0
  %545 = vmatmul.mubr.bf16.gmra.mrb[0].mxu0 %v358
  %v546 = vpop.f32.mrb[0].mxu0
  %v547 = vadd.f32 0.0, %v546
  %v548 = vpop.f32.mrb[0].mxu0
  %v549 = vpop.f32.mrb[0].mxu0
  %v550 = vadd.f32 0.0, %v549
  %v551 = vpop.f32.mrb[0].mxu0
  %552 = vmatprep.mubr.bf16.mxu0 0
  %553 = vmatmul.mubr.bf16.gmra.mrb[0].mxu0 %v361
  %v554 = vpop.f32.mrb[0].mxu0
  %v555 = vadd.f32 0.0, %v554
  %v556 = vpop.f32.mrb[0].mxu0
  %v557 = vpop.f32.mrb[0].mxu0
  %v558 = vadd.f32 0.0, %v557
  %v559 = vpop.f32.mrb[0].mxu0
  %560 = vmatprep.mubr.bf16.mxu0 0
  %561 = vmatmul.mubr.bf16.gmra.mrb[0].mxu0 %v364
  %v562 = vpop.f32.mrb[0].mxu0
  %v563 = vadd.f32 0.0, %v562
  %v564 = vpop.f32.mrb[0].mxu0
  %v565 = vpop.f32.mrb[0].mxu0
  %v566 = vadd.f32 0.0, %v565
  %v567 = vpop.f32.mrb[0].mxu0
  %568 = vmatprep.mubr.bf16.mxu0 0
  %569 = vmatmul.mubr.bf16.gmra.mrb[0].mxu0 %v367
  %v570 = vpop.f32.mrb[0].mxu0
  %v571 = vadd.f32 0.0, %v570
  %v572 = vpop.f32.mrb[0].mxu0
  %v573 = vpop.f32.mrb[0].mxu0
  %v574 = vadd.f32 0.0, %v573
  %v575 = vpop.f32.mrb[0].mxu0
  %576 = vmatprep.mubr.bf16.mxu0 0
  %577 = vmatmul.mubr.bf16.gmra.mrb[0].mxu0 %v370
  %v578 = vpop.f32.mrb[0].mxu0
  %v579 = vadd.f32 0.0, %v578
  %v580 = vpop.f32.mrb[0].mxu0
  %v581 = vpop.f32.mrb[0].mxu0
  %v582 = vadd.f32 0.0, %v581
  %v583 = vpop.f32.mrb[0].mxu0
  %584 = vmatprep.mubr.bf16.mxu0 0
  %585 = vmatmul.mubr.bf16.gmra.mrb[0].mxu0 %v373
  %v586 = vpop.f32.mrb[0].mxu0
  %v587 = vadd.f32 0.0, %v586
  %v588 = vpop.f32.mrb[0].mxu0
  %v589 = vpop.f32.mrb[0].mxu0
  %v590 = vadd.f32 0.0, %v589
  %v591 = vpop.f32.mrb[0].mxu0
  %592 = vmatprep.mubr.bf16.mxu0 0
  %593 = vmatmul.mubr.bf16.gmra.mrb[0].mxu0 %v376
  %v594 = vpop.f32.mrb[0].mxu0
  %v595 = vadd.f32 0.0, %v594
  %v596 = vpop.f32.mrb[0].mxu0
  %v597 = vpop.f32.mrb[0].mxu0
  %v598 = vadd.f32 0.0, %v597
  %v599 = vpop.f32.mrb[0].mxu0
  %600 = vmatprep.mubr.bf16.mxu0 0
  %601 = vmatmul.mubr.bf16.gmra.mrb[0].mxu0 %v379
  %v602 = vpop.f32.mrb[0].mxu0
  %v603 = vadd.f32 0.0, %v602
  %v604 = vpop.f32.mrb[0].mxu0
  %v605 = vpop.f32.mrb[0].mxu0
  %v606 = vadd.f32 0.0, %v605
  %v607 = vpop.f32.mrb[0].mxu0
  %608 = vmatprep.mubr.bf16.mxu0 0
  %609 = vmatmul.mubr.bf16.gmra.mrb[0].mxu0 %v382
  %v610 = vpop.f32.mrb[0].mxu0
  %v611 = vadd.f32 0.0, %v610
  %v612 = vpop.f32.mrb[0].mxu0
  %v613 = vpop.f32.mrb[0].mxu0
  %v614 = vadd.f32 0.0, %v613
  %v615 = vpop.f32.mrb[0].mxu0
  %616 = vmatprep.mubr.bf16.mxu0 0
  %617 = vmatmul.mubr.bf16.gmra.mrb[0].mxu0 %v385
  %v618 = vpop.f32.mrb[0].mxu0
  %v619 = vadd.f32 0.0, %v618
  %v620 = vpop.f32.mrb[0].mxu0
  %v621 = vpop.f32.mrb[0].mxu0
  %v622 = vadd.f32 0.0, %v621
  %v623 = vpop.f32.mrb[0].mxu0
  %624 = vmatprep.mubr.bf16.mxu0 0
  %625 = vmatmul.mubr.bf16.gmra.mrb[0].mxu0 %v388
  %v626 = vpop.f32.mrb[0].mxu0
  %v627 = vadd.f32 0.0, %v626
  %v628 = vpop.f32.mrb[0].mxu0
  %v629 = vpop.f32.mrb[0].mxu0
  %v630 = vadd.f32 0.0, %v629
  %v631 = vpop.f32.mrb[0].mxu0
  %632 = vmatprep.mubr.bf16.mxu0 0
  %633 = vmatmul.mubr.bf16.gmra.mrb[0].mxu0 %v391
  %v634 = vpop.f32.mrb[0].mxu0
  %v635 = vadd.f32 0.0, %v634
  %v636 = vpop.f32.mrb[0].mxu0
  %v637 = vpop.f32.mrb[0].mxu0
  %v638 = vadd.f32 0.0, %v637
  %v639 = vpop.f32.mrb[0].mxu0
  %640 = vmatprep.mubr.bf16.mxu0 0
  %641 = vmatmul.mubr.bf16.gmra.mrb[0].mxu0 %v394
  %v642 = vpop.f32.mrb[0].mxu0
  %v643 = vadd.f32 0.0, %v642
  %v644 = vpop.f32.mrb[0].mxu0
  %v645 = vpop.f32.mrb[0].mxu0
  %v646 = vadd.f32 0.0, %v645
  %v647 = vpop.f32.mrb[0].mxu0
  %648 = vmatprep.mubr.bf16.mxu0 0
  %649 = vmatmul.mubr.bf16.gmra.mrb[0].mxu0 %v397
  %v650 = vpop.f32.mrb[0].mxu0
  %v651 = vadd.f32 0.0, %v650
  %v652 = vpop.f32.mrb[0].mxu0
  %v653 = vpop.f32.mrb[0].mxu0
  %v654 = vadd.f32 0.0, %v653
  %v655 = vpop.f32.mrb[0].mxu0
  %656 = vmatprep.mubr.bf16.mxu0 0
  %657 = vmatmul.mubr.bf16.gmra.mrb[0].mxu0 %v400
  %v658 = vpop.f32.mrb[0].mxu0
  %v659 = vadd.f32 0.0, %v658
  %v660 = vpop.f32.mrb[0].mxu0
  %v661 = vpop.f32.mrb[0].mxu0
  %v662 = vadd.f32 0.0, %v661
  %v663 = vpop.f32.mrb[0].mxu0
  %664 = vmatprep.mubr.bf16.mxu0 0
  %665 = vmatmul.mubr.bf16.gmra.mrb[0].mxu0 %v403
  %v666 = vpop.f32.mrb[0].mxu0
  %v667 = vadd.f32 0.0, %v666
  %v668 = vpop.f32.mrb[0].mxu0
  %v669 = vpop.f32.mrb[0].mxu0
  %v670 = vadd.f32 0.0, %v669
  %v671 = vpop.f32.mrb[0].mxu0
  %672 = vmatprep.mubr.bf16.mxu0 0
  %673 = vmatmul.mubr.bf16.gmra.mrb[0].mxu0 %v406
  %v674 = vpop.f32.mrb[0].mxu0
  %v675 = vadd.f32 0.0, %v674
  %v676 = vpop.f32.mrb[0].mxu0
  %v677 = vpop.f32.mrb[0].mxu0
  %v678 = vadd.f32 0.0, %v677
  %v679 = vpop.f32.mrb[0].mxu0
  %680 = vmatprep.mubr.bf16.mxu0 0
  %681 = vmatmul.mubr.bf16.gmra.mrb[0].mxu0 %v409
  %v682 = vpop.f32.mrb[0].mxu0
  %v683 = vadd.f32 0.0, %v682
  %v684 = vpop.f32.mrb[0].mxu0
  %v685 = vpop.f32.mrb[0].mxu0
  %v686 = vadd.f32 0.0, %v685
  %v687 = vpop.f32.mrb[0].mxu0
  %688 = vmatprep.mubr.bf16.mxu0 0
  %689 = vmatmul.mubr.bf16.gmra.mrb[0].mxu0 %v412
  %v690 = vpop.f32.mrb[0].mxu0
  %v691 = vadd.f32 0.0, %v690
  %v692 = vpop.f32.mrb[0].mxu0
  %v693 = vpop.f32.mrb[0].mxu0
  %v694 = vadd.f32 0.0, %v693
  %v695 = vpop.f32.mrb[0].mxu0
  %696 = vmatprep.mubr.bf16.mxu0 0
  %697 = vmatmul.mubr.bf16.gmra.mrb[0].mxu0 %v415
  %v698 = vpop.f32.mrb[0].mxu0
  %v699 = vadd.f32 0.0, %v698
  %v700 = vpop.f32.mrb[0].mxu0
  %v701 = vpop.f32.mrb[0].mxu0
  %v702 = vadd.f32 0.0, %v701
  %v703 = vpop.f32.mrb[0].mxu0
  %704 = vmatprep.mubr.bf16.mxu0 0
  %705 = vmatmul.mubr.bf16.gmra.mrb[0].mxu0 %v418
  %v706 = vpop.f32.mrb[0].mxu0
  %v707 = vadd.f32 0.0, %v706
  %v708 = vpop.f32.mrb[0].mxu0
  %v709 = vpop.f32.mrb[0].mxu0
  %v710 = vadd.f32 0.0, %v709
  %v711 = vpop.f32.mrb[0].mxu0
  %712 = vdwg.mxu0
  %v713 = vpack.c.bf16 %v462, %v459
  %v714 = vpack.c.bf16 %v470, %v467
  %v715 = vpack.c.bf16 %v478, %v475
  %v716 = vpack.c.bf16 %v486, %v483
  %v717 = vpack.c.bf16 %v494, %v491
  %v718 = vpack.c.bf16 %v502, %v499
  %v719 = vpack.c.bf16 %v510, %v507
  %v720 = vpack.c.bf16 %v518, %v515
  %v721 = vpack.c.bf16 %v526, %v523
  %v722 = vpack.c.bf16 %v534, %v531
  %v723 = vpack.c.bf16 %v542, %v539
  %v724 = vpack.c.bf16 %v550, %v547
  %v725 = vpack.c.bf16 %v558, %v555
  %v726 = vpack.c.bf16 %v566, %v563
  %v727 = vpack.c.bf16 %v574, %v571
  %v728 = vpack.c.bf16 %v582, %v579
  %v729 = vpack.c.bf16 %v590, %v587
  %v730 = vpack.c.bf16 %v598, %v595
  %v731 = vpack.c.bf16 %v606, %v603
  %v732 = vpack.c.bf16 %v614, %v611
  %v733 = vpack.c.bf16 %v622, %v619
  %v734 = vpack.c.bf16 %v630, %v627
  %v735 = vpack.c.bf16 %v638, %v635
  %v736 = vpack.c.bf16 %v646, %v643
  %v737 = vpack.c.bf16 %v654, %v651
  %v738 = vpack.c.bf16 %v662, %v659
  %v739 = vpack.c.bf16 %v670, %v667
  %v740 = vpack.c.bf16 %v678, %v675
  %v741 = vpack.c.bf16 %v686, %v683
  %v742 = vpack.c.bf16 %v694, %v691
  %v743 = vpack.c.bf16 %v702, %v699
  %v744 = vpack.c.bf16 %v710, %v707
  %v777 = vunpack.c.l.b16 %v713
  %v778 = vunpack.c.h.b16 %v713
  %v779 = vunpack.c.l.b16 %v714
  %v780 = vunpack.c.h.b16 %v714
  %v781 = vunpack.c.l.b16 %v715
  %v782 = vunpack.c.h.b16 %v715
  %v783 = vunpack.c.l.b16 %v716
  %v784 = vunpack.c.h.b16 %v716
  %v785 = vunpack.c.l.b16 %v717
  %v786 = vunpack.c.h.b16 %v717
  %v787 = vunpack.c.l.b16 %v718
  %v788 = vunpack.c.h.b16 %v718
  %v789 = vunpack.c.l.b16 %v719
  %v790 = vunpack.c.h.b16 %v719
  %v791 = vunpack.c.l.b16 %v720
  %v792 = vunpack.c.h.b16 %v720
  %v793 = vunpack.c.l.b16 %v721
  %v794 = vunpack.c.h.b16 %v721
  %v795 = vunpack.c.l.b16 %v722
  %v796 = vunpack.c.h.b16 %v722
  %v797 = vunpack.c.l.b16 %v723
  %v798 = vunpack.c.h.b16 %v723
  %v799 = vunpack.c.l.b16 %v724
  %v800 = vunpack.c.h.b16 %v724
  %v801 = vunpack.c.l.b16 %v725
  %v802 = vunpack.c.h.b16 %v725
  %v803 = vunpack.c.l.b16 %v726
  %v804 = vunpack.c.h.b16 %v726
  %v805 = vunpack.c.l.b16 %v727
  %v806 = vunpack.c.h.b16 %v727
  %v807 = vunpack.c.l.b16 %v728
  %v808 = vunpack.c.h.b16 %v728
  %v809 = vunpack.c.l.b16 %v729
  %v810 = vunpack.c.h.b16 %v729
  %v811 = vunpack.c.l.b16 %v730
  %v812 = vunpack.c.h.b16 %v730
  %v813 = vunpack.c.l.b16 %v731
  %v814 = vunpack.c.h.b16 %v731
  %v815 = vunpack.c.l.b16 %v732
  %v816 = vunpack.c.h.b16 %v732
  %v817 = vunpack.c.l.b16 %v733
  %v818 = vunpack.c.h.b16 %v733
  %v819 = vunpack.c.l.b16 %v734
  %v820 = vunpack.c.h.b16 %v734
  %v821 = vunpack.c.l.b16 %v735
  %v822 = vunpack.c.h.b16 %v735
  %v823 = vunpack.c.l.b16 %v736
  %v824 = vunpack.c.h.b16 %v736
  %v825 = vunpack.c.l.b16 %v737
  %v826 = vunpack.c.h.b16 %v737
  %v827 = vunpack.c.l.b16 %v738
  %v828 = vunpack.c.h.b16 %v738
  %v829 = vunpack.c.l.b16 %v739
  %v830 = vunpack.c.h.b16 %v739
  %v831 = vunpack.c.l.b16 %v740
  %v832 = vunpack.c.h.b16 %v740
  %v833 = vunpack.c.l.b16 %v741
  %v834 = vunpack.c.h.b16 %v741
  %v835 = vunpack.c.l.b16 %v742
  %v836 = vunpack.c.h.b16 %v742
  %v837 = vunpack.c.l.b16 %v743
  %v838 = vunpack.c.h.b16 %v743
  %v839 = vunpack.c.l.b16 %v744
  %v840 = vunpack.c.h.b16 %v744
  %v841 = vpack.c.b16 %v777, %v777
  %v842 = vpack.c.b16 %v778, %v778
  %v843 = vpack.c.b16 %v779, %v779
  %v844 = vpack.c.b16 %v780, %v780
  %v845 = vpack.c.b16 %v781, %v781
  %v846 = vpack.c.b16 %v782, %v782
  %v847 = vpack.c.b16 %v783, %v783
  %v848 = vpack.c.b16 %v784, %v784
  %v849 = vpack.c.b16 %v785, %v785
  %v850 = vpack.c.b16 %v786, %v786
  %v851 = vpack.c.b16 %v787, %v787
  %v852 = vpack.c.b16 %v788, %v788
  %v853 = vpack.c.b16 %v789, %v789
  %v854 = vpack.c.b16 %v790, %v790
  %v855 = vpack.c.b16 %v791, %v791
  %v856 = vpack.c.b16 %v792, %v792
  %v857 = vpack.c.b16 %v793, %v793
  %v858 = vpack.c.b16 %v794, %v794
  %v859 = vpack.c.b16 %v795, %v795
  %v860 = vpack.c.b16 %v796, %v796
  %v861 = vpack.c.b16 %v797, %v797
  %v862 = vpack.c.b16 %v798, %v798
  %v863 = vpack.c.b16 %v799, %v799
  %v864 = vpack.c.b16 %v800, %v800
  %v865 = vpack.c.b16 %v801, %v801
  %v866 = vpack.c.b16 %v802, %v802
  %v867 = vpack.c.b16 %v803, %v803
  %v868 = vpack.c.b16 %v804, %v804
  %v869 = vpack.c.b16 %v805, %v805
  %v870 = vpack.c.b16 %v806, %v806
  %v871 = vpack.c.b16 %v807, %v807
  %v872 = vpack.c.b16 %v808, %v808
  %v873 = vpack.c.b16 %v809, %v809
  %v874 = vpack.c.b16 %v810, %v810
  %v875 = vpack.c.b16 %v811, %v811
  %v876 = vpack.c.b16 %v812, %v812
  %v877 = vpack.c.b16 %v813, %v813
  %v878 = vpack.c.b16 %v814, %v814
  %v879 = vpack.c.b16 %v815, %v815
  %v880 = vpack.c.b16 %v816, %v816
  %v881 = vpack.c.b16 %v817, %v817
  %v882 = vpack.c.b16 %v818, %v818
  %v883 = vpack.c.b16 %v819, %v819
  %v884 = vpack.c.b16 %v820, %v820
  %v885 = vpack.c.b16 %v821, %v821
  %v886 = vpack.c.b16 %v822, %v822
  %v887 = vpack.c.b16 %v823, %v823
  %v888 = vpack.c.b16 %v824, %v824
  %v889 = vpack.c.b16 %v825, %v825
  %v890 = vpack.c.b16 %v826, %v826
  %v891 = vpack.c.b16 %v827, %v827
  %v892 = vpack.c.b16 %v828, %v828
  %v893 = vpack.c.b16 %v829, %v829
  %v894 = vpack.c.b16 %v830, %v830
  %v895 = vpack.c.b16 %v831, %v831
  %v896 = vpack.c.b16 %v832, %v832
  %v897 = vpack.c.b16 %v833, %v833
  %v898 = vpack.c.b16 %v834, %v834
  %v899 = vpack.c.b16 %v835, %v835
  %v900 = vpack.c.b16 %v836, %v836
  %v901 = vpack.c.b16 %v837, %v837
  %v902 = vpack.c.b16 %v838, %v838
  %v903 = vpack.c.b16 %v839, %v839
  %v904 = vpack.c.b16 %v840, %v840
  %vm969 = vcmask 257024
  %970 = vst.msk [vmem:[%s4] sm:$0xf] %vm969, %v841
  %971 = vst.msk [vmem:[%s4 + $0x4] sm:$0xf] %vm969, %v842
  %972 = vst.msk [vmem:[%s4 + $0x8] sm:$0xf] %vm969, %v843
  %973 = vst.msk [vmem:[%s4 + $0xc] sm:$0xf] %vm969, %v844
  %974 = vst.msk [vmem:[%s4 + $0x10] sm:$0xf] %vm969, %v845
  %975 = vst.msk [vmem:[%s4 + $0x14] sm:$0xf] %vm969, %v846
  %976 = vst.msk [vmem:[%s4 + $0x18] sm:$0xf] %vm969, %v847
  %977 = vst.msk [vmem:[%s4 + $0x1c] sm:$0xf] %vm969, %v848
  %978 = vst.msk [vmem:[%s4 + $0x20] sm:$0xf] %vm969, %v849
  %979 = vst.msk [vmem:[%s4 + $0x24] sm:$0xf] %vm969, %v850
  %980 = vst.msk [vmem:[%s4 + $0x28] sm:$0xf] %vm969, %v851
  %981 = vst.msk [vmem:[%s4 + $0x2c] sm:$0xf] %vm969, %v852
  %982 = vst.msk [vmem:[%s4 + $0x30] sm:$0xf] %vm969, %v853
  %983 = vst.msk [vmem:[%s4 + $0x34] sm:$0xf] %vm969, %v854
  %984 = vst.msk [vmem:[%s4 + $0x38] sm:$0xf] %vm969, %v855
  %985 = vst.msk [vmem:[%s4 + $0x3c] sm:$0xf] %vm969, %v856
  %986 = vst.msk [vmem:[%s4 + $0x40] sm:$0xf] %vm969, %v857
  %987 = vst.msk [vmem:[%s4 + $0x44] sm:$0xf] %vm969, %v858
  %988 = vst.msk [vmem:[%s4 + $0x48] sm:$0xf] %vm969, %v859
  %989 = vst.msk [vmem:[%s4 + $0x4c] sm:$0xf] %vm969, %v860
  %990 = vst.msk [vmem:[%s4 + $0x50] sm:$0xf] %vm969, %v861
  %991 = vst.msk [vmem:[%s4 + $0x54] sm:$0xf] %vm969, %v862
  %992 = vst.msk [vmem:[%s4 + $0x58] sm:$0xf] %vm969, %v863
  %993 = vst.msk [vmem:[%s4 + $0x5c] sm:$0xf] %vm969, %v864
  %994 = vst.msk [vmem:[%s4 + $0x60] sm:$0xf] %vm969, %v865
  %995 = vst.msk [vmem:[%s4 + $0x64] sm:$0xf] %vm969, %v866
  %996 = vst.msk [vmem:[%s4 + $0x68] sm:$0xf] %vm969, %v867
  %997 = vst.msk [vmem:[%s4 + $0x6c] sm:$0xf] %vm969, %v868
  %998 = vst.msk [vmem:[%s4 + $0x70] sm:$0xf] %vm969, %v869
  %999 = vst.msk [vmem:[%s4 + $0x74] sm:$0xf] %vm969, %v870
  %1000 = vst.msk [vmem:[%s4 + $0x78] sm:$0xf] %vm969, %v871
  %1001 = vst.msk [vmem:[%s4 + $0x7c] sm:$0xf] %vm969, %v872
  %1002 = vst.msk [vmem:[%s4 + $0x80] sm:$0xf] %vm969, %v873
  %1003 = vst.msk [vmem:[%s4 + $0x84] sm:$0xf] %vm969, %v874
  %1004 = vst.msk [vmem:[%s4 + $0x88] sm:$0xf] %vm969, %v875
  %1005 = vst.msk [vmem:[%s4 + $0x8c] sm:$0xf] %vm969, %v876
  %1006 = vst.msk [vmem:[%s4 + $0x90] sm:$0xf] %vm969, %v877
  %1007 = vst.msk [vmem:[%s4 + $0x94] sm:$0xf] %vm969, %v878
  %1008 = vst.msk [vmem:[%s4 + $0x98] sm:$0xf] %vm969, %v879
  %1009 = vst.msk [vmem:[%s4 + $0x9c] sm:$0xf] %vm969, %v880
  %1010 = vst.msk [vmem:[%s4 + $0xa0] sm:$0xf] %vm969, %v881
  %1011 = vst.msk [vmem:[%s4 + $0xa4] sm:$0xf] %vm969, %v882
  %1012 = vst.msk [vmem:[%s4 + $0xa8] sm:$0xf] %vm969, %v883
  %1013 = vst.msk [vmem:[%s4 + $0xac] sm:$0xf] %vm969, %v884
  %1014 = vst.msk [vmem:[%s4 + $0xb0] sm:$0xf] %vm969, %v885
  %1015 = vst.msk [vmem:[%s4 + $0xb4] sm:$0xf] %vm969, %v886
  %1016 = vst.msk [vmem:[%s4 + $0xb8] sm:$0xf] %vm969, %v887
  %1017 = vst.msk [vmem:[%s4 + $0xbc] sm:$0xf] %vm969, %v888
  %1018 = vst.msk [vmem:[%s4 + $0xc0] sm:$0xf] %vm969, %v889
  %1019 = vst.msk [vmem:[%s4 + $0xc4] sm:$0xf] %vm969, %v890
  %1020 = vst.msk [vmem:[%s4 + $0xc8] sm:$0xf] %vm969, %v891
  %1021 = vst.msk [vmem:[%s4 + $0xcc] sm:$0xf] %vm969, %v892
  %1022 = vst.msk [vmem:[%s4 + $0xd0] sm:$0xf] %vm969, %v893
  %1023 = vst.msk [vmem:[%s4 + $0xd4] sm:$0xf] %vm969, %v894
  %1024 = vst.msk [vmem:[%s4 + $0xd8] sm:$0xf] %vm969, %v895
  %1025 = vst.msk [vmem:[%s4 + $0xdc] sm:$0xf] %vm969, %v896
  %1026 = vst.msk [vmem:[%s4 + $0xe0] sm:$0xf] %vm969, %v897
  %1027 = vst.msk [vmem:[%s4 + $0xe4] sm:$0xf] %vm969, %v898
  %1028 = vst.msk [vmem:[%s4 + $0xe8] sm:$0xf] %vm969, %v899
  %1029 = vst.msk [vmem:[%s4 + $0xec] sm:$0xf] %vm969, %v900
  %1030 = vst.msk [vmem:[%s4 + $0xf0] sm:$0xf] %vm969, %v901
  %1031 = vst.msk [vmem:[%s4 + $0xf4] sm:$0xf] %vm969, %v902
  %1032 = vst.msk [vmem:[%s4 + $0xf8] sm:$0xf] %vm969, %v903
  %1033 = vst.msk [vmem:[%s4 + $0xfc] sm:$0xf] %vm969, %v904
  %vm1034 = vcmask 261120
  %v1035 = vsel %vm1034, %v459, 0.0
  %v1036 = vsel %vm1034, %v462, 0.0
  %v1037 = vadd.f32 %v1035, %v1036
  %v1038 = vsel %vm1034, %v467, 0.0
  %v1039 = vadd.f32 %v1037, %v1038
  %v1040 = vsel %vm1034, %v470, 0.0
  %v1041 = vadd.f32 %v1039, %v1040
  %v1042 = vsel %vm1034, %v475, 0.0
  %v1043 = vadd.f32 %v1041, %v1042
  %v1044 = vsel %vm1034, %v478, 0.0
  %v1045 = vadd.f32 %v1043, %v1044
  %v1046 = vsel %vm1034, %v483, 0.0
  %v1047 = vadd.f32 %v1045, %v1046
  %v1048 = vsel %vm1034, %v486, 0.0
  %v1049 = vadd.f32 %v1047, %v1048
  %v1050 = vsel %vm1034, %v491, 0.0
  %v1051 = vadd.f32 %v1049, %v1050
  %v1052 = vsel %vm1034, %v494, 0.0
  %v1053 = vadd.f32 %v1051, %v1052
  %v1054 = vsel %vm1034, %v499, 0.0
  %v1055 = vadd.f32 %v1053, %v1054
  %v1056 = vsel %vm1034, %v502, 0.0
  %v1057 = vadd.f32 %v1055, %v1056
  %v1058 = vsel %vm1034, %v507, 0.0
  %v1059 = vadd.f32 %v1057, %v1058
  %v1060 = vsel %vm1034, %v510, 0.0
  %v1061 = vadd.f32 %v1059, %v1060
  %v1062 = vsel %vm1034, %v515, 0.0
  %v1063 = vadd.f32 %v1061, %v1062
  %v1064 = vsel %vm1034, %v518, 0.0
  %v1065 = vadd.f32 %v1063, %v1064
  %v1066 = vsel %vm1034, %v523, 0.0
  %v1067 = vadd.f32 %v1065, %v1066
  %v1068 = vsel %vm1034, %v526, 0.0
  %v1069 = vadd.f32 %v1067, %v1068
  %v1070 = vsel %vm1034, %v531, 0.0
  %v1071 = vadd.f32 %v1069, %v1070
  %v1072 = vsel %vm1034, %v534, 0.0
  %v1073 = vadd.f32 %v1071, %v1072
  %v1074 = vsel %vm1034, %v539, 0.0
  %v1075 = vadd.f32 %v1073, %v1074
  %v1076 = vsel %vm1034, %v542, 0.0
  %v1077 = vadd.f32 %v1075, %v1076
  %v1078 = vsel %vm1034, %v547, 0.0
  %v1079 = vadd.f32 %v1077, %v1078
  %v1080 = vsel %vm1034, %v550, 0.0
  %v1081 = vadd.f32 %v1079, %v1080
  %v1082 = vsel %vm1034, %v555, 0.0
  %v1083 = vadd.f32 %v1081, %v1082
  %v1084 = vsel %vm1034, %v558, 0.0
  %v1085 = vadd.f32 %v1083, %v1084
  %v1086 = vsel %vm1034, %v563, 0.0
  %v1087 = vadd.f32 %v1085, %v1086
  %v1088 = vsel %vm1034, %v566, 0.0
  %v1089 = vadd.f32 %v1087, %v1088
  %v1090 = vsel %vm1034, %v571, 0.0
  %v1091 = vadd.f32 %v1089, %v1090
  %v1092 = vsel %vm1034, %v574, 0.0
  %v1093 = vadd.f32 %v1091, %v1092
  %v1094 = vsel %vm1034, %v579, 0.0
  %v1095 = vadd.f32 %v1093, %v1094
  %v1096 = vsel %vm1034, %v582, 0.0
  %v1097 = vadd.f32 %v1095, %v1096
  %v1098 = vsel %vm1034, %v587, 0.0
  %v1099 = vadd.f32 %v1097, %v1098
  %v1100 = vsel %vm1034, %v590, 0.0
  %v1101 = vadd.f32 %v1099, %v1100
  %v1102 = vsel %vm1034, %v595, 0.0
  %v1103 = vadd.f32 %v1101, %v1102
  %v1104 = vsel %vm1034, %v598, 0.0
  %v1105 = vadd.f32 %v1103, %v1104
  %v1106 = vsel %vm1034, %v603, 0.0
  %v1107 = vadd.f32 %v1105, %v1106
  %v1108 = vsel %vm1034, %v606, 0.0
  %v1109 = vadd.f32 %v1107, %v1108
  %v1110 = vsel %vm1034, %v611, 0.0
  %v1111 = vadd.f32 %v1109, %v1110
  %v1112 = vsel %vm1034, %v614, 0.0
  %v1113 = vadd.f32 %v1111, %v1112
  %v1114 = vsel %vm1034, %v619, 0.0
  %v1115 = vadd.f32 %v1113, %v1114
  %v1116 = vsel %vm1034, %v622, 0.0
  %v1117 = vadd.f32 %v1115, %v1116
  %v1118 = vsel %vm1034, %v627, 0.0
  %v1119 = vadd.f32 %v1117, %v1118
  %v1120 = vsel %vm1034, %v630, 0.0
  %v1121 = vadd.f32 %v1119, %v1120
  %v1122 = vsel %vm1034, %v635, 0.0
  %v1123 = vadd.f32 %v1121, %v1122
  %v1124 = vsel %vm1034, %v638, 0.0
  %v1125 = vadd.f32 %v1123, %v1124
  %v1126 = vsel %vm1034, %v643, 0.0
  %v1127 = vadd.f32 %v1125, %v1126
  %v1128 = vsel %vm1034, %v646, 0.0
  %v1129 = vadd.f32 %v1127, %v1128
  %v1130 = vsel %vm1034, %v651, 0.0
  %v1131 = vadd.f32 %v1129, %v1130
  %v1132 = vsel %vm1034, %v654, 0.0
  %v1133 = vadd.f32 %v1131, %v1132
  %v1134 = vsel %vm1034, %v659, 0.0
  %v1135 = vadd.f32 %v1133, %v1134
  %v1136 = vsel %vm1034, %v662, 0.0
  %v1137 = vadd.f32 %v1135, %v1136
  %v1138 = vsel %vm1034, %v667, 0.0
  %v1139 = vadd.f32 %v1137, %v1138
  %v1140 = vsel %vm1034, %v670, 0.0
  %v1141 = vadd.f32 %v1139, %v1140
  %v1142 = vsel %vm1034, %v675, 0.0
  %v1143 = vadd.f32 %v1141, %v1142
  %v1144 = vsel %vm1034, %v678, 0.0
  %v1145 = vadd.f32 %v1143, %v1144
  %v1146 = vsel %vm1034, %v683, 0.0
  %v1147 = vadd.f32 %v1145, %v1146
  %v1148 = vsel %vm1034, %v686, 0.0
  %v1149 = vadd.f32 %v1147, %v1148
  %v1150 = vsel %vm1034, %v691, 0.0
  %v1151 = vadd.f32 %v1149, %v1150
  %v1152 = vsel %vm1034, %v694, 0.0
  %v1153 = vadd.f32 %v1151, %v1152
  %v1154 = vsel %vm1034, %v699, 0.0
  %v1155 = vadd.f32 %v1153, %v1154
  %v1156 = vsel %vm1034, %v702, 0.0
  %v1157 = vadd.f32 %v1155, %v1156
  %v1158 = vsel %vm1034, %v707, 0.0
  %v1159 = vadd.f32 %v1157, %v1158
  %v1160 = vsel %vm1034, %v710, 0.0
  %v1161 = vadd.f32 %v1159, %v1160
  %v1162 = vrot.slane %v1161, 4
  %v1163 = vadd.f32 %v1161, %v1162
  %v1164 = vrot.slane %v1163, 2
  %v1165 = vadd.f32 %v1163, %v1164
  %v1166 = vrot.slane %v1165, 1
  %v1167 = vadd.f32 %v1165, %v1166
  %vm1168 = vcmask 253952
  %1169 = vst.msk [vmem:[%s5] sm:$0x1] %vm1168, %v1167
  %v1170 = vmul.f32 %v459, %v459
  %v1171 = vmul.f32 %v462, %v462
  %v1172 = vmul.f32 %v467, %v467
  %v1173 = vmul.f32 %v470, %v470
  %v1174 = vmul.f32 %v475, %v475
  %v1175 = vmul.f32 %v478, %v478
  %v1176 = vmul.f32 %v483, %v483
  %v1177 = vmul.f32 %v486, %v486
  %v1178 = vmul.f32 %v491, %v491
  %v1179 = vmul.f32 %v494, %v494
  %v1180 = vmul.f32 %v499, %v499
  %v1181 = vmul.f32 %v502, %v502
  %v1182 = vmul.f32 %v507, %v507
  %v1183 = vmul.f32 %v510, %v510
  %v1184 = vmul.f32 %v515, %v515
  %v1185 = vmul.f32 %v518, %v518
  %v1186 = vmul.f32 %v523, %v523
  %v1187 = vmul.f32 %v526, %v526
  %v1188 = vmul.f32 %v531, %v531
  %v1189 = vmul.f32 %v534, %v534
  %v1190 = vmul.f32 %v539, %v539
  %v1191 = vmul.f32 %v542, %v542
  %v1192 = vmul.f32 %v547, %v547
  %v1193 = vmul.f32 %v550, %v550
  %v1194 = vmul.f32 %v555, %v555
  %v1195 = vmul.f32 %v558, %v558
  %v1196 = vmul.f32 %v563, %v563
  %v1197 = vmul.f32 %v566, %v566
  %v1198 = vmul.f32 %v571, %v571
  %v1199 = vmul.f32 %v574, %v574
  %v1200 = vmul.f32 %v579, %v579
  %v1201 = vmul.f32 %v582, %v582
  %v1202 = vmul.f32 %v587, %v587
  %v1203 = vmul.f32 %v590, %v590
  %v1204 = vmul.f32 %v595, %v595
  %v1205 = vmul.f32 %v598, %v598
  %v1206 = vmul.f32 %v603, %v603
  %v1207 = vmul.f32 %v606, %v606
  %v1208 = vmul.f32 %v611, %v611
  %v1209 = vmul.f32 %v614, %v614
  %v1210 = vmul.f32 %v619, %v619
  %v1211 = vmul.f32 %v622, %v622
  %v1212 = vmul.f32 %v627, %v627
  %v1213 = vmul.f32 %v630, %v630
  %v1214 = vmul.f32 %v635, %v635
  %v1215 = vmul.f32 %v638, %v638
  %v1216 = vmul.f32 %v643, %v643
  %v1217 = vmul.f32 %v646, %v646
  %v1218 = vmul.f32 %v651, %v651
  %v1219 = vmul.f32 %v654, %v654
  %v1220 = vmul.f32 %v659, %v659
  %v1221 = vmul.f32 %v662, %v662
  %v1222 = vmul.f32 %v667, %v667
  %v1223 = vmul.f32 %v670, %v670
  %v1224 = vmul.f32 %v675, %v675
  %v1225 = vmul.f32 %v678, %v678
  %v1226 = vmul.f32 %v683, %v683
  %v1227 = vmul.f32 %v686, %v686
  %v1228 = vmul.f32 %v691, %v691
  %v1229 = vmul.f32 %v694, %v694
  %v1230 = vmul.f32 %v699, %v699
  %v1231 = vmul.f32 %v702, %v702
  %v1232 = vmul.f32 %v707, %v707
  %v1233 = vmul.f32 %v710, %v710
  %v1234 = vsel %vm1034, %v1170, 0.0
  %v1235 = vsel %vm1034, %v1171, 0.0
  %v1236 = vadd.f32 %v1234, %v1235
  %v1237 = vsel %vm1034, %v1172, 0.0
  %v1238 = vadd.f32 %v1236, %v1237
  %v1239 = vsel %vm1034, %v1173, 0.0
  %v1240 = vadd.f32 %v1238, %v1239
  %v1241 = vsel %vm1034, %v1174, 0.0
  %v1242 = vadd.f32 %v1240, %v1241
  %v1243 = vsel %vm1034, %v1175, 0.0
  %v1244 = vadd.f32 %v1242, %v1243
  %v1245 = vsel %vm1034, %v1176, 0.0
  %v1246 = vadd.f32 %v1244, %v1245
  %v1247 = vsel %vm1034, %v1177, 0.0
  %v1248 = vadd.f32 %v1246, %v1247
  %v1249 = vsel %vm1034, %v1178, 0.0
  %v1250 = vadd.f32 %v1248, %v1249
  %v1251 = vsel %vm1034, %v1179, 0.0
  %v1252 = vadd.f32 %v1250, %v1251
  %v1253 = vsel %vm1034, %v1180, 0.0
  %v1254 = vadd.f32 %v1252, %v1253
  %v1255 = vsel %vm1034, %v1181, 0.0
  %v1256 = vadd.f32 %v1254, %v1255
  %v1257 = vsel %vm1034, %v1182, 0.0
  %v1258 = vadd.f32 %v1256, %v1257
  %v1259 = vsel %vm1034, %v1183, 0.0
  %v1260 = vadd.f32 %v1258, %v1259
  %v1261 = vsel %vm1034, %v1184, 0.0
  %v1262 = vadd.f32 %v1260, %v1261
  %v1263 = vsel %vm1034, %v1185, 0.0
  %v1264 = vadd.f32 %v1262, %v1263
  %v1265 = vsel %vm1034, %v1186, 0.0
  %v1266 = vadd.f32 %v1264, %v1265
  %v1267 = vsel %vm1034, %v1187, 0.0
  %v1268 = vadd.f32 %v1266, %v1267
  %v1269 = vsel %vm1034, %v1188, 0.0
  %v1270 = vadd.f32 %v1268, %v1269
  %v1271 = vsel %vm1034, %v1189, 0.0
  %v1272 = vadd.f32 %v1270, %v1271
  %v1273 = vsel %vm1034, %v1190, 0.0
  %v1274 = vadd.f32 %v1272, %v1273
  %v1275 = vsel %vm1034, %v1191, 0.0
  %v1276 = vadd.f32 %v1274, %v1275
  %v1277 = vsel %vm1034, %v1192, 0.0
  %v1278 = vadd.f32 %v1276, %v1277
  %v1279 = vsel %vm1034, %v1193, 0.0
  %v1280 = vadd.f32 %v1278, %v1279
  %v1281 = vsel %vm1034, %v1194, 0.0
  %v1282 = vadd.f32 %v1280, %v1281
  %v1283 = vsel %vm1034, %v1195, 0.0
  %v1284 = vadd.f32 %v1282, %v1283
  %v1285 = vsel %vm1034, %v1196, 0.0
  %v1286 = vadd.f32 %v1284, %v1285
  %v1287 = vsel %vm1034, %v1197, 0.0
  %v1288 = vadd.f32 %v1286, %v1287
  %v1289 = vsel %vm1034, %v1198, 0.0
  %v1290 = vadd.f32 %v1288, %v1289
  %v1291 = vsel %vm1034, %v1199, 0.0
  %v1292 = vadd.f32 %v1290, %v1291
  %v1293 = vsel %vm1034, %v1200, 0.0
  %v1294 = vadd.f32 %v1292, %v1293
  %v1295 = vsel %vm1034, %v1201, 0.0
  %v1296 = vadd.f32 %v1294, %v1295
  %v1297 = vsel %vm1034, %v1202, 0.0
  %v1298 = vadd.f32 %v1296, %v1297
  %v1299 = vsel %vm1034, %v1203, 0.0
  %v1300 = vadd.f32 %v1298, %v1299
  %v1301 = vsel %vm1034, %v1204, 0.0
  %v1302 = vadd.f32 %v1300, %v1301
  %v1303 = vsel %vm1034, %v1205, 0.0
  %v1304 = vadd.f32 %v1302, %v1303
  %v1305 = vsel %vm1034, %v1206, 0.0
  %v1306 = vadd.f32 %v1304, %v1305
  %v1307 = vsel %vm1034, %v1207, 0.0
  %v1308 = vadd.f32 %v1306, %v1307
  %v1309 = vsel %vm1034, %v1208, 0.0
  %v1310 = vadd.f32 %v1308, %v1309
  %v1311 = vsel %vm1034, %v1209, 0.0
  %v1312 = vadd.f32 %v1310, %v1311
  %v1313 = vsel %vm1034, %v1210, 0.0
  %v1314 = vadd.f32 %v1312, %v1313
  %v1315 = vsel %vm1034, %v1211, 0.0
  %v1316 = vadd.f32 %v1314, %v1315
  %v1317 = vsel %vm1034, %v1212, 0.0
  %v1318 = vadd.f32 %v1316, %v1317
  %v1319 = vsel %vm1034, %v1213, 0.0
  %v1320 = vadd.f32 %v1318, %v1319
  %v1321 = vsel %vm1034, %v1214, 0.0
  %v1322 = vadd.f32 %v1320, %v1321
  %v1323 = vsel %vm1034, %v1215, 0.0
  %v1324 = vadd.f32 %v1322, %v1323
  %v1325 = vsel %vm1034, %v1216, 0.0
  %v1326 = vadd.f32 %v1324, %v1325
  %v1327 = vsel %vm1034, %v1217, 0.0
  %v1328 = vadd.f32 %v1326, %v1327
  %v1329 = vsel %vm1034, %v1218, 0.0
  %v1330 = vadd.f32 %v1328, %v1329
  %v1331 = vsel %vm1034, %v1219, 0.0
  %v1332 = vadd.f32 %v1330, %v1331
  %v1333 = vsel %vm1034, %v1220, 0.0
  %v1334 = vadd.f32 %v1332, %v1333
  %v1335 = vsel %vm1034, %v1221, 0.0
  %v1336 = vadd.f32 %v1334, %v1335
  %v1337 = vsel %vm1034, %v1222, 0.0
  %v1338 = vadd.f32 %v1336, %v1337
  %v1339 = vsel %vm1034, %v1223, 0.0
  %v1340 = vadd.f32 %v1338, %v1339
  %v1341 = vsel %vm1034, %v1224, 0.0
  %v1342 = vadd.f32 %v1340, %v1341
  %v1343 = vsel %vm1034, %v1225, 0.0
  %v1344 = vadd.f32 %v1342, %v1343
  %v1345 = vsel %vm1034, %v1226, 0.0
  %v1346 = vadd.f32 %v1344, %v1345
  %v1347 = vsel %vm1034, %v1227, 0.0
  %v1348 = vadd.f32 %v1346, %v1347
  %v1349 = vsel %vm1034, %v1228, 0.0
  %v1350 = vadd.f32 %v1348, %v1349
  %v1351 = vsel %vm1034, %v1229, 0.0
  %v1352 = vadd.f32 %v1350, %v1351
  %v1353 = vsel %vm1034, %v1230, 0.0
  %v1354 = vadd.f32 %v1352, %v1353
  %v1355 = vsel %vm1034, %v1231, 0.0
  %v1356 = vadd.f32 %v1354, %v1355
  %v1357 = vsel %vm1034, %v1232, 0.0
  %v1358 = vadd.f32 %v1356, %v1357
  %v1359 = vsel %vm1034, %v1233, 0.0
  %v1360 = vadd.f32 %v1358, %v1359
  %v1361 = vrot.slane %v1360, 4
  %v1362 = vadd.f32 %v1360, %v1361
  %v1363 = vrot.slane %v1362, 2
  %v1364 = vadd.f32 %v1362, %v1363
  %v1365 = vrot.slane %v1364, 1
  %v1366 = vadd.f32 %v1364, %v1365
  %1367 = vst.msk [vmem:[%s5 + $0x1] sm:$0x1] %vm1168, %v1366
  // Predicated region
  $region18: #{dense_layer_mask_forward.4} parent=0 // pred_check
    _
  $region19: #{dense_layer_mask_forward.4} parent=0 // pred_check_branch
    %1369 = sbr.rel (0) target = $region21
  $region20: #{dense_layer_mask_forward.4} parent=0 // pred_region
    _
  $region21: #{dense_layer_mask_forward.4} parent=0 // pred_fallthru
    _
  // Predicated region
  $region22: #{dense_layer_mask_forward.4} parent=0 // pred_check
    _
  $region23: #{dense_layer_mask_forward.4} parent=0 // pred_check_branch
    %1371 = sbr.rel (0) target = $region25
  $region24: #{dense_layer_mask_forward.4} parent=0 // pred_region
    _
  $region25: #{dense_layer_mask_forward.4} parent=0 // pred_fallthru
    _
  // Predicated region
  $region26: #{dense_layer_mask_forward.4} parent=0 // pred_check
    _
  $region27: #{dense_layer_mask_forward.4} parent=0 // pred_check_branch
    %1373 = sbr.rel (0) target = $region29
  $region28: #{dense_layer_mask_forward.4} parent=0 // pred_region
    _
  $region29: #{dense_layer_mask_forward.4} parent=0 // pred_fallthru
    _
  // Predicated region
  $region30: #{dense_layer_mask_forward.4} parent=0 // pred_check
    _
  $region31: #{dense_layer_mask_forward.4} parent=0 // pred_check_branch
    %1375 = sbr.rel (0) target = $region33
  $region32: #{dense_layer_mask_forward.4} parent=0 // pred_region
    _
  $region33: #{dense_layer_mask_forward.4} parent=0 // pred_fallthru
    _

// kernel: dense_layer_mask_forward.5
$region0: #{dense_layer_mask_forward.5}
  #allocation0 [shape = 'u32[]', space=smem, size = 0x4, offset = 0x4, fixed_abs, tag = 'smem constant byte address 0x4 - core index']
  #allocation1 [shape = 'u32[144,128]{1,0:T(1,128)}', space=vmem, size = 0x12000, scoped, tag = 'internal scratch']
  #allocation2 [shape = 'bf16[17,18,32]{2,1,0:T(8,128)(2,1)}', space=vmem, size = 0x19800, scoped, tag = 'scratch operand']
  #allocation3 [shape = 'bf16[1,16,32]{2,1,0:T(16,128)(2,1)}', space=vmem, size = 0x1000, scoped, tag = 'scratch operand']
  %s0 = inlined_call_operand.vmem [shape: bf16[2,16,16,32], index: 0, kind: input, shape index: {}]
  %s1 = inlined_call_operand.vmem [shape: f32[1,32], index: 1, kind: input, shape index: {}]
  %s2 = inlined_call_operand.vmem [shape: f32[1,32], index: 2, kind: input, shape index: {}]
  %s3 = inlined_call_operand.vmem [shape: bf16[6,32,8], index: 3, kind: input, shape index: {}]
  %s4 = inlined_call_operand.vmem [shape: f32[2,1,8,256], index: 4, kind: output, shape index: {}]
  %s5 = sld [smem:[#allocation0]]
  $region53: #{dense_layer_mask_forward.5} parent=0
    _
  %s7 = ssub.s32 1, %s5
  %s8 = scalar_select 0, %s7, %s5
  loop: start=0, step=1, limit=4
  $region2: #{dense_layer_mask_forward.5} parent=0 // loop_pre_header
    _
  $region3: #{dense_layer_mask_forward.5} parent=0 // loop_header
    %s10 = sphi 0, %s14
    %p11 = scmp.ge.s32.totalorder %s10, 4
    %s17 = sphi 0, %s29
    %s18 = sphi 0, %s25
    %s19 = sphi 0, %s17
    %s20 = sphi 0, %s18
    %s21 = sphi 0, %s19
    %s22 = sphi 0, %s20
    %s34 = sphi 0, %s36
    %s37 = sphi 0, %s34
    %s38 = sphi 0, %s37
    %s54 = sphi 0, %s38
    %s58 = sphi 0, %s58
    %s60 = sphi 0, %s58
    %s61 = sphi 0, %s60
    %s75 = sphi 0, %s61
    %s79 = sphi 0, %s79
    %s81 = sphi 0, %s79
    %s82 = sphi 0, %s81
    %s96 = sphi 0, %s82
    %s100 = sphi 0, %s100
    %s102 = sphi 0, %s100
    %s103 = sphi 0, %s102
    %s117 = sphi 0, %s103
    %s125 = sphi 0, %s127
    %s128 = sphi 0, %s125
    %s129 = sphi 0, %s128
    %s145 = sphi 0, %s129
  $region4: #{dense_layer_mask_forward.5} parent=0 // loop_header_branch
    %13 = sbr.rel (%p11) target = $region8
  $region5: #{dense_layer_mask_forward.5} parent=0 // loop_body
    %s15 = ssub.s32 %s10, 1
    %s16 = ssub.s32 %s10, 2
    %s23 = sadd.s32 1, %s18
    %p24 = scmp.ge.s32.totalorder %s23, 1
    %s25 = scalar_select %p24, 0, %s23
    %s26 = sadd.s32 1, %s17
    %s27 = scalar_select %p24, %s26, %s17
    %p28 = scmp.ge.s32.totalorder %s27, 2
    %s29 = scalar_select %p28, 0, %s27
    %s30 = ssub.s32 %s17, %s29
    %s31 = ssub.s32 %s18, %s25
    %s32 = sor.u32 %s30, %s31
    %p33 = scmp.eq.s32.totalorder %s32, 0
    %s35 = sadd.s32 %s34, 1
    %s36 = scalar_select %p33, %s34, %s35
    %p39 = pneg %p33
    %p40 = scmp.eq.s32.totalorder %s10, 1
    %p41 = por %p39, %p40
    %p42 = scmp.ne.s32.totalorder %s34, %s37
    %p43 = scmp.eq.s32.totalorder %s10, 0
    %p44 = por %p42, %p43
    %p45 = scmp.ne.s32.totalorder %s34, %s37
    %p46 = scmp.eq.s32.totalorder %s15, 1
    %p47 = por %p45, %p46
    %p48 = scmp.ne.s32.totalorder %s37, %s38
    %p49 = scmp.eq.s32.totalorder %s15, 0
    %p50 = por %p48, %p49
    %p51 = scmp.ne.s32.totalorder %s37, %s38
    %p52 = scmp.eq.s32.totalorder %s16, 1
    %p53 = por %p51, %p52
    %p55 = scmp.ne.s32.totalorder %s38, %s54
    %p56 = scmp.eq.s32.totalorder %s16, 0
    %p57 = por %p55, %p56
    %s59 = sadd.s32 %s58, 1
    %p62 = scmp.eq.s32.totalorder %s10, 1
    %p63 = scmp.ne.s32.totalorder %s58, %s60
    %p64 = scmp.eq.s32.totalorder %s10, 0
    %p65 = por %p63, %p64
    %p66 = scmp.ne.s32.totalorder %s58, %s60
    %p67 = scmp.eq.s32.totalorder %s15, 1
    %p68 = por %p66, %p67
    %p69 = scmp.ne.s32.totalorder %s60, %s61
    %p70 = scmp.eq.s32.totalorder %s15, 0
    %p71 = por %p69, %p70
    %p72 = scmp.ne.s32.totalorder %s60, %s61
    %p73 = scmp.eq.s32.totalorder %s16, 1
    %p74 = por %p72, %p73
    %p76 = scmp.ne.s32.totalorder %s61, %s75
    %p77 = scmp.eq.s32.totalorder %s16, 0
    %p78 = por %p76, %p77
    %s80 = sadd.s32 %s79, 1
    %p83 = scmp.eq.s32.totalorder %s10, 1
    %p84 = scmp.ne.s32.totalorder %s79, %s81
    %p85 = scmp.eq.s32.totalorder %s10, 0
    %p86 = por %p84, %p85
    %p87 = scmp.ne.s32.totalorder %s79, %s81
    %p88 = scmp.eq.s32.totalorder %s15, 1
    %p89 = por %p87, %p88
    %p90 = scmp.ne.s32.totalorder %s81, %s82
    %p91 = scmp.eq.s32.totalorder %s15, 0
    %p92 = por %p90, %p91
    %p93 = scmp.ne.s32.totalorder %s81, %s82
    %p94 = scmp.eq.s32.totalorder %s16, 1
    %p95 = por %p93, %p94
    %p97 = scmp.ne.s32.totalorder %s82, %s96
    %p98 = scmp.eq.s32.totalorder %s16, 0
    %p99 = por %p97, %p98
    %s101 = sadd.s32 %s100, 1
    %p104 = scmp.eq.s32.totalorder %s10, 1
    %p105 = scmp.ne.s32.totalorder %s100, %s102
    %p106 = scmp.eq.s32.totalorder %s10, 0
    %p107 = por %p105, %p106
    %p108 = scmp.ne.s32.totalorder %s100, %s102
    %p109 = scmp.eq.s32.totalorder %s15, 1
    %p110 = por %p108, %p109
    %p111 = scmp.ne.s32.totalorder %s102, %s103
    %p112 = scmp.eq.s32.totalorder %s15, 0
    %p113 = por %p111, %p112
    %p114 = scmp.ne.s32.totalorder %s102, %s103
    %p115 = scmp.eq.s32.totalorder %s16, 1
    %p116 = por %p114, %p115
    %p118 = scmp.ne.s32.totalorder %s103, %s117
    %p119 = scmp.eq.s32.totalorder %s16, 0
    %p120 = por %p118, %p119
    %s121 = ssub.s32 %s17, %s29
    %s122 = ssub.s32 %s18, %s25
    %s123 = sor.u32 %s121, %s122
    %p124 = scmp.eq.s32.totalorder %s123, 0
    %s126 = sadd.s32 %s125, 1
    %s127 = scalar_select %p124, %s125, %s126
    %p130 = pneg %p124
    %p131 = scmp.eq.s32.totalorder %s10, 1
    %p132 = por %p130, %p131
    %p133 = scmp.ne.s32.totalorder %s125, %s128
    %p134 = scmp.eq.s32.totalorder %s10, 0
    %p135 = por %p133, %p134
    %p136 = scmp.ne.s32.totalorder %s125, %s128
    %p137 = scmp.eq.s32.totalorder %s15, 1
    %p138 = por %p136, %p137
    %p139 = scmp.ne.s32.totalorder %s128, %s129
    %p140 = scmp.eq.s32.totalorder %s15, 0
    %p141 = por %p139, %p140
    %p142 = scmp.ne.s32.totalorder %s128, %s129
    %p143 = scmp.eq.s32.totalorder %s16, 1
    %p144 = por %p142, %p143
    %p146 = scmp.ne.s32.totalorder %s129, %s145
    %p147 = scmp.eq.s32.totalorder %s16, 0
    %p148 = por %p146, %p147
    %p149 = scmp.le.s32.totalorder 1, %s10
    %p150 = scmp.lt.s32.totalorder %s10, 3
    %p151 = pnand %p149, %p150
    %p152 = pneg %p151
    // Predicated region
    $region9: #{dense_layer_mask_forward.5} parent=5 // pred_check
      _
    $region10: #{dense_layer_mask_forward.5} parent=5 // pred_check_branch
      %154 = sbr.rel (%p151) target = $region12
    $region11: #{dense_layer_mask_forward.5} parent=5 // pred_region
      %s155 = ssub.s32 %s10, 1
      // Predicated region
      $region13: #{dense_layer_mask_forward.5} parent=11 // pred_check
        %p156 = pneg %p71
      $region14: #{dense_layer_mask_forward.5} parent=11 // pred_check_branch
        %158 = sbr.rel (%p156) target = $region16
      $region15: #{dense_layer_mask_forward.5} parent=11 // pred_region
        _
      $region16: #{dense_layer_mask_forward.5} parent=11 // pred_fallthru
        _
      // Predicated region
      $region17: #{dense_layer_mask_forward.5} parent=11 // pred_check
        %p159 = pneg %p92
      $region18: #{dense_layer_mask_forward.5} parent=11 // pred_check_branch
        %161 = sbr.rel (%p159) target = $region20
      $region19: #{dense_layer_mask_forward.5} parent=11 // pred_region
        _
      $region20: #{dense_layer_mask_forward.5} parent=11 // pred_fallthru
        _
      // Predicated region
      $region21: #{dense_layer_mask_forward.5} parent=11 // pred_check
        %p162 = pneg %p113
      $region22: #{dense_layer_mask_forward.5} parent=11 // pred_check_branch
        %164 = sbr.rel (%p162) target = $region24
      $region23: #{dense_layer_mask_forward.5} parent=11 // pred_region
        _
      $region24: #{dense_layer_mask_forward.5} parent=11 // pred_fallthru
        _
    $region12: #{dense_layer_mask_forward.5} parent=5 // pred_fallthru
      _
    %p165 = scmp.lt.s32.totalorder %s10, 2
    // Predicated region
    $region25: #{dense_layer_mask_forward.5} parent=5 // pred_check
      %p166 = pneg %p165
    $region26: #{dense_layer_mask_forward.5} parent=5 // pred_check_branch
      %168 = sbr.rel (%p166) target = $region28
    $region27: #{dense_layer_mask_forward.5} parent=5 // pred_region
      // Predicated region
      $region29: #{dense_layer_mask_forward.5} parent=27 // pred_check
        %p169 = pneg %p44
      $region30: #{dense_layer_mask_forward.5} parent=27 // pred_check_branch
        %171 = sbr.rel (%p169) target = $region32
      $region31: #{dense_layer_mask_forward.5} parent=27 // pred_region
        %s172 = smul.u32 16, %s18
        %p173 = scmp.lt.s32.totalorder %s17, 1
        %s174 = scalar_select %p173, %s17, 1
        %p175 = scmp.lt.s32.totalorder %s172, 15
        %s176 = scalar_select %p175, %s172, 15
        %s177 = smul.addr %s176, 2
        %s178 = smul.addr %s174, 32
        %s179 = sadd.s32 %s177, %s178
        %s180 = smul.addr %s179, 4
        %s181 = scalar_lea.vmem %s0, %s180
        %s182 = smul.u32 16, %s18
      $region32: #{dense_layer_mask_forward.5} parent=27 // pred_fallthru
        _
    $region28: #{dense_layer_mask_forward.5} parent=5 // pred_fallthru
      _
    %p183 = scmp.le.s32.totalorder 1, %s10
    %p184 = scmp.lt.s32.totalorder %s10, 3
    %p185 = pnand %p183, %p184
    %p186 = pneg %p185
    // Predicated region
    $region33: #{dense_layer_mask_forward.5} parent=5 // pred_check
      _
    $region34: #{dense_layer_mask_forward.5} parent=5 // pred_check_branch
      %188 = sbr.rel (%p185) target = $region36
    $region35: #{dense_layer_mask_forward.5} parent=5 // pred_region
      %s189 = ssub.s32 %s10, 1
      %s190 = smul.u32 16, %s20
      %p191 = scmp.lt.s32.totalorder %s19, 1
      %s192 = scalar_select %p191, %s19, 1
      %p193 = scmp.lt.s32.totalorder %s190, 15
      %s194 = scalar_select %p193, %s190, 15
      %s195 = smul.addr %s194, 2
      %s196 = smul.addr %s192, 32
      %s197 = sadd.s32 %s195, %s196
      %s198 = smul.addr %s197, 4
      %s199 = scalar_lea.vmem %s0, %s198
      %p200 = pneg %p50
      %p201 = pneg %p47
      %p202 = pneg %p71
      %p203 = pneg %p68
      %p204 = pneg %p92
      %p205 = pneg %p89
      %p206 = pneg %p113
      %p207 = pneg %p110
      %p208 = pneg %p141
      %p209 = pneg %p138
      %p210 = scmp.lt.s32.totalorder %s19, 1
      %s211 = scalar_select %p210, %s19, 1
      %p212 = scmp.lt.s32.totalorder %s20, 0
      %s213 = scalar_select %p212, %s20, 0
      %s214 = smul.addr %s213, 2
      %s215 = smul.addr %s211, 2
      %s216 = sadd.s32 %s214, %s215
      %s217 = smul.addr %s216, 8
      %s218 = scalar_lea.vmem %s4, %s217
      %s219 = smul.u32 16, %s20
      %p220 = scmp.lt.s32.totalorder %s19, 1
      %s221 = scalar_select %p220, %s19, 1
      %p222 = scmp.lt.s32.totalorder %s219, 15
      %s223 = scalar_select %p222, %s219, 15
      %s224 = smul.addr %s223, 2
      %s225 = smul.addr %s221, 32
      %s226 = sadd.s32 %s224, %s225
      %s227 = smul.addr %s226, 4
      %s228 = scalar_lea.vmem %s0, %s227
      %s229 = smul.u32 16, %s20
      %p230 = scmp.lt.s32.totalorder %s19, 1
      %s231 = scalar_select %p230, %s19, 1
      %p232 = scmp.lt.s32.totalorder %s20, 0
      %s233 = scalar_select %p232, %s20, 0
      %s234 = smul.addr %s233, 2
      %s235 = smul.addr %s231, 2
      %s236 = sadd.s32 %s234, %s235
      %s237 = smul.addr %s236, 8
      %s238 = scalar_lea.vmem %s4, %s237
      %v240 = vld [vmem:[%s228] sm:$0xf]
      %v241 = vld [vmem:[%s228 + $0x4] sm:$0xf]
      %v242 = vld [vmem:[%s228 + $0x8] sm:$0xf]
      %v243 = vld [vmem:[%s228 + $0xc] sm:$0xf]
      %v244 = vld [vmem:[%s228 + $0x10] sm:$0xf]
      %v245 = vld [vmem:[%s228 + $0x14] sm:$0xf]
      %v246 = vld [vmem:[%s228 + $0x18] sm:$0xf]
      %v247 = vld [vmem:[%s228 + $0x1c] sm:$0xf]
      %v248 = vld [vmem:[%s228 + $0x20] sm:$0xf]
      %v249 = vld [vmem:[%s228 + $0x24] sm:$0xf]
      %v250 = vld [vmem:[%s228 + $0x28] sm:$0xf]
      %v251 = vld [vmem:[%s228 + $0x2c] sm:$0xf]
      %v252 = vld [vmem:[%s228 + $0x30] sm:$0xf]
      %v253 = vld [vmem:[%s228 + $0x34] sm:$0xf]
      %v254 = vld [vmem:[%s228 + $0x38] sm:$0xf]
      %v255 = vld [vmem:[%s228 + $0x3c] sm:$0xf]
      %v256 = vld [vmem:[%s228 + $0x40] sm:$0xf]
      %v257 = vld [vmem:[%s228 + $0x44] sm:$0xf]
      %v258 = vld [vmem:[%s228 + $0x48] sm:$0xf]
      %v259 = vld [vmem:[%s228 + $0x4c] sm:$0xf]
      %v260 = vld [vmem:[%s228 + $0x50] sm:$0xf]
      %v261 = vld [vmem:[%s228 + $0x54] sm:$0xf]
      %v262 = vld [vmem:[%s228 + $0x58] sm:$0xf]
      %v263 = vld [vmem:[%s228 + $0x5c] sm:$0xf]
      %v264 = vld [vmem:[%s228 + $0x60] sm:$0xf]
      %v265 = vld [vmem:[%s228 + $0x64] sm:$0xf]
      %v266 = vld [vmem:[%s228 + $0x68] sm:$0xf]
      %v267 = vld [vmem:[%s228 + $0x6c] sm:$0xf]
      %v268 = vld [vmem:[%s228 + $0x70] sm:$0xf]
      %v269 = vld [vmem:[%s228 + $0x74] sm:$0xf]
      %v270 = vld [vmem:[%s228 + $0x78] sm:$0xf]
      %v271 = vld [vmem:[%s228 + $0x7c] sm:$0xf]
      %v272 = vunpack.c.l.bf16 %v240
      %v273 = vunpack.c.l.bf16 %v241
      %v274 = vunpack.c.l.bf16 %v242
      %v275 = vunpack.c.l.bf16 %v243
      %v276 = vunpack.c.l.bf16 %v244
      %v277 = vunpack.c.l.bf16 %v245
      %v278 = vunpack.c.l.bf16 %v246
      %v279 = vunpack.c.l.bf16 %v247
      %v280 = vunpack.c.l.bf16 %v248
      %v281 = vunpack.c.l.bf16 %v249
      %v282 = vunpack.c.l.bf16 %v250
      %v283 = vunpack.c.l.bf16 %v251
      %v284 = vunpack.c.l.bf16 %v252
      %v285 = vunpack.c.l.bf16 %v253
      %v286 = vunpack.c.l.bf16 %v254
      %v287 = vunpack.c.l.bf16 %v255
      %v288 = vunpack.c.l.bf16 %v256
      %v289 = vunpack.c.l.bf16 %v257
      %v290 = vunpack.c.l.bf16 %v258
      %v291 = vunpack.c.l.bf16 %v259
      %v292 = vunpack.c.l.bf16 %v260
      %v293 = vunpack.c.l.bf16 %v261
      %v294 = vunpack.c.l.bf16 %v262
      %v295 = vunpack.c.l.bf16 %v263
      %v296 = vunpack.c.l.bf16 %v264
      %v297 = vunpack.c.l.bf16 %v265
      %v298 = vunpack.c.l.bf16 %v266
      %v299 = vunpack.c.l.bf16 %v267
      %v300 = vunpack.c.l.bf16 %v268
      %v301 = vunpack.c.l.bf16 %v269
      %v302 = vunpack.c.l.bf16 %v270
      %v303 = vunpack.c.l.bf16 %v271
      %v304 = vld [vmem:[%s1] sm:$0x1]
      %v306 = vlaneseq
      %v307 = vshrl.u32 %v306, 7
      %v308 = vsub.s32 0, %v307
      %v309 = vrot.slane %v304, %v308
      %v311 = vmul.f32 %v272, %v309
      %v312 = vmul.f32 %v273, %v309
      %v313 = vmul.f32 %v274, %v309
      %v314 = vmul.f32 %v275, %v309
      %v315 = vmul.f32 %v276, %v309
      %v316 = vmul.f32 %v277, %v309
      %v317 = vmul.f32 %v278, %v309
      %v318 = vmul.f32 %v279, %v309
      %v319 = vmul.f32 %v280, %v309
      %v320 = vmul.f32 %v281, %v309
      %v321 = vmul.f32 %v282, %v309
      %v322 = vmul.f32 %v283, %v309
      %v323 = vmul.f32 %v284, %v309
      %v324 = vmul.f32 %v285, %v309
      %v325 = vmul.f32 %v286, %v309
      %v326 = vmul.f32 %v287, %v309
      %v327 = vmul.f32 %v288, %v309
      %v328 = vmul.f32 %v289, %v309
      %v329 = vmul.f32 %v290, %v309
      %v330 = vmul.f32 %v291, %v309
      %v331 = vmul.f32 %v292, %v309
      %v332 = vmul.f32 %v293, %v309
      %v333 = vmul.f32 %v294, %v309
      %v334 = vmul.f32 %v295, %v309
      %v335 = vmul.f32 %v296, %v309
      %v336 = vmul.f32 %v297, %v309
      %v337 = vmul.f32 %v298, %v309
      %v338 = vmul.f32 %v299, %v309
      %v339 = vmul.f32 %v300, %v309
      %v340 = vmul.f32 %v301, %v309
      %v341 = vmul.f32 %v302, %v309
      %v342 = vmul.f32 %v303, %v309
      %v343 = vld [vmem:[%s2] sm:$0x1]
      %v345 = vlaneseq
      %v346 = vshrl.u32 %v345, 7
      %v347 = vsub.s32 0, %v346
      %v348 = vrot.slane %v343, %v347
      %v350 = vadd.f32 %v311, %v348
      %v351 = vadd.f32 %v312, %v348
      %v352 = vadd.f32 %v313, %v348
      %v353 = vadd.f32 %v314, %v348
      %v354 = vadd.f32 %v315, %v348
      %v355 = vadd.f32 %v316, %v348
      %v356 = vadd.f32 %v317, %v348
      %v357 = vadd.f32 %v318, %v348
      %v358 = vadd.f32 %v319, %v348
      %v359 = vadd.f32 %v320, %v348
      %v360 = vadd.f32 %v321, %v348
      %v361 = vadd.f32 %v322, %v348
      %v362 = vadd.f32 %v323, %v348
      %v363 = vadd.f32 %v324, %v348
      %v364 = vadd.f32 %v325, %v348
      %v365 = vadd.f32 %v326, %v348
      %v366 = vadd.f32 %v327, %v348
      %v367 = vadd.f32 %v328, %v348
      %v368 = vadd.f32 %v329, %v348
      %v369 = vadd.f32 %v330, %v348
      %v370 = vadd.f32 %v331, %v348
      %v371 = vadd.f32 %v332, %v348
      %v372 = vadd.f32 %v333, %v348
      %v373 = vadd.f32 %v334, %v348
      %v374 = vadd.f32 %v335, %v348
      %v375 = vadd.f32 %v336, %v348
      %v376 = vadd.f32 %v337, %v348
      %v377 = vadd.f32 %v338, %v348
      %v378 = vadd.f32 %v339, %v348
      %v379 = vadd.f32 %v340, %v348
      %v380 = vadd.f32 %v341, %v348
      %v381 = vadd.f32 %v342, %v348
      %v382 = vmax.f32 %v350, 0.0
      %v383 = vmax.f32 %v351, 0.0
      %v384 = vmax.f32 %v352, 0.0
      %v385 = vmax.f32 %v353, 0.0
      %v386 = vmax.f32 %v354, 0.0
      %v387 = vmax.f32 %v355, 0.0
      %v388 = vmax.f32 %v356, 0.0
      %v389 = vmax.f32 %v357, 0.0
      %v390 = vmax.f32 %v358, 0.0
      %v391 = vmax.f32 %v359, 0.0
      %v392 = vmax.f32 %v360, 0.0
      %v393 = vmax.f32 %v361, 0.0
      %v394 = vmax.f32 %v362, 0.0
      %v395 = vmax.f32 %v363, 0.0
      %v396 = vmax.f32 %v364, 0.0
      %v397 = vmax.f32 %v365, 0.0
      %v398 = vmax.f32 %v366, 0.0
      %v399 = vmax.f32 %v367, 0.0
      %v400 = vmax.f32 %v368, 0.0
      %v401 = vmax.f32 %v369, 0.0
      %v402 = vmax.f32 %v370, 0.0
      %v403 = vmax.f32 %v371, 0.0
      %v404 = vmax.f32 %v372, 0.0
      %v405 = vmax.f32 %v373, 0.0
      %v406 = vmax.f32 %v374, 0.0
      %v407 = vmax.f32 %v375, 0.0
      %v408 = vmax.f32 %v376, 0.0
      %v409 = vmax.f32 %v377, 0.0
      %v410 = vmax.f32 %v378, 0.0
      %v411 = vmax.f32 %v379, 0.0
      %v412 = vmax.f32 %v380, 0.0
      %v413 = vmax.f32 %v381, 0.0
      %v414 = vpack.c.bf16 %v383, %v382
      %v415 = vpack.c.bf16 %v385, %v384
      %v416 = vpack.c.bf16 %v387, %v386
      %v417 = vpack.c.bf16 %v389, %v388
      %v418 = vpack.c.bf16 %v391, %v390
      %v419 = vpack.c.bf16 %v393, %v392
      %v420 = vpack.c.bf16 %v395, %v394
      %v421 = vpack.c.bf16 %v397, %v396
      %v422 = vpack.c.bf16 %v399, %v398
      %v423 = vpack.c.bf16 %v401, %v400
      %v424 = vpack.c.bf16 %v403, %v402
      %v425 = vpack.c.bf16 %v405, %v404
      %v426 = vpack.c.bf16 %v407, %v406
      %v427 = vpack.c.bf16 %v409, %v408
      %v428 = vpack.c.bf16 %v411, %v410
      %v429 = vpack.c.bf16 %v413, %v412
      %p430 = scmp.eq.s32.totalorder %s20, 0
      // Predicated region
      $region37: #{dense_layer_mask_forward.5} parent=35 // pred_check
        %p431 = pneg %p430
      $region38: #{dense_layer_mask_forward.5} parent=35 // pred_check_branch
        %433 = sbr.rel (%p431) target = $region40
      $region39: #{dense_layer_mask_forward.5} parent=35 // pred_region
        %vm434 = vcmask 261120
        %435 = vst.msk [vmem:[#allocation3] sm:$0xff] %vm434, 0
      $region40: #{dense_layer_mask_forward.5} parent=35 // pred_fallthru
        _
      %vm436 = vcmask 253952
      %vm437 = vsmask.f32 256
      %vm438 = vmand %vm436, %vm437
      %v439 = vld [vmem:[#allocation2] sm:$0x1]
      %v440 = vsel %vm438, 0, %v439
      %441 = vst [vmem:[#allocation2] sm:$0x1] %v440
      %v442 = vld [vmem:[#allocation2 + $0xc] sm:$0x1]
      %v443 = vsel %vm438, 0, %v442
      %444 = vst [vmem:[#allocation2 + $0xc] sm:$0x1] %v443
      %v445 = vld [vmem:[#allocation2 + $0x18] sm:$0x1]
      %v446 = vsel %vm438, 0, %v445
      %447 = vst [vmem:[#allocation2 + $0x18] sm:$0x1] %v446
      %v448 = vld [vmem:[#allocation2 + $0x24] sm:$0x1]
      %v449 = vsel %vm438, 0, %v448
      %450 = vst [vmem:[#allocation2 + $0x24] sm:$0x1] %v449
      %v451 = vld [vmem:[#allocation2 + $0x30] sm:$0x1]
      %v452 = vsel %vm438, 0, %v451
      %453 = vst [vmem:[#allocation2 + $0x30] sm:$0x1] %v452
      %v454 = vld [vmem:[#allocation2 + $0x3c] sm:$0x1]
      %v455 = vsel %vm438, 0, %v454
      %456 = vst [vmem:[#allocation2 + $0x3c] sm:$0x1] %v455
      %v457 = vld [vmem:[#allocation2 + $0x48] sm:$0x1]
      %v458 = vsel %vm438, 0, %v457
      %459 = vst [vmem:[#allocation2 + $0x48] sm:$0x1] %v458
      %v460 = vld [vmem:[#allocation2 + $0x54] sm:$0x1]
      %v461 = vsel %vm438, 0, %v460
      %462 = vst [vmem:[#allocation2 + $0x54] sm:$0x1] %v461
      %v463 = vld [vmem:[#allocation2 + $0x60] sm:$0x1]
      %v464 = vsel %vm438, 0, %v463
      %465 = vst [vmem:[#allocation2 + $0x60] sm:$0x1] %v464
      %v466 = vld [vmem:[#allocation2 + $0x6c] sm:$0x1]
      %v467 = vsel %vm438, 0, %v466
      %468 = vst [vmem:[#allocation2 + $0x6c] sm:$0x1] %v467
      %v469 = vld [vmem:[#allocation2 + $0x78] sm:$0x1]
      %v470 = vsel %vm438, 0, %v469
      %471 = vst [vmem:[#allocation2 + $0x78] sm:$0x1] %v470
      %v472 = vld [vmem:[#allocation2 + $0x84] sm:$0x1]
      %v473 = vsel %vm438, 0, %v472
      %474 = vst [vmem:[#allocation2 + $0x84] sm:$0x1] %v473
      %v475 = vld [vmem:[#allocation2 + $0x90] sm:$0x1]
      %v476 = vsel %vm438, 0, %v475
      %477 = vst [vmem:[#allocation2 + $0x90] sm:$0x1] %v476
      %v478 = vld [vmem:[#allocation2 + $0x9c] sm:$0x1]
      %v479 = vsel %vm438, 0, %v478
      %480 = vst [vmem:[#allocation2 + $0x9c] sm:$0x1] %v479
      %v481 = vld [vmem:[#allocation2 + $0xa8] sm:$0x1]
      %v482 = vsel %vm438, 0, %v481
      %483 = vst [vmem:[#allocation2 + $0xa8] sm:$0x1] %v482
      %v484 = vld [vmem:[#allocation2 + $0xb4] sm:$0x1]
      %v485 = vsel %vm438, 0, %v484
      %486 = vst [vmem:[#allocation2 + $0xb4] sm:$0x1] %v485
      %v487 = vld [vmem:[#allocation2 + $0xc0] sm:$0x1]
      %v488 = vsel %vm438, 0, %v487
      %489 = vst [vmem:[#allocation2 + $0xc0] sm:$0x1] %v488
      %vm490 = vsmask.f32 7938
      %vm491 = vmand %vm436, %vm490
      %v492 = vld [vmem:[#allocation2 + $0x8] sm:$0x1]
      %v493 = vsel %vm491, 0, %v492
      %494 = vst [vmem:[#allocation2 + $0x8] sm:$0x1] %v493
      %v495 = vld [vmem:[#allocation2 + $0x14] sm:$0x1]
      %v496 = vsel %vm491, 0, %v495
      %497 = vst [vmem:[#allocation2 + $0x14] sm:$0x1] %v496
      %v498 = vld [vmem:[#allocation2 + $0x20] sm:$0x1]
      %v499 = vsel %vm491, 0, %v498
      %500 = vst [vmem:[#allocation2 + $0x20] sm:$0x1] %v499
      %v501 = vld [vmem:[#allocation2 + $0x2c] sm:$0x1]
      %v502 = vsel %vm491, 0, %v501
      %503 = vst [vmem:[#allocation2 + $0x2c] sm:$0x1] %v502
      %v504 = vld [vmem:[#allocation2 + $0x38] sm:$0x1]
      %v505 = vsel %vm491, 0, %v504
      %506 = vst [vmem:[#allocation2 + $0x38] sm:$0x1] %v505
      %v507 = vld [vmem:[#allocation2 + $0x44] sm:$0x1]
      %v508 = vsel %vm491, 0, %v507
      %509 = vst [vmem:[#allocation2 + $0x44] sm:$0x1] %v508
      %v510 = vld [vmem:[#allocation2 + $0x50] sm:$0x1]
      %v511 = vsel %vm491, 0, %v510
      %512 = vst [vmem:[#allocation2 + $0x50] sm:$0x1] %v511
      %v513 = vld [vmem:[#allocation2 + $0x5c] sm:$0x1]
      %v514 = vsel %vm491, 0, %v513
      %515 = vst [vmem:[#allocation2 + $0x5c] sm:$0x1] %v514
      %v516 = vld [vmem:[#allocation2 + $0x68] sm:$0x1]
      %v517 = vsel %vm491, 0, %v516
      %518 = vst [vmem:[#allocation2 + $0x68] sm:$0x1] %v517
      %v519 = vld [vmem:[#allocation2 + $0x74] sm:$0x1]
      %v520 = vsel %vm491, 0, %v519
      %521 = vst [vmem:[#allocation2 + $0x74] sm:$0x1] %v520
      %v522 = vld [vmem:[#allocation2 + $0x80] sm:$0x1]
      %v523 = vsel %vm491, 0, %v522
      %524 = vst [vmem:[#allocation2 + $0x80] sm:$0x1] %v523
      %v525 = vld [vmem:[#allocation2 + $0x8c] sm:$0x1]
      %v526 = vsel %vm491, 0, %v525
      %527 = vst [vmem:[#allocation2 + $0x8c] sm:$0x1] %v526
      %v528 = vld [vmem:[#allocation2 + $0x98] sm:$0x1]
      %v529 = vsel %vm491, 0, %v528
      %530 = vst [vmem:[#allocation2 + $0x98] sm:$0x1] %v529
      %v531 = vld [vmem:[#allocation2 + $0xa4] sm:$0x1]
      %v532 = vsel %vm491, 0, %v531
      %533 = vst [vmem:[#allocation2 + $0xa4] sm:$0x1] %v532
      %v534 = vld [vmem:[#allocation2 + $0xb0] sm:$0x1]
      %v535 = vsel %vm491, 0, %v534
      %536 = vst [vmem:[#allocation2 + $0xb0] sm:$0x1] %v535
      %v537 = vld [vmem:[#allocation2 + $0xbc] sm:$0x1]
      %v538 = vsel %vm491, 0, %v537
      %539 = vst [vmem:[#allocation2 + $0xbc] sm:$0x1] %v538
      %v540 = vld [vmem:[#allocation2 + $0xc8] sm:$0x1]
      %v541 = vsel %vm491, 0, %v540
      %542 = vst [vmem:[#allocation2 + $0xc8] sm:$0x1] %v541
      %v543 = vld [vmem:[#allocation3] sm:$0xff]
      %v545 = vunpack.c.l.b16 %v543
      %v546 = vunpack.c.h.b16 %v543
      %v547 = vpack.c.b16 %v545, %v545
      %v548 = vpack.c.b16 %v546, %v546
      %vm549 = vsmask.f32 4368
      %vm550 = vmor %vm437, %vm549
      %v552 = vshrl.u32 %v547, 16
      %v554 = vrot.slane %v552, 7
      %v555 = vshll.u32 %v547, 16
      %v557 = vor.u32 %v554, %v555
      %v558 = vrot.slane %v554, 4
      %v560 = vshrl.u32 %v548, 16
      %v562 = vrot.slane %v560, 7
      %v563 = vshll.u32 %v548, 16
      %v565 = vor.u32 %v562, %v563
      %v566 = vsel %vm550, %v558, %v565
      %v567 = vrot.slane %v562, 4
      %vm571 = vcmask 257024
      %vm572 = vmand %vm571, %vm490
      %v573 = vld [vmem:[#allocation2] sm:$0xf]
      %v574 = vsel %vm572, %v557, %v573
      %575 = vst [vmem:[#allocation2] sm:$0xf] %v574
      %vm576 = vcmask 257024
      %577 = vst.msk [vmem:[#allocation2 + $0x4] sm:$0xf] %vm576, %v566
      %v578 = vld [vmem:[#allocation2 + $0x8] sm:$0x1]
      %v579 = vsel %vm438, %v567, %v578
      %580 = vst [vmem:[#allocation2 + $0x8] sm:$0x1] %v579
      %v597 = vunpack.c.l.b16 %v414
      %v598 = vunpack.c.h.b16 %v414
      %v599 = vunpack.c.l.b16 %v415
      %v600 = vunpack.c.h.b16 %v415
      %v601 = vunpack.c.l.b16 %v416
      %v602 = vunpack.c.h.b16 %v416
      %v603 = vunpack.c.l.b16 %v417
      %v604 = vunpack.c.h.b16 %v417
      %v605 = vunpack.c.l.b16 %v418
      %v606 = vunpack.c.h.b16 %v418
      %v607 = vunpack.c.l.b16 %v419
      %v608 = vunpack.c.h.b16 %v419
      %v609 = vunpack.c.l.b16 %v420
      %v610 = vunpack.c.h.b16 %v420
      %v611 = vunpack.c.l.b16 %v421
      %v612 = vunpack.c.h.b16 %v421
      %v613 = vunpack.c.l.b16 %v422
      %v614 = vunpack.c.h.b16 %v422
      %v615 = vunpack.c.l.b16 %v423
      %v616 = vunpack.c.h.b16 %v423
      %v617 = vunpack.c.l.b16 %v424
      %v618 = vunpack.c.h.b16 %v424
      %v619 = vunpack.c.l.b16 %v425
      %v620 = vunpack.c.h.b16 %v425
      %v621 = vunpack.c.l.b16 %v426
      %v622 = vunpack.c.h.b16 %v426
      %v623 = vunpack.c.l.b16 %v427
      %v624 = vunpack.c.h.b16 %v427
      %v625 = vunpack.c.l.b16 %v428
      %v626 = vunpack.c.h.b16 %v428
      %v627 = vunpack.c.l.b16 %v429
      %v628 = vunpack.c.h.b16 %v429
      %v629 = vpack.c.b16 %v597, %v597
      %v630 = vpack.c.b16 %v598, %v598
      %v631 = vpack.c.b16 %v599, %v599
      %v632 = vpack.c.b16 %v600, %v600
      %v633 = vpack.c.b16 %v601, %v601
      %v634 = vpack.c.b16 %v602, %v602
      %v635 = vpack.c.b16 %v603, %v603
      %v636 = vpack.c.b16 %v604, %v604
      %v637 = vpack.c.b16 %v605, %v605
      %v638 = vpack.c.b16 %v606, %v606
      %v639 = vpack.c.b16 %v607, %v607
      %v640 = vpack.c.b16 %v608, %v608
      %v641 = vpack.c.b16 %v609, %v609
      %v642 = vpack.c.b16 %v610, %v610
      %v643 = vpack.c.b16 %v611, %v611
      %v644 = vpack.c.b16 %v612, %v612
      %v645 = vpack.c.b16 %v613, %v613
      %v646 = vpack.c.b16 %v614, %v614
      %v647 = vpack.c.b16 %v615, %v615
      %v648 = vpack.c.b16 %v616, %v616
      %v649 = vpack.c.b16 %v617, %v617
      %v650 = vpack.c.b16 %v618, %v618
      %v651 = vpack.c.b16 %v619, %v619
      %v652 = vpack.c.b16 %v620, %v620
      %v653 = vpack.c.b16 %v621, %v621
      %v654 = vpack.c.b16 %v622, %v622
      %v655 = vpack.c.b16 %v623, %v623
      %v656 = vpack.c.b16 %v624, %v624
      %v657 = vpack.c.b16 %v625, %v625
      %v658 = vpack.c.b16 %v626, %v626
      %v659 = vpack.c.b16 %v627, %v627
      %v660 = vpack.c.b16 %v628, %v628
      %v662 = vshrl.u32 %v629, 16
      %v664 = vrot.slane %v662, 7
      %v665 = vshll.u32 %v629, 16
      %v667 = vor.u32 %v664, %v665
      %v668 = vrot.slane %v664, 4
      %v670 = vshrl.u32 %v630, 16
      %v672 = vrot.slane %v670, 7
      %v673 = vshll.u32 %v630, 16
      %v675 = vor.u32 %v672, %v673
      %v676 = vsel %vm550, %v668, %v675
      %v677 = vrot.slane %v672, 4
      %v679 = vshrl.u32 %v631, 16
      %v681 = vrot.slane %v679, 7
      %v682 = vshll.u32 %v631, 16
      %v684 = vor.u32 %v681, %v682
      %v685 = vrot.slane %v681, 4
      %v687 = vshrl.u32 %v632, 16
      %v689 = vrot.slane %v687, 7
      %v690 = vshll.u32 %v632, 16
      %v692 = vor.u32 %v689, %v690
      %v693 = vsel %vm550, %v685, %v692
      %v694 = vrot.slane %v689, 4
      %v696 = vshrl.u32 %v633, 16
      %v698 = vrot.slane %v696, 7
      %v699 = vshll.u32 %v633, 16
      %v701 = vor.u32 %v698, %v699
      %v702 = vrot.slane %v698, 4
      %v704 = vshrl.u32 %v634, 16
      %v706 = vrot.slane %v704, 7
      %v707 = vshll.u32 %v634, 16
      %v709 = vor.u32 %v706, %v707
      %v710 = vsel %vm550, %v702, %v709
      %v711 = vrot.slane %v706, 4
      %v713 = vshrl.u32 %v635, 16
      %v715 = vrot.slane %v713, 7
      %v716 = vshll.u32 %v635, 16
      %v718 = vor.u32 %v715, %v716
      %v719 = vrot.slane %v715, 4
      %v721 = vshrl.u32 %v636, 16
      %v723 = vrot.slane %v721, 7
      %v724 = vshll.u32 %v636, 16
      %v726 = vor.u32 %v723, %v724
      %v727 = vsel %vm550, %v719, %v726
      %v728 = vrot.slane %v723, 4
      %v730 = vshrl.u32 %v637, 16
      %v732 = vrot.slane %v730, 7
      %v733 = vshll.u32 %v637, 16
      %v735 = vor.u32 %v732, %v733
      %v736 = vrot.slane %v732, 4
      %v738 = vshrl.u32 %v638, 16
      %v740 = vrot.slane %v738, 7
      %v741 = vshll.u32 %v638, 16
      %v743 = vor.u32 %v740, %v741
      %v744 = vsel %vm550, %v736, %v743
      %v745 = vrot.slane %v740, 4
      %v747 = vshrl.u32 %v639, 16
      %v749 = vrot.slane %v747, 7
      %v750 = vshll.u32 %v639, 16
      %v752 = vor.u32 %v749, %v750
      %v753 = vrot.slane %v749, 4
      %v755 = vshrl.u32 %v640, 16
      %v757 = vrot.slane %v755, 7
      %v758 = vshll.u32 %v640, 16
      %v760 = vor.u32 %v757, %v758
      %v761 = vsel %vm550, %v753, %v760
      %v762 = vrot.slane %v757, 4
      %v764 = vshrl.u32 %v641, 16
      %v766 = vrot.slane %v764, 7
      %v767 = vshll.u32 %v641, 16
      %v769 = vor.u32 %v766, %v767
      %v770 = vrot.slane %v766, 4
      %v772 = vshrl.u32 %v642, 16
      %v774 = vrot.slane %v772, 7
      %v775 = vshll.u32 %v642, 16
      %v777 = vor.u32 %v774, %v775
      %v778 = vsel %vm550, %v770, %v777
      %v779 = vrot.slane %v774, 4
      %v781 = vshrl.u32 %v643, 16
      %v783 = vrot.slane %v781, 7
      %v784 = vshll.u32 %v643, 16
      %v786 = vor.u32 %v783, %v784
      %v787 = vrot.slane %v783, 4
      %v789 = vshrl.u32 %v644, 16
      %v791 = vrot.slane %v789, 7
      %v792 = vshll.u32 %v644, 16
      %v794 = vor.u32 %v791, %v792
      %v795 = vsel %vm550, %v787, %v794
      %v796 = vrot.slane %v791, 4
      %v798 = vshrl.u32 %v645, 16
      %v800 = vrot.slane %v798, 7
      %v801 = vshll.u32 %v645, 16
      %v803 = vor.u32 %v800, %v801
      %v804 = vrot.slane %v800, 4
      %v806 = vshrl.u32 %v646, 16
      %v808 = vrot.slane %v806, 7
      %v809 = vshll.u32 %v646, 16
      %v811 = vor.u32 %v808, %v809
      %v812 = vsel %vm550, %v804, %v811
      %v813 = vrot.slane %v808, 4
      %v815 = vshrl.u32 %v647, 16
      %v817 = vrot.slane %v815, 7
      %v818 = vshll.u32 %v647, 16
      %v820 = vor.u32 %v817, %v818
      %v821 = vrot.slane %v817, 4
      %v823 = vshrl.u32 %v648, 16
      %v825 = vrot.slane %v823, 7
      %v826 = vshll.u32 %v648, 16
      %v828 = vor.u32 %v825, %v826
      %v829 = vsel %vm550, %v821, %v828
      %v830 = vrot.slane %v825, 4
      %v832 = vshrl.u32 %v649, 16
      %v834 = vrot.slane %v832, 7
      %v835 = vshll.u32 %v649, 16
      %v837 = vor.u32 %v834, %v835
      %v838 = vrot.slane %v834, 4
      %v840 = vshrl.u32 %v650, 16
      %v842 = vrot.slane %v840, 7
      %v843 = vshll.u32 %v650, 16
      %v845 = vor.u32 %v842, %v843
      %v846 = vsel %vm550, %v838, %v845
      %v847 = vrot.slane %v842, 4
      %v849 = vshrl.u32 %v651, 16
      %v851 = vrot.slane %v849, 7
      %v852 = vshll.u32 %v651, 16
      %v854 = vor.u32 %v851, %v852
      %v855 = vrot.slane %v851, 4
      %v857 = vshrl.u32 %v652, 16
      %v859 = vrot.slane %v857, 7
      %v860 = vshll.u32 %v652, 16
      %v862 = vor.u32 %v859, %v860
      %v863 = vsel %vm550, %v855, %v862
      %v864 = vrot.slane %v859, 4
      %v866 = vshrl.u32 %v653, 16
      %v868 = vrot.slane %v866, 7
      %v869 = vshll.u32 %v653, 16
      %v871 = vor.u32 %v868, %v869
      %v872 = vrot.slane %v868, 4
      %v874 = vshrl.u32 %v654, 16
      %v876 = vrot.slane %v874, 7
      %v877 = vshll.u32 %v654, 16
      %v879 = vor.u32 %v876, %v877
      %v880 = vsel %vm550, %v872, %v879
      %v881 = vrot.slane %v876, 4
      %v883 = vshrl.u32 %v655, 16
      %v885 = vrot.slane %v883, 7
      %v886 = vshll.u32 %v655, 16
      %v888 = vor.u32 %v885, %v886
      %v889 = vrot.slane %v885, 4
      %v891 = vshrl.u32 %v656, 16
      %v893 = vrot.slane %v891, 7
      %v894 = vshll.u32 %v656, 16
      %v896 = vor.u32 %v893, %v894
      %v897 = vsel %vm550, %v889, %v896
      %v898 = vrot.slane %v893, 4
      %v900 = vshrl.u32 %v657, 16
      %v902 = vrot.slane %v900, 7
      %v903 = vshll.u32 %v657, 16
      %v905 = vor.u32 %v902, %v903
      %v906 = vrot.slane %v902, 4
      %v908 = vshrl.u32 %v658, 16
      %v910 = vrot.slane %v908, 7
      %v911 = vshll.u32 %v658, 16
      %v913 = vor.u32 %v910, %v911
      %v914 = vsel %vm550, %v906, %v913
      %v915 = vrot.slane %v910, 4
      %v917 = vshrl.u32 %v659, 16
      %v919 = vrot.slane %v917, 7
      %v920 = vshll.u32 %v659, 16
      %v922 = vor.u32 %v919, %v920
      %v923 = vrot.slane %v919, 4
      %v925 = vshrl.u32 %v660, 16
      %v927 = vrot.slane %v925, 7
      %v928 = vshll.u32 %v660, 16
      %v930 = vor.u32 %v927, %v928
      %v931 = vsel %vm550, %v923, %v930
      %v932 = vrot.slane %v927, 4
      %s981 = scalar_lea.vmem [#allocation2], 12
      %v982 = vld [vmem:[%s981] sm:$0xf]
      %v983 = vsel %vm572, %v667, %v982
      %984 = vst [vmem:[%s981] sm:$0xf] %v983
      %985 = vst.msk [vmem:[%s981 + $0x4] sm:$0xf] %vm576, %v676
      %v986 = vld [vmem:[%s981 + $0x8] sm:$0x1]
      %v987 = vsel %vm438, %v677, %v986
      %988 = vst [vmem:[%s981 + $0x8] sm:$0x1] %v987
      %v989 = vld [vmem:[%s981 + $0xc] sm:$0xf]
      %v990 = vsel %vm572, %v684, %v989
      %991 = vst [vmem:[%s981 + $0xc] sm:$0xf] %v990
      %992 = vst.msk [vmem:[%s981 + $0x10] sm:$0xf] %vm576, %v693
      %v993 = vld [vmem:[%s981 + $0x14] sm:$0x1]
      %v994 = vsel %vm438, %v694, %v993
      %995 = vst [vmem:[%s981 + $0x14] sm:$0x1] %v994
      %v996 = vld [vmem:[%s981 + $0x18] sm:$0xf]
      %v997 = vsel %vm572, %v701, %v996
      %998 = vst [vmem:[%s981 + $0x18] sm:$0xf] %v997
      %999 = vst.msk [vmem:[%s981 + $0x1c] sm:$0xf] %vm576, %v710
      %v1000 = vld [vmem:[%s981 + $0x20] sm:$0x1]
      %v1001 = vsel %vm438, %v711, %v1000
      %1002 = vst [vmem:[%s981 + $0x20] sm:$0x1] %v1001
      %v1003 = vld [vmem:[%s981 + $0x24] sm:$0xf]
      %v1004 = vsel %vm572, %v718, %v1003
      %1005 = vst [vmem:[%s981 + $0x24] sm:$0xf] %v1004
      %1006 = vst.msk [vmem:[%s981 + $0x28] sm:$0xf] %vm576, %v727
      %v1007 = vld [vmem:[%s981 + $0x2c] sm:$0x1]
      %v1008 = vsel %vm438, %v728, %v1007
      %1009 = vst [vmem:[%s981 + $0x2c] sm:$0x1] %v1008
      %v1010 = vld [vmem:[%s981 + $0x30] sm:$0xf]
      %v1011 = vsel %vm572, %v735, %v1010
      %1012 = vst [vmem:[%s981 + $0x30] sm:$0xf] %v1011
      %1013 = vst.msk [vmem:[%s981 + $0x34] sm:$0xf] %vm576, %v744
      %v1014 = vld [vmem:[%s981 + $0x38] sm:$0x1]
      %v1015 = vsel %vm438, %v745, %v1014
      %1016 = vst [vmem:[%s981 + $0x38] sm:$0x1] %v1015
      %v1017 = vld [vmem:[%s981 + $0x3c] sm:$0xf]
      %v1018 = vsel %vm572, %v752, %v1017
      %1019 = vst [vmem:[%s981 + $0x3c] sm:$0xf] %v1018
      %1020 = vst.msk [vmem:[%s981 + $0x40] sm:$0xf] %vm576, %v761
      %v1021 = vld [vmem:[%s981 + $0x44] sm:$0x1]
      %v1022 = vsel %vm438, %v762, %v1021
      %1023 = vst [vmem:[%s981 + $0x44] sm:$0x1] %v1022
      %v1024 = vld [vmem:[%s981 + $0x48] sm:$0xf]
      %v1025 = vsel %vm572, %v769, %v1024
      %1026 = vst [vmem:[%s981 + $0x48] sm:$0xf] %v1025
      %1027 = vst.msk [vmem:[%s981 + $0x4c] sm:$0xf] %vm576, %v778
      %v1028 = vld [vmem:[%s981 + $0x50] sm:$0x1]
      %v1029 = vsel %vm438, %v779, %v1028
      %1030 = vst [vmem:[%s981 + $0x50] sm:$0x1] %v1029
      %v1031 = vld [vmem:[%s981 + $0x54] sm:$0xf]
      %v1032 = vsel %vm572, %v786, %v1031
      %1033 = vst [vmem:[%s981 + $0x54] sm:$0xf] %v1032
      %1034 = vst.msk [vmem:[%s981 + $0x58] sm:$0xf] %vm576, %v795
      %v1035 = vld [vmem:[%s981 + $0x5c] sm:$0x1]
      %v1036 = vsel %vm438, %v796, %v1035
      %1037 = vst [vmem:[%s981 + $0x5c] sm:$0x1] %v1036
      %v1038 = vld [vmem:[%s981 + $0x60] sm:$0xf]
      %v1039 = vsel %vm572, %v803, %v1038
      %1040 = vst [vmem:[%s981 + $0x60] sm:$0xf] %v1039
      %1041 = vst.msk [vmem:[%s981 + $0x64] sm:$0xf] %vm576, %v812
      %v1042 = vld [vmem:[%s981 + $0x68] sm:$0x1]
      %v1043 = vsel %vm438, %v813, %v1042
      %1044 = vst [vmem:[%s981 + $0x68] sm:$0x1] %v1043
      %v1045 = vld [vmem:[%s981 + $0x6c] sm:$0xf]
      %v1046 = vsel %vm572, %v820, %v1045
      %1047 = vst [vmem:[%s981 + $0x6c] sm:$0xf] %v1046
      %1048 = vst.msk [vmem:[%s981 + $0x70] sm:$0xf] %vm576, %v829
      %v1049 = vld [vmem:[%s981 + $0x74] sm:$0x1]
      %v1050 = vsel %vm438, %v830, %v1049
      %1051 = vst [vmem:[%s981 + $0x74] sm:$0x1] %v1050
      %v1052 = vld [vmem:[%s981 + $0x78] sm:$0xf]
      %v1053 = vsel %vm572, %v837, %v1052
      %1054 = vst [vmem:[%s981 + $0x78] sm:$0xf] %v1053
      %1055 = vst.msk [vmem:[%s981 + $0x7c] sm:$0xf] %vm576, %v846
      %v1056 = vld [vmem:[%s981 + $0x80] sm:$0x1]
      %v1057 = vsel %vm438, %v847, %v1056
      %1058 = vst [vmem:[%s981 + $0x80] sm:$0x1] %v1057
      %v1059 = vld [vmem:[%s981 + $0x84] sm:$0xf]
      %v1060 = vsel %vm572, %v854, %v1059
      %1061 = vst [vmem:[%s981 + $0x84] sm:$0xf] %v1060
      %1062 = vst.msk [vmem:[%s981 + $0x88] sm:$0xf] %vm576, %v863
      %v1063 = vld [vmem:[%s981 + $0x8c] sm:$0x1]
      %v1064 = vsel %vm438, %v864, %v1063
      %1065 = vst [vmem:[%s981 + $0x8c] sm:$0x1] %v1064
      %v1066 = vld [vmem:[%s981 + $0x90] sm:$0xf]
      %v1067 = vsel %vm572, %v871, %v1066
      %1068 = vst [vmem:[%s981 + $0x90] sm:$0xf] %v1067
      %1069 = vst.msk [vmem:[%s981 + $0x94] sm:$0xf] %vm576, %v880
      %v1070 = vld [vmem:[%s981 + $0x98] sm:$0x1]
      %v1071 = vsel %vm438, %v881, %v1070
      %1072 = vst [vmem:[%s981 + $0x98] sm:$0x1] %v1071
      %v1073 = vld [vmem:[%s981 + $0x9c] sm:$0xf]
      %v1074 = vsel %vm572, %v888, %v1073
      %1075 = vst [vmem:[%s981 + $0x9c] sm:$0xf] %v1074
      %1076 = vst.msk [vmem:[%s981 + $0xa0] sm:$0xf] %vm576, %v897
      %v1077 = vld [vmem:[%s981 + $0xa4] sm:$0x1]
      %v1078 = vsel %vm438, %v898, %v1077
      %1079 = vst [vmem:[%s981 + $0xa4] sm:$0x1] %v1078
      %v1080 = vld [vmem:[%s981 + $0xa8] sm:$0xf]
      %v1081 = vsel %vm572, %v905, %v1080
      %1082 = vst [vmem:[%s981 + $0xa8] sm:$0xf] %v1081
      %1083 = vst.msk [vmem:[%s981 + $0xac] sm:$0xf] %vm576, %v914
      %v1084 = vld [vmem:[%s981 + $0xb0] sm:$0x1]
      %v1085 = vsel %vm438, %v915, %v1084
      %1086 = vst [vmem:[%s981 + $0xb0] sm:$0x1] %v1085
      %v1087 = vld [vmem:[%s981 + $0xb4] sm:$0xf]
      %v1088 = vsel %vm572, %v922, %v1087
      %1089 = vst [vmem:[%s981 + $0xb4] sm:$0xf] %v1088
      %1090 = vst.msk [vmem:[%s981 + $0xb8] sm:$0xf] %vm576, %v931
      %v1091 = vld [vmem:[%s981 + $0xbc] sm:$0x1]
      %v1092 = vsel %vm438, %v932, %v1091
      %1093 = vst [vmem:[%s981 + $0xbc] sm:$0x1] %v1092
      %vm1094 = vcmask 261120
      %1095 = vst.msk [vmem:[#allocation3] sm:$0xff] %vm1094, %v429
      %v1096 = vld [vmem:[#allocation2] sm:$0xf]
      %v1097 = vld [vmem:[#allocation2 + $0x4] sm:$0xf]
      %v1098 = vld [vmem:[#allocation2 + $0xc] sm:$0xf]
      %v1099 = vld [vmem:[#allocation2 + $0x10] sm:$0xf]
      %v1100 = vld [vmem:[#allocation2 + $0x18] sm:$0xf]
      %v1101 = vld [vmem:[#allocation2 + $0x1c] sm:$0xf]
      %v1102 = vld [vmem:[#allocation2 + $0x24] sm:$0xf]
      %v1103 = vld [vmem:[#allocation2 + $0x28] sm:$0xf]
      %v1104 = vld [vmem:[#allocation2 + $0x30] sm:$0xf]
      %v1105 = vld [vmem:[#allocation2 + $0x34] sm:$0xf]
      %v1106 = vld [vmem:[#allocation2 + $0x3c] sm:$0xf]
      %v1107 = vld [vmem:[#allocation2 + $0x40] sm:$0xf]
      %v1108 = vld [vmem:[#allocation2 + $0x48] sm:$0xf]
      %v1109 = vld [vmem:[#allocation2 + $0x4c] sm:$0xf]
      %v1110 = vld [vmem:[#allocation2 + $0x54] sm:$0xf]
      %v1111 = vld [vmem:[#allocation2 + $0x58] sm:$0xf]
      %v1112 = vld [vmem:[#allocation2 + $0x60] sm:$0xf]
      %v1113 = vld [vmem:[#allocation2 + $0x64] sm:$0xf]
      %v1114 = vld [vmem:[#allocation2 + $0x6c] sm:$0xf]
      %v1115 = vld [vmem:[#allocation2 + $0x70] sm:$0xf]
      %v1116 = vld [vmem:[#allocation2 + $0x78] sm:$0xf]
      %v1117 = vld [vmem:[#allocation2 + $0x7c] sm:$0xf]
      %v1118 = vld [vmem:[#allocation2 + $0x84] sm:$0xf]
      %v1119 = vld [vmem:[#allocation2 + $0x88] sm:$0xf]
      %v1120 = vld [vmem:[#allocation2 + $0x90] sm:$0xf]
      %v1121 = vld [vmem:[#allocation2 + $0x94] sm:$0xf]
      %v1122 = vld [vmem:[#allocation2 + $0x9c] sm:$0xf]
      %v1123 = vld [vmem:[#allocation2 + $0xa0] sm:$0xf]
      %v1124 = vld [vmem:[#allocation2 + $0xa8] sm:$0xf]
      %v1125 = vld [vmem:[#allocation2 + $0xac] sm:$0xf]
      %v1126 = vld [vmem:[#allocation2 + $0xb4] sm:$0xf]
      %v1127 = vld [vmem:[#allocation2 + $0xb8] sm:$0xf]
      %v1128 = vld [vmem:[%s3] sm:$0xf]
      %v1129 = vld [vmem:[%s3 + $0x4] sm:$0xf]
      %v1130 = vld [vmem:[%s3 + $0x8] sm:$0xf]
      %v1131 = vld [vmem:[%s3 + $0xc] sm:$0xf]
      %v1132 = vld [vmem:[#allocation2 + $0x8] sm:$0x1]
      %v1133 = vld [vmem:[#allocation2 + $0x14] sm:$0x1]
      %v1134 = vld [vmem:[#allocation2 + $0x20] sm:$0x1]
      %v1135 = vld [vmem:[#allocation2 + $0x2c] sm:$0x1]
      %v1136 = vld [vmem:[#allocation2 + $0x38] sm:$0x1]
      %v1137 = vld [vmem:[#allocation2 + $0x44] sm:$0x1]
      %v1138 = vld [vmem:[#allocation2 + $0x50] sm:$0x1]
      %v1139 = vld [vmem:[#allocation2 + $0x5c] sm:$0x1]
      %v1140 = vld [vmem:[#allocation2 + $0x68] sm:$0x1]
      %v1141 = vld [vmem:[#allocation2 + $0x74] sm:$0x1]
      %v1142 = vld [vmem:[#allocation2 + $0x80] sm:$0x1]
      %v1143 = vld [vmem:[#allocation2 + $0x8c] sm:$0x1]
      %v1144 = vld [vmem:[#allocation2 + $0x98] sm:$0x1]
      %v1145 = vld [vmem:[#allocation2 + $0xa4] sm:$0x1]
      %v1146 = vld [vmem:[#allocation2 + $0xb0] sm:$0x1]
      %v1147 = vld [vmem:[#allocation2 + $0xbc] sm:$0x1]
      %vm1148 = vsmask.f32 3328
      %vm1149 = vsmask.f32 7440
      %vm1150 = vmor %vm1148, %vm1149
      %v1152 = vshrl.u32 %v1096, 16
      %v1154 = vrot.slane %v1152, 4
      %v1155 = vshll.u32 %v1096, 16
      %v1157 = vrot.slane %v1155, 5
      %v1158 = vor.u32 %v1154, %v1157
      %v1159 = vrot.slane %v1158, 4
      %v1161 = vshll.u32 %v1097, 16
      %v1163 = vrot.slane %v1161, 5
      %v1164 = vsel %vm1150, %v1159, %v1163
      %v1165 = vshrl.u32 %v1097, 16
      %v1167 = vrot.slane %v1165, 4
      %v1168 = vor.u32 %v1167, %v1163
      %v1169 = vrot.slane %v1168, 4
      %v1171 = vshll.u32 %v1132, 16
      %v1173 = vrot.slane %v1171, 5
      %v1174 = vsel %vm1150, %v1169, %v1173
      %v1176 = vshrl.u32 %v1098, 16
      %v1178 = vrot.slane %v1176, 4
      %v1179 = vshll.u32 %v1098, 16
      %v1181 = vrot.slane %v1179, 5
      %v1182 = vor.u32 %v1178, %v1181
      %v1183 = vrot.slane %v1182, 4
      %v1185 = vshll.u32 %v1099, 16
      %v1187 = vrot.slane %v1185, 5
      %v1188 = vsel %vm1150, %v1183, %v1187
      %v1189 = vshrl.u32 %v1099, 16
      %v1191 = vrot.slane %v1189, 4
      %v1192 = vor.u32 %v1191, %v1187
      %v1193 = vrot.slane %v1192, 4
      %v1195 = vshll.u32 %v1133, 16
      %v1197 = vrot.slane %v1195, 5
      %v1198 = vsel %vm1150, %v1193, %v1197
      %v1200 = vshrl.u32 %v1100, 16
      %v1202 = vrot.slane %v1200, 4
      %v1203 = vshll.u32 %v1100, 16
      %v1205 = vrot.slane %v1203, 5
      %v1206 = vor.u32 %v1202, %v1205
      %v1207 = vrot.slane %v1206, 4
      %v1209 = vshll.u32 %v1101, 16
      %v1211 = vrot.slane %v1209, 5
      %v1212 = vsel %vm1150, %v1207, %v1211
      %v1213 = vshrl.u32 %v1101, 16
      %v1215 = vrot.slane %v1213, 4
      %v1216 = vor.u32 %v1215, %v1211
      %v1217 = vrot.slane %v1216, 4
      %v1219 = vshll.u32 %v1134, 16
      %v1221 = vrot.slane %v1219, 5
      %v1222 = vsel %vm1150, %v1217, %v1221
      %v1224 = vshrl.u32 %v1102, 16
      %v1226 = vrot.slane %v1224, 4
      %v1227 = vshll.u32 %v1102, 16
      %v1229 = vrot.slane %v1227, 5
      %v1230 = vor.u32 %v1226, %v1229
      %v1231 = vrot.slane %v1230, 4
      %v1233 = vshll.u32 %v1103, 16
      %v1235 = vrot.slane %v1233, 5
      %v1236 = vsel %vm1150, %v1231, %v1235
      %v1237 = vshrl.u32 %v1103, 16
      %v1239 = vrot.slane %v1237, 4
      %v1240 = vor.u32 %v1239, %v1235
      %v1241 = vrot.slane %v1240, 4
      %v1243 = vshll.u32 %v1135, 16
      %v1245 = vrot.slane %v1243, 5
      %v1246 = vsel %vm1150, %v1241, %v1245
      %v1248 = vshrl.u32 %v1104, 16
      %v1250 = vrot.slane %v1248, 4
      %v1251 = vshll.u32 %v1104, 16
      %v1253 = vrot.slane %v1251, 5
      %v1254 = vor.u32 %v1250, %v1253
      %v1255 = vrot.slane %v1254, 4
      %v1257 = vshll.u32 %v1105, 16
      %v1259 = vrot.slane %v1257, 5
      %v1260 = vsel %vm1150, %v1255, %v1259
      %v1261 = vshrl.u32 %v1105, 16
      %v1263 = vrot.slane %v1261, 4
      %v1264 = vor.u32 %v1263, %v1259
      %v1265 = vrot.slane %v1264, 4
      %v1267 = vshll.u32 %v1136, 16
      %v1269 = vrot.slane %v1267, 5
      %v1270 = vsel %vm1150, %v1265, %v1269
      %v1272 = vshrl.u32 %v1106, 16
      %v1274 = vrot.slane %v1272, 4
      %v1275 = vshll.u32 %v1106, 16
      %v1277 = vrot.slane %v1275, 5
      %v1278 = vor.u32 %v1274, %v1277
      %v1279 = vrot.slane %v1278, 4
      %v1281 = vshll.u32 %v1107, 16
      %v1283 = vrot.slane %v1281, 5
      %v1284 = vsel %vm1150, %v1279, %v1283
      %v1285 = vshrl.u32 %v1107, 16
      %v1287 = vrot.slane %v1285, 4
      %v1288 = vor.u32 %v1287, %v1283
      %v1289 = vrot.slane %v1288, 4
      %v1291 = vshll.u32 %v1137, 16
      %v1293 = vrot.slane %v1291, 5
      %v1294 = vsel %vm1150, %v1289, %v1293
      %v1296 = vshrl.u32 %v1108, 16
      %v1298 = vrot.slane %v1296, 4
      %v1299 = vshll.u32 %v1108, 16
      %v1301 = vrot.slane %v1299, 5
      %v1302 = vor.u32 %v1298, %v1301
      %v1303 = vrot.slane %v1302, 4
      %v1305 = vshll.u32 %v1109, 16
      %v1307 = vrot.slane %v1305, 5
      %v1308 = vsel %vm1150, %v1303, %v1307
      %v1309 = vshrl.u32 %v1109, 16
      %v1311 = vrot.slane %v1309, 4
      %v1312 = vor.u32 %v1311, %v1307
      %v1313 = vrot.slane %v1312, 4
      %v1315 = vshll.u32 %v1138, 16
      %v1317 = vrot.slane %v1315, 5
      %v1318 = vsel %vm1150, %v1313, %v1317
      %v1320 = vshrl.u32 %v1110, 16
      %v1322 = vrot.slane %v1320, 4
      %v1323 = vshll.u32 %v1110, 16
      %v1325 = vrot.slane %v1323, 5
      %v1326 = vor.u32 %v1322, %v1325
      %v1327 = vrot.slane %v1326, 4
      %v1329 = vshll.u32 %v1111, 16
      %v1331 = vrot.slane %v1329, 5
      %v1332 = vsel %vm1150, %v1327, %v1331
      %v1333 = vshrl.u32 %v1111, 16
      %v1335 = vrot.slane %v1333, 4
      %v1336 = vor.u32 %v1335, %v1331
      %v1337 = vrot.slane %v1336, 4
      %v1339 = vshll.u32 %v1139, 16
      %v1341 = vrot.slane %v1339, 5
      %v1342 = vsel %vm1150, %v1337, %v1341
      %v1344 = vshrl.u32 %v1112, 16
      %v1346 = vrot.slane %v1344, 4
      %v1347 = vshll.u32 %v1112, 16
      %v1349 = vrot.slane %v1347, 5
      %v1350 = vor.u32 %v1346, %v1349
      %v1351 = vrot.slane %v1350, 4
      %v1353 = vshll.u32 %v1113, 16
      %v1355 = vrot.slane %v1353, 5
      %v1356 = vsel %vm1150, %v1351, %v1355
      %v1357 = vshrl.u32 %v1113, 16
      %v1359 = vrot.slane %v1357, 4
      %v1360 = vor.u32 %v1359, %v1355
      %v1361 = vrot.slane %v1360, 4
      %v1363 = vshll.u32 %v1140, 16
      %v1365 = vrot.slane %v1363, 5
      %v1366 = vsel %vm1150, %v1361, %v1365
      %v1368 = vshrl.u32 %v1114, 16
      %v1370 = vrot.slane %v1368, 4
      %v1371 = vshll.u32 %v1114, 16
      %v1373 = vrot.slane %v1371, 5
      %v1374 = vor.u32 %v1370, %v1373
      %v1375 = vrot.slane %v1374, 4
      %v1377 = vshll.u32 %v1115, 16
      %v1379 = vrot.slane %v1377, 5
      %v1380 = vsel %vm1150, %v1375, %v1379
      %v1381 = vshrl.u32 %v1115, 16
      %v1383 = vrot.slane %v1381, 4
      %v1384 = vor.u32 %v1383, %v1379
      %v1385 = vrot.slane %v1384, 4
      %v1387 = vshll.u32 %v1141, 16
      %v1389 = vrot.slane %v1387, 5
      %v1390 = vsel %vm1150, %v1385, %v1389
      %v1392 = vshrl.u32 %v1116, 16
      %v1394 = vrot.slane %v1392, 4
      %v1395 = vshll.u32 %v1116, 16
      %v1397 = vrot.slane %v1395, 5
      %v1398 = vor.u32 %v1394, %v1397
      %v1399 = vrot.slane %v1398, 4
      %v1401 = vshll.u32 %v1117, 16
      %v1403 = vrot.slane %v1401, 5
      %v1404 = vsel %vm1150, %v1399, %v1403
      %v1405 = vshrl.u32 %v1117, 16
      %v1407 = vrot.slane %v1405, 4
      %v1408 = vor.u32 %v1407, %v1403
      %v1409 = vrot.slane %v1408, 4
      %v1411 = vshll.u32 %v1142, 16
      %v1413 = vrot.slane %v1411, 5
      %v1414 = vsel %vm1150, %v1409, %v1413
      %v1416 = vshrl.u32 %v1118, 16
      %v1418 = vrot.slane %v1416, 4
      %v1419 = vshll.u32 %v1118, 16
      %v1421 = vrot.slane %v1419, 5
      %v1422 = vor.u32 %v1418, %v1421
      %v1423 = vrot.slane %v1422, 4
      %v1425 = vshll.u32 %v1119, 16
      %v1427 = vrot.slane %v1425, 5
      %v1428 = vsel %vm1150, %v1423, %v1427
      %v1429 = vshrl.u32 %v1119, 16
      %v1431 = vrot.slane %v1429, 4
      %v1432 = vor.u32 %v1431, %v1427
      %v1433 = vrot.slane %v1432, 4
      %v1435 = vshll.u32 %v1143, 16
      %v1437 = vrot.slane %v1435, 5
      %v1438 = vsel %vm1150, %v1433, %v1437
      %v1440 = vshrl.u32 %v1120, 16
      %v1442 = vrot.slane %v1440, 4
      %v1443 = vshll.u32 %v1120, 16
      %v1445 = vrot.slane %v1443, 5
      %v1446 = vor.u32 %v1442, %v1445
      %v1447 = vrot.slane %v1446, 4
      %v1449 = vshll.u32 %v1121, 16
      %v1451 = vrot.slane %v1449, 5
      %v1452 = vsel %vm1150, %v1447, %v1451
      %v1453 = vshrl.u32 %v1121, 16
      %v1455 = vrot.slane %v1453, 4
      %v1456 = vor.u32 %v1455, %v1451
      %v1457 = vrot.slane %v1456, 4
      %v1459 = vshll.u32 %v1144, 16
      %v1461 = vrot.slane %v1459, 5
      %v1462 = vsel %vm1150, %v1457, %v1461
      %v1464 = vshrl.u32 %v1122, 16
      %v1466 = vrot.slane %v1464, 4
      %v1467 = vshll.u32 %v1122, 16
      %v1469 = vrot.slane %v1467, 5
      %v1470 = vor.u32 %v1466, %v1469
      %v1471 = vrot.slane %v1470, 4
      %v1473 = vshll.u32 %v1123, 16
      %v1475 = vrot.slane %v1473, 5
      %v1476 = vsel %vm1150, %v1471, %v1475
      %v1477 = vshrl.u32 %v1123, 16
      %v1479 = vrot.slane %v1477, 4
      %v1480 = vor.u32 %v1479, %v1475
      %v1481 = vrot.slane %v1480, 4
      %v1483 = vshll.u32 %v1145, 16
      %v1485 = vrot.slane %v1483, 5
      %v1486 = vsel %vm1150, %v1481, %v1485
      %v1488 = vshrl.u32 %v1124, 16
      %v1490 = vrot.slane %v1488, 4
      %v1491 = vshll.u32 %v1124, 16
      %v1493 = vrot.slane %v1491, 5
      %v1494 = vor.u32 %v1490, %v1493
      %v1495 = vrot.slane %v1494, 4
      %v1497 = vshll.u32 %v1125, 16
      %v1499 = vrot.slane %v1497, 5
      %v1500 = vsel %vm1150, %v1495, %v1499
      %v1501 = vshrl.u32 %v1125, 16
      %v1503 = vrot.slane %v1501, 4
      %v1504 = vor.u32 %v1503, %v1499
      %v1505 = vrot.slane %v1504, 4
      %v1507 = vshll.u32 %v1146, 16
      %v1509 = vrot.slane %v1507, 5
      %v1510 = vsel %vm1150, %v1505, %v1509
      %v1512 = vshrl.u32 %v1126, 16
      %v1514 = vrot.slane %v1512, 4
      %v1515 = vshll.u32 %v1126, 16
      %v1517 = vrot.slane %v1515, 5
      %v1518 = vor.u32 %v1514, %v1517
      %v1519 = vrot.slane %v1518, 4
      %v1521 = vshll.u32 %v1127, 16
      %v1523 = vrot.slane %v1521, 5
      %v1524 = vsel %vm1150, %v1519, %v1523
      %v1525 = vshrl.u32 %v1127, 16
      %v1527 = vrot.slane %v1525, 4
      %v1528 = vor.u32 %v1527, %v1523
      %v1529 = vrot.slane %v1528, 4
      %v1531 = vshll.u32 %v1147, 16
      %v1533 = vrot.slane %v1531, 5
      %v1534 = vsel %vm1150, %v1529, %v1533
      %s1535 = scalar_lea.vmem %s3, 16
      %v1536 = vld [vmem:[%s1535] sm:$0xf]
      %v1537 = vld [vmem:[%s1535 + $0x4] sm:$0xf]
      %v1538 = vld [vmem:[%s1535 + $0x8] sm:$0xf]
      %v1539 = vld [vmem:[%s1535 + $0xc] sm:$0xf]
      %v1540 = vunpack.c.l.b16 %v1164
      %v1541 = vunpack.c.l.b16 %v1174
      %v1542 = vunpack.c.l.b16 %v1188
      %v1543 = vunpack.c.l.b16 %v1198
      %v1544 = vunpack.c.l.b16 %v1212
      %v1545 = vunpack.c.l.b16 %v1222
      %v1546 = vunpack.c.l.b16 %v1236
      %v1547 = vunpack.c.l.b16 %v1246
      %v1548 = vunpack.c.l.b16 %v1260
      %v1549 = vunpack.c.l.b16 %v1270
      %v1550 = vunpack.c.l.b16 %v1284
      %v1551 = vunpack.c.l.b16 %v1294
      %v1552 = vunpack.c.l.b16 %v1308
      %v1553 = vunpack.c.l.b16 %v1318
      %v1554 = vunpack.c.l.b16 %v1332
      %v1555 = vunpack.c.l.b16 %v1342
      %v1556 = vunpack.c.l.b16 %v1356
      %v1557 = vunpack.c.l.b16 %v1366
      %v1558 = vunpack.c.l.b16 %v1380
      %v1559 = vunpack.c.l.b16 %v1390
      %v1560 = vunpack.c.l.b16 %v1404
      %v1561 = vunpack.c.l.b16 %v1414
      %v1562 = vunpack.c.l.b16 %v1428
      %v1563 = vunpack.c.l.b16 %v1438
      %v1564 = vunpack.c.l.b16 %v1452
      %v1565 = vunpack.c.l.b16 %v1462
      %v1566 = vunpack.c.l.b16 %v1476
      %v1567 = vunpack.c.l.b16 %v1486
      %v1568 = vunpack.c.l.b16 %v1500
      %v1569 = vunpack.c.l.b16 %v1510
      %v1570 = vunpack.c.l.b16 %v1524
      %v1571 = vunpack.c.l.b16 %v1534
      %v1572 = vpack.c.b16 %v1541, %v1540
      %v1573 = vpack.c.b16 %v1543, %v1542
      %v1574 = vpack.c.b16 %v1545, %v1544
      %v1575 = vpack.c.b16 %v1547, %v1546
      %v1576 = vpack.c.b16 %v1549, %v1548
      %v1577 = vpack.c.b16 %v1551, %v1550
      %v1578 = vpack.c.b16 %v1553, %v1552
      %v1579 = vpack.c.b16 %v1555, %v1554
      %v1580 = vpack.c.b16 %v1557, %v1556
      %v1581 = vpack.c.b16 %v1559, %v1558
      %v1582 = vpack.c.b16 %v1561, %v1560
      %v1583 = vpack.c.b16 %v1563, %v1562
      %v1584 = vpack.c.b16 %v1565, %v1564
      %v1585 = vpack.c.b16 %v1567, %v1566
      %v1586 = vpack.c.b16 %v1569, %v1568
      %v1587 = vpack.c.b16 %v1571, %v1570
      %v1592 = vunpack.c.l.b16 %v1536
      %v1593 = vunpack.c.l.b16 %v1537
      %v1594 = vunpack.c.l.b16 %v1538
      %v1595 = vunpack.c.l.b16 %v1539
      %v1596 = vpack.c.b16 %v1593, %v1592
      %v1597 = vpack.c.b16 %v1595, %v1594
      %v1601 = vsel %vm1094, %v1572, 0
      %v1604 = vsel %vm1094, %v1573, 0
      %v1607 = vsel %vm1094, %v1574, 0
      %v1610 = vsel %vm1094, %v1575, 0
      %v1613 = vsel %vm1094, %v1576, 0
      %v1616 = vsel %vm1094, %v1577, 0
      %v1619 = vsel %vm1094, %v1578, 0
      %v1622 = vsel %vm1094, %v1579, 0
      %v1625 = vsel %vm1094, %v1580, 0
      %v1628 = vsel %vm1094, %v1581, 0
      %v1631 = vsel %vm1094, %v1582, 0
      %v1634 = vsel %vm1094, %v1583, 0
      %v1637 = vsel %vm1094, %v1584, 0
      %v1640 = vsel %vm1094, %v1585, 0
      %v1643 = vsel %vm1094, %v1586, 0
      %v1646 = vsel %vm1094, %v1587, 0
      %1648 = vmatprep.subr.bf16.mxu0 0
      %1649 = vmatpush1.bf16.msra.mxu0 %v1596
      %1650 = vmatprep.subr.bf16.mxu0 0
      %1651 = vmatpush1.bf16.msra.mxu0 %v1597
      %1652 = vmatprep.subr.bf16.mxu0 0
      %1653 = vmatpush1.bf16.msra.mxu0 0
      %1654 = vmatprep.subr.bf16.mxu0 0
      %1655 = vmatpush1.bf16.msra.mxu0 0
      %1656 = vmatprep.subr.bf16.mxu0 0
      %1657 = vmatpush1.bf16.msra.mxu0 0
      %1658 = vmatprep.subr.bf16.mxu0 0
      %1659 = vmatpush1.bf16.msra.mxu0 0
      %1660 = vmatprep.subr.bf16.mxu0 0
      %1661 = vmatpush1.bf16.msra.mxu0 0
      %1662 = vmatprep.subr.bf16.mxu0 0
      %1663 = vmatpush1.bf16.msra.mxu0 0
      %1664 = vmatprep.subr.bf16.mxu0 0
      %1665 = vmatpush1.bf16.msra.mxu0 0
      %1666 = vmatprep.subr.bf16.mxu0 0
      %1667 = vmatpush1.bf16.msra.mxu0 0
      %1668 = vmatprep.subr.bf16.mxu0 0
      %1669 = vmatpush1.bf16.msra.mxu0 0
      %1670 = vmatprep.subr.bf16.mxu0 0
      %1671 = vmatpush1.bf16.msra.mxu0 0
      %1672 = vmatprep.subr.bf16.mxu0 0
      %1673 = vmatpush1.bf16.msra.mxu0 0
      %1674 = vmatprep.subr.bf16.mxu0 0
      %1675 = vmatpush1.bf16.msra.mxu0 0
      %1676 = vmatprep.subr.bf16.mxu0 0
      %1677 = vmatpush1.bf16.msra.mxu0 0
      %1678 = vmatprep.subr.bf16.mxu0 0
      %1679 = vmatpush1.bf16.msra.mxu0 0
      %1680 = vmatprep.mubr.bf16.mxu0 0
      %1681 = vmatmul.mubr.bf16.gmra.mrb[0].mxu0 %v1601
      %v1682 = vpop.f32.mrb[0].mxu0
      %v1683 = vadd.f32 0.0, %v1682
      %v1684 = vpop.f32.mrb[0].mxu0
      %v1685 = vpop.f32.mrb[0].mxu0
      %v1686 = vadd.f32 0.0, %v1685
      %v1687 = vpop.f32.mrb[0].mxu0
      %1688 = vmatprep.mubr.bf16.mxu0 0
      %1689 = vmatmul.mubr.bf16.gmra.mrb[0].mxu0 %v1604
      %v1690 = vpop.f32.mrb[0].mxu0
      %v1691 = vadd.f32 0.0, %v1690
      %v1692 = vpop.f32.mrb[0].mxu0
      %v1693 = vpop.f32.mrb[0].mxu0
      %v1694 = vadd.f32 0.0, %v1693
      %v1695 = vpop.f32.mrb[0].mxu0
      %1696 = vmatprep.mubr.bf16.mxu0 0
      %1697 = vmatmul.mubr.bf16.gmra.mrb[0].mxu0 %v1607
      %v1698 = vpop.f32.mrb[0].mxu0
      %v1699 = vadd.f32 0.0, %v1698
      %v1700 = vpop.f32.mrb[0].mxu0
      %v1701 = vpop.f32.mrb[0].mxu0
      %v1702 = vadd.f32 0.0, %v1701
      %v1703 = vpop.f32.mrb[0].mxu0
      %1704 = vmatprep.mubr.bf16.mxu0 0
      %1705 = vmatmul.mubr.bf16.gmra.mrb[0].mxu0 %v1610
      %v1706 = vpop.f32.mrb[0].mxu0
      %v1707 = vadd.f32 0.0, %v1706
      %v1708 = vpop.f32.mrb[0].mxu0
      %v1709 = vpop.f32.mrb[0].mxu0
      %v1710 = vadd.f32 0.0, %v1709
      %v1711 = vpop.f32.mrb[0].mxu0
      %1712 = vmatprep.mubr.bf16.mxu0 0
      %1713 = vmatmul.mubr.bf16.gmra.mrb[0].mxu0 %v1613
      %v1714 = vpop.f32.mrb[0].mxu0
      %v1715 = vadd.f32 0.0, %v1714
      %v1716 = vpop.f32.mrb[0].mxu0
      %v1717 = vpop.f32.mrb[0].mxu0
      %v1718 = vadd.f32 0.0, %v1717
      %v1719 = vpop.f32.mrb[0].mxu0
      %1720 = vmatprep.mubr.bf16.mxu0 0
      %1721 = vmatmul.mubr.bf16.gmra.mrb[0].mxu0 %v1616
      %v1722 = vpop.f32.mrb[0].mxu0
      %v1723 = vadd.f32 0.0, %v1722
      %v1724 = vpop.f32.mrb[0].mxu0
      %v1725 = vpop.f32.mrb[0].mxu0
      %v1726 = vadd.f32 0.0, %v1725
      %v1727 = vpop.f32.mrb[0].mxu0
      %1728 = vmatprep.mubr.bf16.mxu0 0
      %1729 = vmatmul.mubr.bf16.gmra.mrb[0].mxu0 %v1619
      %v1730 = vpop.f32.mrb[0].mxu0
      %v1731 = vadd.f32 0.0, %v1730
      %v1732 = vpop.f32.mrb[0].mxu0
      %v1733 = vpop.f32.mrb[0].mxu0
      %v1734 = vadd.f32 0.0, %v1733
      %v1735 = vpop.f32.mrb[0].mxu0
      %1736 = vmatprep.mubr.bf16.mxu0 0
      %1737 = vmatmul.mubr.bf16.gmra.mrb[0].mxu0 %v1622
      %v1738 = vpop.f32.mrb[0].mxu0
      %v1739 = vadd.f32 0.0, %v1738
      %v1740 = vpop.f32.mrb[0].mxu0
      %v1741 = vpop.f32.mrb[0].mxu0
      %v1742 = vadd.f32 0.0, %v1741
      %v1743 = vpop.f32.mrb[0].mxu0
      %1744 = vmatprep.mubr.bf16.mxu0 0
      %1745 = vmatmul.mubr.bf16.gmra.mrb[0].mxu0 %v1625
      %v1746 = vpop.f32.mrb[0].mxu0
      %v1747 = vadd.f32 0.0, %v1746
      %v1748 = vpop.f32.mrb[0].mxu0
      %v1749 = vpop.f32.mrb[0].mxu0
      %v1750 = vadd.f32 0.0, %v1749
      %v1751 = vpop.f32.mrb[0].mxu0
      %1752 = vmatprep.mubr.bf16.mxu0 0
      %1753 = vmatmul.mubr.bf16.gmra.mrb[0].mxu0 %v1628
      %v1754 = vpop.f32.mrb[0].mxu0
      %v1755 = vadd.f32 0.0, %v1754
      %v1756 = vpop.f32.mrb[0].mxu0
      %v1757 = vpop.f32.mrb[0].mxu0
      %v1758 = vadd.f32 0.0, %v1757
      %v1759 = vpop.f32.mrb[0].mxu0
      %1760 = vmatprep.mubr.bf16.mxu0 0
      %1761 = vmatmul.mubr.bf16.gmra.mrb[0].mxu0 %v1631
      %v1762 = vpop.f32.mrb[0].mxu0
      %v1763 = vadd.f32 0.0, %v1762
      %v1764 = vpop.f32.mrb[0].mxu0
      %v1765 = vpop.f32.mrb[0].mxu0
      %v1766 = vadd.f32 0.0, %v1765
      %v1767 = vpop.f32.mrb[0].mxu0
      %1768 = vmatprep.mubr.bf16.mxu0 0
      %1769 = vmatmul.mubr.bf16.gmra.mrb[0].mxu0 %v1634
      %v1770 = vpop.f32.mrb[0].mxu0
      %v1771 = vadd.f32 0.0, %v1770
      %v1772 = vpop.f32.mrb[0].mxu0
      %v1773 = vpop.f32.mrb[0].mxu0
      %v1774 = vadd.f32 0.0, %v1773
      %v1775 = vpop.f32.mrb[0].mxu0
      %1776 = vmatprep.mubr.bf16.mxu0 0
      %1777 = vmatmul.mubr.bf16.gmra.mrb[0].mxu0 %v1637
      %v1778 = vpop.f32.mrb[0].mxu0
      %v1779 = vadd.f32 0.0, %v1778
      %v1780 = vpop.f32.mrb[0].mxu0
      %v1781 = vpop.f32.mrb[0].mxu0
      %v1782 = vadd.f32 0.0, %v1781
      %v1783 = vpop.f32.mrb[0].mxu0
      %1784 = vmatprep.mubr.bf16.mxu0 0
      %1785 = vmatmul.mubr.bf16.gmra.mrb[0].mxu0 %v1640
      %v1786 = vpop.f32.mrb[0].mxu0
      %v1787 = vadd.f32 0.0, %v1786
      %v1788 = vpop.f32.mrb[0].mxu0
      %v1789 = vpop.f32.mrb[0].mxu0
      %v1790 = vadd.f32 0.0, %v1789
      %v1791 = vpop.f32.mrb[0].mxu0
      %1792 = vmatprep.mubr.bf16.mxu0 0
      %1793 = vmatmul.mubr.bf16.gmra.mrb[0].mxu0 %v1643
      %v1794 = vpop.f32.mrb[0].mxu0
      %v1795 = vadd.f32 0.0, %v1794
      %v1796 = vpop.f32.mrb[0].mxu0
      %v1797 = vpop.f32.mrb[0].mxu0
      %v1798 = vadd.f32 0.0, %v1797
      %v1799 = vpop.f32.mrb[0].mxu0
      %1800 = vmatprep.mubr.bf16.mxu0 0
      %1801 = vmatmul.mubr.bf16.gmra.mrb[0].mxu0 %v1646
      %v1802 = vpop.f32.mrb[0].mxu0
      %v1803 = vadd.f32 0.0, %v1802
      %v1804 = vpop.f32.mrb[0].mxu0
      %v1805 = vpop.f32.mrb[0].mxu0
      %v1806 = vadd.f32 0.0, %v1805
      %v1807 = vpop.f32.mrb[0].mxu0
      %1808 = vdwg.mxu0
      %v1841 = vunpack.c.l.b16 %v1096
      %v1842 = vunpack.c.l.b16 %v1097
      %v1843 = vunpack.c.l.b16 %v1098
      %v1844 = vunpack.c.l.b16 %v1099
      %v1845 = vunpack.c.l.b16 %v1100
      %v1846 = vunpack.c.l.b16 %v1101
      %v1847 = vunpack.c.l.b16 %v1102
      %v1848 = vunpack.c.l.b16 %v1103
      %v1849 = vunpack.c.l.b16 %v1104
      %v1850 = vunpack.c.l.b16 %v1105
      %v1851 = vunpack.c.l.b16 %v1106
      %v1852 = vunpack.c.l.b16 %v1107
      %v1853 = vunpack.c.l.b16 %v1108
      %v1854 = vunpack.c.l.b16 %v1109
      %v1855 = vunpack.c.l.b16 %v1110
      %v1856 = vunpack.c.l.b16 %v1111
      %v1857 = vunpack.c.l.b16 %v1112
      %v1858 = vunpack.c.l.b16 %v1113
      %v1859 = vunpack.c.l.b16 %v1114
      %v1860 = vunpack.c.l.b16 %v1115
      %v1861 = vunpack.c.l.b16 %v1116
      %v1862 = vunpack.c.l.b16 %v1117
      %v1863 = vunpack.c.l.b16 %v1118
      %v1864 = vunpack.c.l.b16 %v1119
      %v1865 = vunpack.c.l.b16 %v1120
      %v1866 = vunpack.c.l.b16 %v1121
      %v1867 = vunpack.c.l.b16 %v1122
      %v1868 = vunpack.c.l.b16 %v1123
      %v1869 = vunpack.c.l.b16 %v1124
      %v1870 = vunpack.c.l.b16 %v1125
      %v1871 = vunpack.c.l.b16 %v1126
      %v1872 = vunpack.c.l.b16 %v1127
      %v1873 = vpack.c.b16 %v1842, %v1841
      %v1874 = vpack.c.b16 %v1844, %v1843
      %v1875 = vpack.c.b16 %v1846, %v1845
      %v1876 = vpack.c.b16 %v1848, %v1847
      %v1877 = vpack.c.b16 %v1850, %v1849
      %v1878 = vpack.c.b16 %v1852, %v1851
      %v1879 = vpack.c.b16 %v1854, %v1853
      %v1880 = vpack.c.b16 %v1856, %v1855
      %v1881 = vpack.c.b16 %v1858, %v1857
      %v1882 = vpack.c.b16 %v1860, %v1859
      %v1883 = vpack.c.b16 %v1862, %v1861
      %v1884 = vpack.c.b16 %v1864, %v1863
      %v1885 = vpack.c.b16 %v1866, %v1865
      %v1886 = vpack.c.b16 %v1868, %v1867
      %v1887 = vpack.c.b16 %v1870, %v1869
      %v1888 = vpack.c.b16 %v1872, %v1871
      %v1893 = vunpack.c.l.b16 %v1128
      %v1894 = vunpack.c.l.b16 %v1129
      %v1895 = vunpack.c.l.b16 %v1130
      %v1896 = vunpack.c.l.b16 %v1131
      %v1897 = vpack.c.b16 %v1894, %v1893
      %v1898 = vpack.c.b16 %v1896, %v1895
      %v1902 = vsel %vm1094, %v1873, 0
      %v1905 = vsel %vm1094, %v1874, 0
      %v1908 = vsel %vm1094, %v1875, 0
      %v1911 = vsel %vm1094, %v1876, 0
      %v1914 = vsel %vm1094, %v1877, 0
      %v1917 = vsel %vm1094, %v1878, 0
      %v1920 = vsel %vm1094, %v1879, 0
      %v1923 = vsel %vm1094, %v1880, 0
      %v1926 = vsel %vm1094, %v1881, 0
      %v1929 = vsel %vm1094, %v1882, 0
      %v1932 = vsel %vm1094, %v1883, 0
      %v1935 = vsel %vm1094, %v1884, 0
      %v1938 = vsel %vm1094, %v1885, 0
      %v1941 = vsel %vm1094, %v1886, 0
      %v1944 = vsel %vm1094, %v1887, 0
      %v1947 = vsel %vm1094, %v1888, 0
      %1949 = vmatprep.subr.bf16.mxu0 0
      %1950 = vmatpush1.bf16.msra.mxu0 %v1897
      %1951 = vmatprep.subr.bf16.mxu0 0
      %1952 = vmatpush1.bf16.msra.mxu0 %v1898
      %1953 = vmatprep.subr.bf16.mxu0 0
      %1954 = vmatpush1.bf16.msra.mxu0 0
      %1955 = vmatprep.subr.bf16.mxu0 0
      %1956 = vmatpush1.bf16.msra.mxu0 0
      %1957 = vmatprep.subr.bf16.mxu0 0
      %1958 = vmatpush1.bf16.msra.mxu0 0
      %1959 = vmatprep.subr.bf16.mxu0 0
      %1960 = vmatpush1.bf16.msra.mxu0 0
      %1961 = vmatprep.subr.bf16.mxu0 0
      %1962 = vmatpush1.bf16.msra.mxu0 0
      %1963 = vmatprep.subr.bf16.mxu0 0
      %1964 = vmatpush1.bf16.msra.mxu0 0
      %1965 = vmatprep.subr.bf16.mxu0 0
      %1966 = vmatpush1.bf16.msra.mxu0 0
      %1967 = vmatprep.subr.bf16.mxu0 0
      %1968 = vmatpush1.bf16.msra.mxu0 0
      %1969 = vmatprep.subr.bf16.mxu0 0
      %1970 = vmatpush1.bf16.msra.mxu0 0
      %1971 = vmatprep.subr.bf16.mxu0 0
      %1972 = vmatpush1.bf16.msra.mxu0 0
      %1973 = vmatprep.subr.bf16.mxu0 0
      %1974 = vmatpush1.bf16.msra.mxu0 0
      %1975 = vmatprep.subr.bf16.mxu0 0
      %1976 = vmatpush1.bf16.msra.mxu0 0
      %1977 = vmatprep.subr.bf16.mxu0 0
      %1978 = vmatpush1.bf16.msra.mxu0 0
      %1979 = vmatprep.subr.bf16.mxu0 0
      %1980 = vmatpush1.bf16.msra.mxu0 0
      %1981 = vmatprep.mubr.bf16.mxu0 0
      %1982 = vmatmul.mubr.bf16.gmra.mrb[0].mxu0 %v1902
      %v1983 = vpop.f32.mrb[0].mxu0
      %v1984 = vadd.f32 %v1683, %v1983
      %v1985 = vpop.f32.mrb[0].mxu0
      %v1986 = vpop.f32.mrb[0].mxu0
      %v1987 = vadd.f32 %v1686, %v1986
      %v1988 = vpop.f32.mrb[0].mxu0
      %1989 = vmatprep.mubr.bf16.mxu0 0
      %1990 = vmatmul.mubr.bf16.gmra.mrb[0].mxu0 %v1905
      %v1991 = vpop.f32.mrb[0].mxu0
      %v1992 = vadd.f32 %v1691, %v1991
      %v1993 = vpop.f32.mrb[0].mxu0
      %v1994 = vpop.f32.mrb[0].mxu0
      %v1995 = vadd.f32 %v1694, %v1994
      %v1996 = vpop.f32.mrb[0].mxu0
      %1997 = vmatprep.mubr.bf16.mxu0 0
      %1998 = vmatmul.mubr.bf16.gmra.mrb[0].mxu0 %v1908
      %v1999 = vpop.f32.mrb[0].mxu0
      %v2000 = vadd.f32 %v1699, %v1999
      %v2001 = vpop.f32.mrb[0].mxu0
      %v2002 = vpop.f32.mrb[0].mxu0
      %v2003 = vadd.f32 %v1702, %v2002
      %v2004 = vpop.f32.mrb[0].mxu0
      %2005 = vmatprep.mubr.bf16.mxu0 0
      %2006 = vmatmul.mubr.bf16.gmra.mrb[0].mxu0 %v1911
      %v2007 = vpop.f32.mrb[0].mxu0
      %v2008 = vadd.f32 %v1707, %v2007
      %v2009 = vpop.f32.mrb[0].mxu0
      %v2010 = vpop.f32.mrb[0].mxu0
      %v2011 = vadd.f32 %v1710, %v2010
      %v2012 = vpop.f32.mrb[0].mxu0
      %2013 = vmatprep.mubr.bf16.mxu0 0
      %2014 = vmatmul.mubr.bf16.gmra.mrb[0].mxu0 %v1914
      %v2015 = vpop.f32.mrb[0].mxu0
      %v2016 = vadd.f32 %v1715, %v2015
      %v2017 = vpop.f32.mrb[0].mxu0
      %v2018 = vpop.f32.mrb[0].mxu0
      %v2019 = vadd.f32 %v1718, %v2018
      %v2020 = vpop.f32.mrb[0].mxu0
      %2021 = vmatprep.mubr.bf16.mxu0 0
      %2022 = vmatmul.mubr.bf16.gmra.mrb[0].mxu0 %v1917
      %v2023 = vpop.f32.mrb[0].mxu0
      %v2024 = vadd.f32 %v1723, %v2023
      %v2025 = vpop.f32.mrb[0].mxu0
      %v2026 = vpop.f32.mrb[0].mxu0
      %v2027 = vadd.f32 %v1726, %v2026
      %v2028 = vpop.f32.mrb[0].mxu0
      %2029 = vmatprep.mubr.bf16.mxu0 0
      %2030 = vmatmul.mubr.bf16.gmra.mrb[0].mxu0 %v1920
      %v2031 = vpop.f32.mrb[0].mxu0
      %v2032 = vadd.f32 %v1731, %v2031
      %v2033 = vpop.f32.mrb[0].mxu0
      %v2034 = vpop.f32.mrb[0].mxu0
      %v2035 = vadd.f32 %v1734, %v2034
      %v2036 = vpop.f32.mrb[0].mxu0
      %2037 = vmatprep.mubr.bf16.mxu0 0
      %2038 = vmatmul.mubr.bf16.gmra.mrb[0].mxu0 %v1923
      %v2039 = vpop.f32.mrb[0].mxu0
      %v2040 = vadd.f32 %v1739, %v2039
      %v2041 = vpop.f32.mrb[0].mxu0
      %v2042 = vpop.f32.mrb[0].mxu0
      %v2043 = vadd.f32 %v1742, %v2042
      %v2044 = vpop.f32.mrb[0].mxu0
      %2045 = vmatprep.mubr.bf16.mxu0 0
      %2046 = vmatmul.mubr.bf16.gmra.mrb[0].mxu0 %v1926
      %v2047 = vpop.f32.mrb[0].mxu0
      %v2048 = vadd.f32 %v1747, %v2047
      %v2049 = vpop.f32.mrb[0].mxu0
      %v2050 = vpop.f32.mrb[0].mxu0
      %v2051 = vadd.f32 %v1750, %v2050
      %v2052 = vpop.f32.mrb[0].mxu0
      %2053 = vmatprep.mubr.bf16.mxu0 0
      %2054 = vmatmul.mubr.bf16.gmra.mrb[0].mxu0 %v1929
      %v2055 = vpop.f32.mrb[0].mxu0
      %v2056 = vadd.f32 %v1755, %v2055
      %v2057 = vpop.f32.mrb[0].mxu0
      %v2058 = vpop.f32.mrb[0].mxu0
      %v2059 = vadd.f32 %v1758, %v2058
      %v2060 = vpop.f32.mrb[0].mxu0
      %2061 = vmatprep.mubr.bf16.mxu0 0
      %2062 = vmatmul.mubr.bf16.gmra.mrb[0].mxu0 %v1932
      %v2063 = vpop.f32.mrb[0].mxu0
      %v2064 = vadd.f32 %v1763, %v2063
      %v2065 = vpop.f32.mrb[0].mxu0
      %v2066 = vpop.f32.mrb[0].mxu0
      %v2067 = vadd.f32 %v1766, %v2066
      %v2068 = vpop.f32.mrb[0].mxu0
      %2069 = vmatprep.mubr.bf16.mxu0 0
      %2070 = vmatmul.mubr.bf16.gmra.mrb[0].mxu0 %v1935
      %v2071 = vpop.f32.mrb[0].mxu0
      %v2072 = vadd.f32 %v1771, %v2071
      %v2073 = vpop.f32.mrb[0].mxu0
      %v2074 = vpop.f32.mrb[0].mxu0
      %v2075 = vadd.f32 %v1774, %v2074
      %v2076 = vpop.f32.mrb[0].mxu0
      %2077 = vmatprep.mubr.bf16.mxu0 0
      %2078 = vmatmul.mubr.bf16.gmra.mrb[0].mxu0 %v1938
      %v2079 = vpop.f32.mrb[0].mxu0
      %v2080 = vadd.f32 %v1779, %v2079
      %v2081 = vpop.f32.mrb[0].mxu0
      %v2082 = vpop.f32.mrb[0].mxu0
      %v2083 = vadd.f32 %v1782, %v2082
      %v2084 = vpop.f32.mrb[0].mxu0
      %2085 = vmatprep.mubr.bf16.mxu0 0
      %2086 = vmatmul.mubr.bf16.gmra.mrb[0].mxu0 %v1941
      %v2087 = vpop.f32.mrb[0].mxu0
      %v2088 = vadd.f32 %v1787, %v2087
      %v2089 = vpop.f32.mrb[0].mxu0
      %v2090 = vpop.f32.mrb[0].mxu0
      %v2091 = vadd.f32 %v1790, %v2090
      %v2092 = vpop.f32.mrb[0].mxu0
      %2093 = vmatprep.mubr.bf16.mxu0 0
      %2094 = vmatmul.mubr.bf16.gmra.mrb[0].mxu0 %v1944
      %v2095 = vpop.f32.mrb[0].mxu0
      %v2096 = vadd.f32 %v1795, %v2095
      %v2097 = vpop.f32.mrb[0].mxu0
      %v2098 = vpop.f32.mrb[0].mxu0
      %v2099 = vadd.f32 %v1798, %v2098
      %v2100 = vpop.f32.mrb[0].mxu0
      %2101 = vmatprep.mubr.bf16.mxu0 0
      %2102 = vmatmul.mubr.bf16.gmra.mrb[0].mxu0 %v1947
      %v2103 = vpop.f32.mrb[0].mxu0
      %v2104 = vadd.f32 %v1803, %v2103
      %v2105 = vpop.f32.mrb[0].mxu0
      %v2106 = vpop.f32.mrb[0].mxu0
      %v2107 = vadd.f32 %v1806, %v2106
      %v2108 = vpop.f32.mrb[0].mxu0
      %2109 = vdwg.mxu0
      %v2110 = vld [vmem:[#allocation2] sm:$0xe]
      %v2111 = vld [vmem:[#allocation2 + $0xc] sm:$0xe]
      %v2112 = vld [vmem:[#allocation2 + $0x18] sm:$0xe]
      %v2113 = vld [vmem:[#allocation2 + $0x24] sm:$0xe]
      %v2114 = vld [vmem:[#allocation2 + $0x30] sm:$0xe]
      %v2115 = vld [vmem:[#allocation2 + $0x3c] sm:$0xe]
      %v2116 = vld [vmem:[#allocation2 + $0x48] sm:$0xe]
      %v2117 = vld [vmem:[#allocation2 + $0x54] sm:$0xe]
      %v2118 = vld [vmem:[#allocation2 + $0x60] sm:$0xe]
      %v2119 = vld [vmem:[#allocation2 + $0x6c] sm:$0xe]
      %v2120 = vld [vmem:[#allocation2 + $0x78] sm:$0xe]
      %v2121 = vld [vmem:[#allocation2 + $0x84] sm:$0xe]
      %v2122 = vld [vmem:[#allocation2 + $0x90] sm:$0xe]
      %v2123 = vld [vmem:[#allocation2 + $0x9c] sm:$0xe]
      %v2124 = vld [vmem:[#allocation2 + $0xa8] sm:$0xe]
      %v2125 = vld [vmem:[#allocation2 + $0xb4] sm:$0xe]
      %vm2158 = vcmask 1042432
      %vm2159 = vcmask 1046532
      %vm2160 = vmor %vm2158, %vm2159
      %v2161 = vrot.slane %v2110, 5
      %v2162 = vrot.slane %v2161, 4
      %v2163 = vrot.slane %v1097, 5
      %v2164 = vsel %vm2160, %v2162, %v2163
      %v2165 = vrot.slane %v2163, 4
      %v2166 = vrot.slane %v1132, 5
      %v2167 = vsel %vm2160, %v2165, %v2166
      %v2168 = vrot.slane %v2111, 5
      %v2169 = vrot.slane %v2168, 4
      %v2170 = vrot.slane %v1099, 5
      %v2171 = vsel %vm2160, %v2169, %v2170
      %v2172 = vrot.slane %v2170, 4
      %v2173 = vrot.slane %v1133, 5
      %v2174 = vsel %vm2160, %v2172, %v2173
      %v2175 = vrot.slane %v2112, 5
      %v2176 = vrot.slane %v2175, 4
      %v2177 = vrot.slane %v1101, 5
      %v2178 = vsel %vm2160, %v2176, %v2177
      %v2179 = vrot.slane %v2177, 4
      %v2180 = vrot.slane %v1134, 5
      %v2181 = vsel %vm2160, %v2179, %v2180
      %v2182 = vrot.slane %v2113, 5
      %v2183 = vrot.slane %v2182, 4
      %v2184 = vrot.slane %v1103, 5
      %v2185 = vsel %vm2160, %v2183, %v2184
      %v2186 = vrot.slane %v2184, 4
      %v2187 = vrot.slane %v1135, 5
      %v2188 = vsel %vm2160, %v2186, %v2187
      %v2189 = vrot.slane %v2114, 5
      %v2190 = vrot.slane %v2189, 4
      %v2191 = vrot.slane %v1105, 5
      %v2192 = vsel %vm2160, %v2190, %v2191
      %v2193 = vrot.slane %v2191, 4
      %v2194 = vrot.slane %v1136, 5
      %v2195 = vsel %vm2160, %v2193, %v2194
      %v2196 = vrot.slane %v2115, 5
      %v2197 = vrot.slane %v2196, 4
      %v2198 = vrot.slane %v1107, 5
      %v2199 = vsel %vm2160, %v2197, %v2198
      %v2200 = vrot.slane %v2198, 4
      %v2201 = vrot.slane %v1137, 5
      %v2202 = vsel %vm2160, %v2200, %v2201
      %v2203 = vrot.slane %v2116, 5
      %v2204 = vrot.slane %v2203, 4
      %v2205 = vrot.slane %v1109, 5
      %v2206 = vsel %vm2160, %v2204, %v2205
      %v2207 = vrot.slane %v2205, 4
      %v2208 = vrot.slane %v1138, 5
      %v2209 = vsel %vm2160, %v2207, %v2208
      %v2210 = vrot.slane %v2117, 5
      %v2211 = vrot.slane %v2210, 4
      %v2212 = vrot.slane %v1111, 5
      %v2213 = vsel %vm2160, %v2211, %v2212
      %v2214 = vrot.slane %v2212, 4
      %v2215 = vrot.slane %v1139, 5
      %v2216 = vsel %vm2160, %v2214, %v2215
      %v2217 = vrot.slane %v2118, 5
      %v2218 = vrot.slane %v2217, 4
      %v2219 = vrot.slane %v1113, 5
      %v2220 = vsel %vm2160, %v2218, %v2219
      %v2221 = vrot.slane %v2219, 4
      %v2222 = vrot.slane %v1140, 5
      %v2223 = vsel %vm2160, %v2221, %v2222
      %v2224 = vrot.slane %v2119, 5
      %v2225 = vrot.slane %v2224, 4
      %v2226 = vrot.slane %v1115, 5
      %v2227 = vsel %vm2160, %v2225, %v2226
      %v2228 = vrot.slane %v2226, 4
      %v2229 = vrot.slane %v1141, 5
      %v2230 = vsel %vm2160, %v2228, %v2229
      %v2231 = vrot.slane %v2120, 5
      %v2232 = vrot.slane %v2231, 4
      %v2233 = vrot.slane %v1117, 5
      %v2234 = vsel %vm2160, %v2232, %v2233
      %v2235 = vrot.slane %v2233, 4
      %v2236 = vrot.slane %v1142, 5
      %v2237 = vsel %vm2160, %v2235, %v2236
      %v2238 = vrot.slane %v2121, 5
      %v2239 = vrot.slane %v2238, 4
      %v2240 = vrot.slane %v1119, 5
      %v2241 = vsel %vm2160, %v2239, %v2240
      %v2242 = vrot.slane %v2240, 4
      %v2243 = vrot.slane %v1143, 5
      %v2244 = vsel %vm2160, %v2242, %v2243
      %v2245 = vrot.slane %v2122, 5
      %v2246 = vrot.slane %v2245, 4
      %v2247 = vrot.slane %v1121, 5
      %v2248 = vsel %vm2160, %v2246, %v2247
      %v2249 = vrot.slane %v2247, 4
      %v2250 = vrot.slane %v1144, 5
      %v2251 = vsel %vm2160, %v2249, %v2250
      %v2252 = vrot.slane %v2123, 5
      %v2253 = vrot.slane %v2252, 4
      %v2254 = vrot.slane %v1123, 5
      %v2255 = vsel %vm2160, %v2253, %v2254
      %v2256 = vrot.slane %v2254, 4
      %v2257 = vrot.slane %v1145, 5
      %v2258 = vsel %vm2160, %v2256, %v2257
      %v2259 = vrot.slane %v2124, 5
      %v2260 = vrot.slane %v2259, 4
      %v2261 = vrot.slane %v1125, 5
      %v2262 = vsel %vm2160, %v2260, %v2261
      %v2263 = vrot.slane %v2261, 4
      %v2264 = vrot.slane %v1146, 5
      %v2265 = vsel %vm2160, %v2263, %v2264
      %v2266 = vrot.slane %v2125, 5
      %v2267 = vrot.slane %v2266, 4
      %v2268 = vrot.slane %v1127, 5
      %v2269 = vsel %vm2160, %v2267, %v2268
      %v2270 = vrot.slane %v2268, 4
      %v2271 = vrot.slane %v1147, 5
      %v2272 = vsel %vm2160, %v2270, %v2271
      %s2273 = scalar_lea.vmem %s3, 32
      %v2274 = vld [vmem:[%s2273] sm:$0xf]
      %v2275 = vld [vmem:[%s2273 + $0x4] sm:$0xf]
      %v2276 = vld [vmem:[%s2273 + $0x8] sm:$0xf]
      %v2277 = vld [vmem:[%s2273 + $0xc] sm:$0xf]
      %v2278 = vunpack.c.l.b16 %v2164
      %v2279 = vunpack.c.l.b16 %v2167
      %v2280 = vunpack.c.l.b16 %v2171
      %v2281 = vunpack.c.l.b16 %v2174
      %v2282 = vunpack.c.l.b16 %v2178
      %v2283 = vunpack.c.l.b16 %v2181
      %v2284 = vunpack.c.l.b16 %v2185
      %v2285 = vunpack.c.l.b16 %v2188
      %v2286 = vunpack.c.l.b16 %v2192
      %v2287 = vunpack.c.l.b16 %v2195
      %v2288 = vunpack.c.l.b16 %v2199
      %v2289 = vunpack.c.l.b16 %v2202
      %v2290 = vunpack.c.l.b16 %v2206
      %v2291 = vunpack.c.l.b16 %v2209
      %v2292 = vunpack.c.l.b16 %v2213
      %v2293 = vunpack.c.l.b16 %v2216
      %v2294 = vunpack.c.l.b16 %v2220
      %v2295 = vunpack.c.l.b16 %v2223
      %v2296 = vunpack.c.l.b16 %v2227
      %v2297 = vunpack.c.l.b16 %v2230
      %v2298 = vunpack.c.l.b16 %v2234
      %v2299 = vunpack.c.l.b16 %v2237
      %v2300 = vunpack.c.l.b16 %v2241
      %v2301 = vunpack.c.l.b16 %v2244
      %v2302 = vunpack.c.l.b16 %v2248
      %v2303 = vunpack.c.l.b16 %v2251
      %v2304 = vunpack.c.l.b16 %v2255
      %v2305 = vunpack.c.l.b16 %v2258
      %v2306 = vunpack.c.l.b16 %v2262
      %v2307 = vunpack.c.l.b16 %v2265
      %v2308 = vunpack.c.l.b16 %v2269
      %v2309 = vunpack.c.l.b16 %v2272
      %v2310 = vpack.c.b16 %v2279, %v2278
      %v2311 = vpack.c.b16 %v2281, %v2280
      %v2312 = vpack.c.b16 %v2283, %v2282
      %v2313 = vpack.c.b16 %v2285, %v2284
      %v2314 = vpack.c.b16 %v2287, %v2286
      %v2315 = vpack.c.b16 %v2289, %v2288
      %v2316 = vpack.c.b16 %v2291, %v2290
      %v2317 = vpack.c.b16 %v2293, %v2292
      %v2318 = vpack.c.b16 %v2295, %v2294
      %v2319 = vpack.c.b16 %v2297, %v2296
      %v2320 = vpack.c.b16 %v2299, %v2298
      %v2321 = vpack.c.b16 %v2301, %v2300
      %v2322 = vpack.c.b16 %v2303, %v2302
      %v2323 = vpack.c.b16 %v2305, %v2304
      %v2324 = vpack.c.b16 %v2307, %v2306
      %v2325 = vpack.c.b16 %v2309, %v2308
      %v2330 = vunpack.c.l.b16 %v2274
      %v2331 = vunpack.c.l.b16 %v2275
      %v2332 = vunpack.c.l.b16 %v2276
      %v2333 = vunpack.c.l.b16 %v2277
      %v2334 = vpack.c.b16 %v2331, %v2330
      %v2335 = vpack.c.b16 %v2333, %v2332
      %v2339 = vsel %vm1094, %v2310, 0
      %v2342 = vsel %vm1094, %v2311, 0
      %v2345 = vsel %vm1094, %v2312, 0
      %v2348 = vsel %vm1094, %v2313, 0
      %v2351 = vsel %vm1094, %v2314, 0
      %v2354 = vsel %vm1094, %v2315, 0
      %v2357 = vsel %vm1094, %v2316, 0
      %v2360 = vsel %vm1094, %v2317, 0
      %v2363 = vsel %vm1094, %v2318, 0
      %v2366 = vsel %vm1094, %v2319, 0
      %v2369 = vsel %vm1094, %v2320, 0
      %v2372 = vsel %vm1094, %v2321, 0
      %v2375 = vsel %vm1094, %v2322, 0
      %v2378 = vsel %vm1094, %v2323, 0
      %v2381 = vsel %vm1094, %v2324, 0
      %v2384 = vsel %vm1094, %v2325, 0
      %2386 = vmatprep.subr.bf16.mxu0 0
      %2387 = vmatpush1.bf16.msra.mxu0 %v2334
      %2388 = vmatprep.subr.bf16.mxu0 0
      %2389 = vmatpush1.bf16.msra.mxu0 %v2335
      %2390 = vmatprep.subr.bf16.mxu0 0
      %2391 = vmatpush1.bf16.msra.mxu0 0
      %2392 = vmatprep.subr.bf16.mxu0 0
      %2393 = vmatpush1.bf16.msra.mxu0 0
      %2394 = vmatprep.subr.bf16.mxu0 0
      %2395 = vmatpush1.bf16.msra.mxu0 0
      %2396 = vmatprep.subr.bf16.mxu0 0
      %2397 = vmatpush1.bf16.msra.mxu0 0
      %2398 = vmatprep.subr.bf16.mxu0 0
      %2399 = vmatpush1.bf16.msra.mxu0 0
      %2400 = vmatprep.subr.bf16.mxu0 0
      %2401 = vmatpush1.bf16.msra.mxu0 0
      %2402 = vmatprep.subr.bf16.mxu0 0
      %2403 = vmatpush1.bf16.msra.mxu0 0
      %2404 = vmatprep.subr.bf16.mxu0 0
      %2405 = vmatpush1.bf16.msra.mxu0 0
      %2406 = vmatprep.subr.bf16.mxu0 0
      %2407 = vmatpush1.bf16.msra.mxu0 0
      %2408 = vmatprep.subr.bf16.mxu0 0
      %2409 = vmatpush1.bf16.msra.mxu0 0
      %2410 = vmatprep.subr.bf16.mxu0 0
      %2411 = vmatpush1.bf16.msra.mxu0 0
      %2412 = vmatprep.subr.bf16.mxu0 0
      %2413 = vmatpush1.bf16.msra.mxu0 0
      %2414 = vmatprep.subr.bf16.mxu0 0
      %2415 = vmatpush1.bf16.msra.mxu0 0
      %2416 = vmatprep.subr.bf16.mxu0 0
      %2417 = vmatpush1.bf16.msra.mxu0 0
      %2418 = vmatprep.mubr.bf16.mxu0 0
      %2419 = vmatmul.mubr.bf16.gmra.mrb[0].mxu0 %v2339
      %v2420 = vpop.f32.mrb[0].mxu0
      %v2421 = vadd.f32 0.0, %v2420
      %v2422 = vpop.f32.mrb[0].mxu0
      %v2423 = vpop.f32.mrb[0].mxu0
      %v2424 = vadd.f32 0.0, %v2423
      %v2425 = vpop.f32.mrb[0].mxu0
      %2426 = vmatprep.mubr.bf16.mxu0 0
      %2427 = vmatmul.mubr.bf16.gmra.mrb[0].mxu0 %v2342
      %v2428 = vpop.f32.mrb[0].mxu0
      %v2429 = vadd.f32 0.0, %v2428
      %v2430 = vpop.f32.mrb[0].mxu0
      %v2431 = vpop.f32.mrb[0].mxu0
      %v2432 = vadd.f32 0.0, %v2431
      %v2433 = vpop.f32.mrb[0].mxu0
      %2434 = vmatprep.mubr.bf16.mxu0 0
      %2435 = vmatmul.mubr.bf16.gmra.mrb[0].mxu0 %v2345
      %v2436 = vpop.f32.mrb[0].mxu0
      %v2437 = vadd.f32 0.0, %v2436
      %v2438 = vpop.f32.mrb[0].mxu0
      %v2439 = vpop.f32.mrb[0].mxu0
      %v2440 = vadd.f32 0.0, %v2439
      %v2441 = vpop.f32.mrb[0].mxu0
      %2442 = vmatprep.mubr.bf16.mxu0 0
      %2443 = vmatmul.mubr.bf16.gmra.mrb[0].mxu0 %v2348
      %v2444 = vpop.f32.mrb[0].mxu0
      %v2445 = vadd.f32 0.0, %v2444
      %v2446 = vpop.f32.mrb[0].mxu0
      %v2447 = vpop.f32.mrb[0].mxu0
      %v2448 = vadd.f32 0.0, %v2447
      %v2449 = vpop.f32.mrb[0].mxu0
      %2450 = vmatprep.mubr.bf16.mxu0 0
      %2451 = vmatmul.mubr.bf16.gmra.mrb[0].mxu0 %v2351
      %v2452 = vpop.f32.mrb[0].mxu0
      %v2453 = vadd.f32 0.0, %v2452
      %v2454 = vpop.f32.mrb[0].mxu0
      %v2455 = vpop.f32.mrb[0].mxu0
      %v2456 = vadd.f32 0.0, %v2455
      %v2457 = vpop.f32.mrb[0].mxu0
      %2458 = vmatprep.mubr.bf16.mxu0 0
      %2459 = vmatmul.mubr.bf16.gmra.mrb[0].mxu0 %v2354
      %v2460 = vpop.f32.mrb[0].mxu0
      %v2461 = vadd.f32 0.0, %v2460
      %v2462 = vpop.f32.mrb[0].mxu0
      %v2463 = vpop.f32.mrb[0].mxu0
      %v2464 = vadd.f32 0.0, %v2463
      %v2465 = vpop.f32.mrb[0].mxu0
      %2466 = vmatprep.mubr.bf16.mxu0 0
      %2467 = vmatmul.mubr.bf16.gmra.mrb[0].mxu0 %v2357
      %v2468 = vpop.f32.mrb[0].mxu0
      %v2469 = vadd.f32 0.0, %v2468
      %v2470 = vpop.f32.mrb[0].mxu0
      %v2471 = vpop.f32.mrb[0].mxu0
      %v2472 = vadd.f32 0.0, %v2471
      %v2473 = vpop.f32.mrb[0].mxu0
      %2474 = vmatprep.mubr.bf16.mxu0 0
      %2475 = vmatmul.mubr.bf16.gmra.mrb[0].mxu0 %v2360
      %v2476 = vpop.f32.mrb[0].mxu0
      %v2477 = vadd.f32 0.0, %v2476
      %v2478 = vpop.f32.mrb[0].mxu0
      %v2479 = vpop.f32.mrb[0].mxu0
      %v2480 = vadd.f32 0.0, %v2479
      %v2481 = vpop.f32.mrb[0].mxu0
      %2482 = vmatprep.mubr.bf16.mxu0 0
      %2483 = vmatmul.mubr.bf16.gmra.mrb[0].mxu0 %v2363
      %v2484 = vpop.f32.mrb[0].mxu0
      %v2485 = vadd.f32 0.0, %v2484
      %v2486 = vpop.f32.mrb[0].mxu0
      %v2487 = vpop.f32.mrb[0].mxu0
      %v2488 = vadd.f32 0.0, %v2487
      %v2489 = vpop.f32.mrb[0].mxu0
      %2490 = vmatprep.mubr.bf16.mxu0 0
      %2491 = vmatmul.mubr.bf16.gmra.mrb[0].mxu0 %v2366
      %v2492 = vpop.f32.mrb[0].mxu0
      %v2493 = vadd.f32 0.0, %v2492
      %v2494 = vpop.f32.mrb[0].mxu0
      %v2495 = vpop.f32.mrb[0].mxu0
      %v2496 = vadd.f32 0.0, %v2495
      %v2497 = vpop.f32.mrb[0].mxu0
      %2498 = vmatprep.mubr.bf16.mxu0 0
      %2499 = vmatmul.mubr.bf16.gmra.mrb[0].mxu0 %v2369
      %v2500 = vpop.f32.mrb[0].mxu0
      %v2501 = vadd.f32 0.0, %v2500
      %v2502 = vpop.f32.mrb[0].mxu0
      %v2503 = vpop.f32.mrb[0].mxu0
      %v2504 = vadd.f32 0.0, %v2503
      %v2505 = vpop.f32.mrb[0].mxu0
      %2506 = vmatprep.mubr.bf16.mxu0 0
      %2507 = vmatmul.mubr.bf16.gmra.mrb[0].mxu0 %v2372
      %v2508 = vpop.f32.mrb[0].mxu0
      %v2509 = vadd.f32 0.0, %v2508
      %v2510 = vpop.f32.mrb[0].mxu0
      %v2511 = vpop.f32.mrb[0].mxu0
      %v2512 = vadd.f32 0.0, %v2511
      %v2513 = vpop.f32.mrb[0].mxu0
      %2514 = vmatprep.mubr.bf16.mxu0 0
      %2515 = vmatmul.mubr.bf16.gmra.mrb[0].mxu0 %v2375
      %v2516 = vpop.f32.mrb[0].mxu0
      %v2517 = vadd.f32 0.0, %v2516
      %v2518 = vpop.f32.mrb[0].mxu0
      %v2519 = vpop.f32.mrb[0].mxu0
      %v2520 = vadd.f32 0.0, %v2519
      %v2521 = vpop.f32.mrb[0].mxu0
      %2522 = vmatprep.mubr.bf16.mxu0 0
      %2523 = vmatmul.mubr.bf16.gmra.mrb[0].mxu0 %v2378
      %v2524 = vpop.f32.mrb[0].mxu0
      %v2525 = vadd.f32 0.0, %v2524
      %v2526 = vpop.f32.mrb[0].mxu0
      %v2527 = vpop.f32.mrb[0].mxu0
      %v2528 = vadd.f32 0.0, %v2527
      %v2529 = vpop.f32.mrb[0].mxu0
      %2530 = vmatprep.mubr.bf16.mxu0 0
      %2531 = vmatmul.mubr.bf16.gmra.mrb[0].mxu0 %v2381
      %v2532 = vpop.f32.mrb[0].mxu0
      %v2533 = vadd.f32 0.0, %v2532
      %v2534 = vpop.f32.mrb[0].mxu0
      %v2535 = vpop.f32.mrb[0].mxu0
      %v2536 = vadd.f32 0.0, %v2535
      %v2537 = vpop.f32.mrb[0].mxu0
      %2538 = vmatprep.mubr.bf16.mxu0 0
      %2539 = vmatmul.mubr.bf16.gmra.mrb[0].mxu0 %v2384
      %v2540 = vpop.f32.mrb[0].mxu0
      %v2541 = vadd.f32 0.0, %v2540
      %v2542 = vpop.f32.mrb[0].mxu0
      %v2543 = vpop.f32.mrb[0].mxu0
      %v2544 = vadd.f32 0.0, %v2543
      %v2545 = vpop.f32.mrb[0].mxu0
      %2546 = vdwg.mxu0
      %v2547 = vadd.f32 %v1984, %v2421
      %v2548 = vadd.f32 %v1987, %v2424
      %v2549 = vadd.f32 %v1992, %v2429
      %v2550 = vadd.f32 %v1995, %v2432
      %v2551 = vadd.f32 %v2000, %v2437
      %v2552 = vadd.f32 %v2003, %v2440
      %v2553 = vadd.f32 %v2008, %v2445
      %v2554 = vadd.f32 %v2011, %v2448
      %v2555 = vadd.f32 %v2016, %v2453
      %v2556 = vadd.f32 %v2019, %v2456
      %v2557 = vadd.f32 %v2024, %v2461
      %v2558 = vadd.f32 %v2027, %v2464
      %v2559 = vadd.f32 %v2032, %v2469
      %v2560 = vadd.f32 %v2035, %v2472
      %v2561 = vadd.f32 %v2040, %v2477
      %v2562 = vadd.f32 %v2043, %v2480
      %v2563 = vadd.f32 %v2048, %v2485
      %v2564 = vadd.f32 %v2051, %v2488
      %v2565 = vadd.f32 %v2056, %v2493
      %v2566 = vadd.f32 %v2059, %v2496
      %v2567 = vadd.f32 %v2064, %v2501
      %v2568 = vadd.f32 %v2067, %v2504
      %v2569 = vadd.f32 %v2072, %v2509
      %v2570 = vadd.f32 %v2075, %v2512
      %v2571 = vadd.f32 %v2080, %v2517
      %v2572 = vadd.f32 %v2083, %v2520
      %v2573 = vadd.f32 %v2088, %v2525
      %v2574 = vadd.f32 %v2091, %v2528
      %v2575 = vadd.f32 %v2096, %v2533
      %v2576 = vadd.f32 %v2099, %v2536
      %v2577 = vadd.f32 %v2104, %v2541
      %v2578 = vadd.f32 %v2107, %v2544
      %v2579 = vld [vmem:[%s981] sm:$0xf]
      %v2580 = vld [vmem:[%s981 + $0x4] sm:$0xf]
      %v2581 = vld [vmem:[%s981 + $0xc] sm:$0xf]
      %v2582 = vld [vmem:[%s981 + $0x10] sm:$0xf]
      %v2583 = vld [vmem:[%s981 + $0x18] sm:$0xf]
      %v2584 = vld [vmem:[%s981 + $0x1c] sm:$0xf]
      %v2585 = vld [vmem:[%s981 + $0x24] sm:$0xf]
      %v2586 = vld [vmem:[%s981 + $0x28] sm:$0xf]
      %v2587 = vld [vmem:[%s981 + $0x30] sm:$0xf]
      %v2588 = vld [vmem:[%s981 + $0x34] sm:$0xf]
      %v2589 = vld [vmem:[%s981 + $0x3c] sm:$0xf]
      %v2590 = vld [vmem:[%s981 + $0x40] sm:$0xf]
      %v2591 = vld [vmem:[%s981 + $0x48] sm:$0xf]
      %v2592 = vld [vmem:[%s981 + $0x4c] sm:$0xf]
      %v2593 = vld [vmem:[%s981 + $0x54] sm:$0xf]
      %v2594 = vld [vmem:[%s981 + $0x58] sm:$0xf]
      %v2595 = vld [vmem:[%s981 + $0x60] sm:$0xf]
      %v2596 = vld [vmem:[%s981 + $0x64] sm:$0xf]
      %v2597 = vld [vmem:[%s981 + $0x6c] sm:$0xf]
      %v2598 = vld [vmem:[%s981 + $0x70] sm:$0xf]
      %v2599 = vld [vmem:[%s981 + $0x78] sm:$0xf]
      %v2600 = vld [vmem:[%s981 + $0x7c] sm:$0xf]
      %v2601 = vld [vmem:[%s981 + $0x84] sm:$0xf]
      %v2602 = vld [vmem:[%s981 + $0x88] sm:$0xf]
      %v2603 = vld [vmem:[%s981 + $0x90] sm:$0xf]
      %v2604 = vld [vmem:[%s981 + $0x94] sm:$0xf]
      %v2605 = vld [vmem:[%s981 + $0x9c] sm:$0xf]
      %v2606 = vld [vmem:[%s981 + $0xa0] sm:$0xf]
      %v2607 = vld [vmem:[%s981 + $0xa8] sm:$0xf]
      %v2608 = vld [vmem:[%s981 + $0xac] sm:$0xf]
      %v2609 = vld [vmem:[%s981 + $0xb4] sm:$0xf]
      %v2610 = vld [vmem:[%s981 + $0xb8] sm:$0xf]
      %s2611 = scalar_lea.vmem %s3, 48
      %v2612 = vld [vmem:[%s2611] sm:$0xf]
      %v2613 = vld [vmem:[%s2611 + $0x4] sm:$0xf]
      %v2614 = vld [vmem:[%s2611 + $0x8] sm:$0xf]
      %v2615 = vld [vmem:[%s2611 + $0xc] sm:$0xf]
      %v2648 = vunpack.c.l.b16 %v2579
      %v2649 = vunpack.c.l.b16 %v2580
      %v2650 = vunpack.c.l.b16 %v2581
      %v2651 = vunpack.c.l.b16 %v2582
      %v2652 = vunpack.c.l.b16 %v2583
      %v2653 = vunpack.c.l.b16 %v2584
      %v2654 = vunpack.c.l.b16 %v2585
      %v2655 = vunpack.c.l.b16 %v2586
      %v2656 = vunpack.c.l.b16 %v2587
      %v2657 = vunpack.c.l.b16 %v2588
      %v2658 = vunpack.c.l.b16 %v2589
      %v2659 = vunpack.c.l.b16 %v2590
      %v2660 = vunpack.c.l.b16 %v2591
      %v2661 = vunpack.c.l.b16 %v2592
      %v2662 = vunpack.c.l.b16 %v2593
      %v2663 = vunpack.c.l.b16 %v2594
      %v2664 = vunpack.c.l.b16 %v2595
      %v2665 = vunpack.c.l.b16 %v2596
      %v2666 = vunpack.c.l.b16 %v2597
      %v2667 = vunpack.c.l.b16 %v2598
      %v2668 = vunpack.c.l.b16 %v2599
      %v2669 = vunpack.c.l.b16 %v2600
      %v2670 = vunpack.c.l.b16 %v2601
      %v2671 = vunpack.c.l.b16 %v2602
      %v2672 = vunpack.c.l.b16 %v2603
      %v2673 = vunpack.c.l.b16 %v2604
      %v2674 = vunpack.c.l.b16 %v2605
      %v2675 = vunpack.c.l.b16 %v2606
      %v2676 = vunpack.c.l.b16 %v2607
      %v2677 = vunpack.c.l.b16 %v2608
      %v2678 = vunpack.c.l.b16 %v2609
      %v2679 = vunpack.c.l.b16 %v2610
      %v2680 = vpack.c.b16 %v2649, %v2648
      %v2681 = vpack.c.b16 %v2651, %v2650
      %v2682 = vpack.c.b16 %v2653, %v2652
      %v2683 = vpack.c.b16 %v2655, %v2654
      %v2684 = vpack.c.b16 %v2657, %v2656
      %v2685 = vpack.c.b16 %v2659, %v2658
      %v2686 = vpack.c.b16 %v2661, %v2660
      %v2687 = vpack.c.b16 %v2663, %v2662
      %v2688 = vpack.c.b16 %v2665, %v2664
      %v2689 = vpack.c.b16 %v2667, %v2666
      %v2690 = vpack.c.b16 %v2669, %v2668
      %v2691 = vpack.c.b16 %v2671, %v2670
      %v2692 = vpack.c.b16 %v2673, %v2672
      %v2693 = vpack.c.b16 %v2675, %v2674
      %v2694 = vpack.c.b16 %v2677, %v2676
      %v2695 = vpack.c.b16 %v2679, %v2678
      %v2700 = vunpack.c.l.b16 %v2612
      %v2701 = vunpack.c.l.b16 %v2613
      %v2702 = vunpack.c.l.b16 %v2614
      %v2703 = vunpack.c.l.b16 %v2615
      %v2704 = vpack.c.b16 %v2701, %v2700
      %v2705 = vpack.c.b16 %v2703, %v2702
      %v2709 = vsel %vm1094, %v2680, 0
      %v2712 = vsel %vm1094, %v2681, 0
      %v2715 = vsel %vm1094, %v2682, 0
      %v2718 = vsel %vm1094, %v2683, 0
      %v2721 = vsel %vm1094, %v2684, 0
      %v2724 = vsel %vm1094, %v2685, 0
      %v2727 = vsel %vm1094, %v2686, 0
      %v2730 = vsel %vm1094, %v2687, 0
      %v2733 = vsel %vm1094, %v2688, 0
      %v2736 = vsel %vm1094, %v2689, 0
      %v2739 = vsel %vm1094, %v2690, 0
      %v2742 = vsel %vm1094, %v2691, 0
      %v2745 = vsel %vm1094, %v2692, 0
      %v2748 = vsel %vm1094, %v2693, 0
      %v2751 = vsel %vm1094, %v2694, 0
      %v2754 = vsel %vm1094, %v2695, 0
      %2756 = vmatprep.subr.bf16.mxu0 0
      %2757 = vmatpush1.bf16.msra.mxu0 %v2704
      %2758 = vmatprep.subr.bf16.mxu0 0
      %2759 = vmatpush1.bf16.msra.mxu0 %v2705
      %2760 = vmatprep.subr.bf16.mxu0 0
      %2761 = vmatpush1.bf16.msra.mxu0 0
      %2762 = vmatprep.subr.bf16.mxu0 0
      %2763 = vmatpush1.bf16.msra.mxu0 0
      %2764 = vmatprep.subr.bf16.mxu0 0
      %2765 = vmatpush1.bf16.msra.mxu0 0
      %2766 = vmatprep.subr.bf16.mxu0 0
      %2767 = vmatpush1.bf16.msra.mxu0 0
      %2768 = vmatprep.subr.bf16.mxu0 0
      %2769 = vmatpush1.bf16.msra.mxu0 0
      %2770 = vmatprep.subr.bf16.mxu0 0
      %2771 = vmatpush1.bf16.msra.mxu0 0
      %2772 = vmatprep.subr.bf16.mxu0 0
      %2773 = vmatpush1.bf16.msra.mxu0 0
      %2774 = vmatprep.subr.bf16.mxu0 0
      %2775 = vmatpush1.bf16.msra.mxu0 0
      %2776 = vmatprep.subr.bf16.mxu0 0
      %2777 = vmatpush1.bf16.msra.mxu0 0
      %2778 = vmatprep.subr.bf16.mxu0 0
      %2779 = vmatpush1.bf16.msra.mxu0 0
      %2780 = vmatprep.subr.bf16.mxu0 0
      %2781 = vmatpush1.bf16.msra.mxu0 0
      %2782 = vmatprep.subr.bf16.mxu0 0
      %2783 = vmatpush1.bf16.msra.mxu0 0
      %2784 = vmatprep.subr.bf16.mxu0 0
      %2785 = vmatpush1.bf16.msra.mxu0 0
      %2786 = vmatprep.subr.bf16.mxu0 0
      %2787 = vmatpush1.bf16.msra.mxu0 0
      %2788 = vmatprep.mubr.bf16.mxu0 0
      %2789 = vmatmul.mubr.bf16.gmra.mrb[0].mxu0 %v2709
      %v2790 = vpop.f32.mrb[0].mxu0
      %v2791 = vadd.f32 0.0, %v2790
      %v2792 = vpop.f32.mrb[0].mxu0
      %v2793 = vpop.f32.mrb[0].mxu0
      %v2794 = vadd.f32 0.0, %v2793
      %v2795 = vpop.f32.mrb[0].mxu0
      %2796 = vmatprep.mubr.bf16.mxu0 0
      %2797 = vmatmul.mubr.bf16.gmra.mrb[0].mxu0 %v2712
      %v2798 = vpop.f32.mrb[0].mxu0
      %v2799 = vadd.f32 0.0, %v2798
      %v2800 = vpop.f32.mrb[0].mxu0
      %v2801 = vpop.f32.mrb[0].mxu0
      %v2802 = vadd.f32 0.0, %v2801
      %v2803 = vpop.f32.mrb[0].mxu0
      %2804 = vmatprep.mubr.bf16.mxu0 0
      %2805 = vmatmul.mubr.bf16.gmra.mrb[0].mxu0 %v2715
      %v2806 = vpop.f32.mrb[0].mxu0
      %v2807 = vadd.f32 0.0, %v2806
      %v2808 = vpop.f32.mrb[0].mxu0
      %v2809 = vpop.f32.mrb[0].mxu0
      %v2810 = vadd.f32 0.0, %v2809
      %v2811 = vpop.f32.mrb[0].mxu0
      %2812 = vmatprep.mubr.bf16.mxu0 0
      %2813 = vmatmul.mubr.bf16.gmra.mrb[0].mxu0 %v2718
      %v2814 = vpop.f32.mrb[0].mxu0
      %v2815 = vadd.f32 0.0, %v2814
      %v2816 = vpop.f32.mrb[0].mxu0
      %v2817 = vpop.f32.mrb[0].mxu0
      %v2818 = vadd.f32 0.0, %v2817
      %v2819 = vpop.f32.mrb[0].mxu0
      %2820 = vmatprep.mubr.bf16.mxu0 0
      %2821 = vmatmul.mubr.bf16.gmra.mrb[0].mxu0 %v2721
      %v2822 = vpop.f32.mrb[0].mxu0
      %v2823 = vadd.f32 0.0, %v2822
      %v2824 = vpop.f32.mrb[0].mxu0
      %v2825 = vpop.f32.mrb[0].mxu0
      %v2826 = vadd.f32 0.0, %v2825
      %v2827 = vpop.f32.mrb[0].mxu0
      %2828 = vmatprep.mubr.bf16.mxu0 0
      %2829 = vmatmul.mubr.bf16.gmra.mrb[0].mxu0 %v2724
      %v2830 = vpop.f32.mrb[0].mxu0
      %v2831 = vadd.f32 0.0, %v2830
      %v2832 = vpop.f32.mrb[0].mxu0
      %v2833 = vpop.f32.mrb[0].mxu0
      %v2834 = vadd.f32 0.0, %v2833
      %v2835 = vpop.f32.mrb[0].mxu0
      %2836 = vmatprep.mubr.bf16.mxu0 0
      %2837 = vmatmul.mubr.bf16.gmra.mrb[0].mxu0 %v2727
      %v2838 = vpop.f32.mrb[0].mxu0
      %v2839 = vadd.f32 0.0, %v2838
      %v2840 = vpop.f32.mrb[0].mxu0
      %v2841 = vpop.f32.mrb[0].mxu0
      %v2842 = vadd.f32 0.0, %v2841
      %v2843 = vpop.f32.mrb[0].mxu0
      %2844 = vmatprep.mubr.bf16.mxu0 0
      %2845 = vmatmul.mubr.bf16.gmra.mrb[0].mxu0 %v2730
      %v2846 = vpop.f32.mrb[0].mxu0
      %v2847 = vadd.f32 0.0, %v2846
      %v2848 = vpop.f32.mrb[0].mxu0
      %v2849 = vpop.f32.mrb[0].mxu0
      %v2850 = vadd.f32 0.0, %v2849
      %v2851 = vpop.f32.mrb[0].mxu0
      %2852 = vmatprep.mubr.bf16.mxu0 0
      %2853 = vmatmul.mubr.bf16.gmra.mrb[0].mxu0 %v2733
      %v2854 = vpop.f32.mrb[0].mxu0
      %v2855 = vadd.f32 0.0, %v2854
      %v2856 = vpop.f32.mrb[0].mxu0
      %v2857 = vpop.f32.mrb[0].mxu0
      %v2858 = vadd.f32 0.0, %v2857
      %v2859 = vpop.f32.mrb[0].mxu0
      %2860 = vmatprep.mubr.bf16.mxu0 0
      %2861 = vmatmul.mubr.bf16.gmra.mrb[0].mxu0 %v2736
      %v2862 = vpop.f32.mrb[0].mxu0
      %v2863 = vadd.f32 0.0, %v2862
      %v2864 = vpop.f32.mrb[0].mxu0
      %v2865 = vpop.f32.mrb[0].mxu0
      %v2866 = vadd.f32 0.0, %v2865
      %v2867 = vpop.f32.mrb[0].mxu0
      %2868 = vmatprep.mubr.bf16.mxu0 0
      %2869 = vmatmul.mubr.bf16.gmra.mrb[0].mxu0 %v2739
      %v2870 = vpop.f32.mrb[0].mxu0
      %v2871 = vadd.f32 0.0, %v2870
      %v2872 = vpop.f32.mrb[0].mxu0
      %v2873 = vpop.f32.mrb[0].mxu0
      %v2874 = vadd.f32 0.0, %v2873
      %v2875 = vpop.f32.mrb[0].mxu0
      %2876 = vmatprep.mubr.bf16.mxu0 0
      %2877 = vmatmul.mubr.bf16.gmra.mrb[0].mxu0 %v2742
      %v2878 = vpop.f32.mrb[0].mxu0
      %v2879 = vadd.f32 0.0, %v2878
      %v2880 = vpop.f32.mrb[0].mxu0
      %v2881 = vpop.f32.mrb[0].mxu0
      %v2882 = vadd.f32 0.0, %v2881
      %v2883 = vpop.f32.mrb[0].mxu0
      %2884 = vmatprep.mubr.bf16.mxu0 0
      %2885 = vmatmul.mubr.bf16.gmra.mrb[0].mxu0 %v2745
      %v2886 = vpop.f32.mrb[0].mxu0
      %v2887 = vadd.f32 0.0, %v2886
      %v2888 = vpop.f32.mrb[0].mxu0
      %v2889 = vpop.f32.mrb[0].mxu0
      %v2890 = vadd.f32 0.0, %v2889
      %v2891 = vpop.f32.mrb[0].mxu0
      %2892 = vmatprep.mubr.bf16.mxu0 0
      %2893 = vmatmul.mubr.bf16.gmra.mrb[0].mxu0 %v2748
      %v2894 = vpop.f32.mrb[0].mxu0
      %v2895 = vadd.f32 0.0, %v2894
      %v2896 = vpop.f32.mrb[0].mxu0
      %v2897 = vpop.f32.mrb[0].mxu0
      %v2898 = vadd.f32 0.0, %v2897
      %v2899 = vpop.f32.mrb[0].mxu0
      %2900 = vmatprep.mubr.bf16.mxu0 0
      %2901 = vmatmul.mubr.bf16.gmra.mrb[0].mxu0 %v2751
      %v2902 = vpop.f32.mrb[0].mxu0
      %v2903 = vadd.f32 0.0, %v2902
      %v2904 = vpop.f32.mrb[0].mxu0
      %v2905 = vpop.f32.mrb[0].mxu0
      %v2906 = vadd.f32 0.0, %v2905
      %v2907 = vpop.f32.mrb[0].mxu0
      %2908 = vmatprep.mubr.bf16.mxu0 0
      %2909 = vmatmul.mubr.bf16.gmra.mrb[0].mxu0 %v2754
      %v2910 = vpop.f32.mrb[0].mxu0
      %v2911 = vadd.f32 0.0, %v2910
      %v2912 = vpop.f32.mrb[0].mxu0
      %v2913 = vpop.f32.mrb[0].mxu0
      %v2914 = vadd.f32 0.0, %v2913
      %v2915 = vpop.f32.mrb[0].mxu0
      %2916 = vdwg.mxu0
      %v2917 = vadd.f32 %v2547, %v2791
      %v2918 = vadd.f32 %v2548, %v2794
      %v2919 = vadd.f32 %v2549, %v2799
      %v2920 = vadd.f32 %v2550, %v2802
      %v2921 = vadd.f32 %v2551, %v2807
      %v2922 = vadd.f32 %v2552, %v2810
      %v2923 = vadd.f32 %v2553, %v2815
      %v2924 = vadd.f32 %v2554, %v2818
      %v2925 = vadd.f32 %v2555, %v2823
      %v2926 = vadd.f32 %v2556, %v2826
      %v2927 = vadd.f32 %v2557, %v2831
      %v2928 = vadd.f32 %v2558, %v2834
      %v2929 = vadd.f32 %v2559, %v2839
      %v2930 = vadd.f32 %v2560, %v2842
      %v2931 = vadd.f32 %v2561, %v2847
      %v2932 = vadd.f32 %v2562, %v2850
      %v2933 = vadd.f32 %v2563, %v2855
      %v2934 = vadd.f32 %v2564, %v2858
      %v2935 = vadd.f32 %v2565, %v2863
      %v2936 = vadd.f32 %v2566, %v2866
      %v2937 = vadd.f32 %v2567, %v2871
      %v2938 = vadd.f32 %v2568, %v2874
      %v2939 = vadd.f32 %v2569, %v2879
      %v2940 = vadd.f32 %v2570, %v2882
      %v2941 = vadd.f32 %v2571, %v2887
      %v2942 = vadd.f32 %v2572, %v2890
      %v2943 = vadd.f32 %v2573, %v2895
      %v2944 = vadd.f32 %v2574, %v2898
      %v2945 = vadd.f32 %v2575, %v2903
      %v2946 = vadd.f32 %v2576, %v2906
      %v2947 = vadd.f32 %v2577, %v2911
      %v2948 = vadd.f32 %v2578, %v2914
      %v2949 = vld [vmem:[%s981] sm:$0xf]
      %v2950 = vld [vmem:[%s981 + $0x4] sm:$0xf]
      %v2951 = vld [vmem:[%s981 + $0x8] sm:$0x1]
      %v2952 = vld [vmem:[%s981 + $0xc] sm:$0xf]
      %v2953 = vld [vmem:[%s981 + $0x10] sm:$0xf]
      %v2954 = vld [vmem:[%s981 + $0x14] sm:$0x1]
      %v2955 = vld [vmem:[%s981 + $0x18] sm:$0xf]
      %v2956 = vld [vmem:[%s981 + $0x1c] sm:$0xf]
      %v2957 = vld [vmem:[%s981 + $0x20] sm:$0x1]
      %v2958 = vld [vmem:[%s981 + $0x24] sm:$0xf]
      %v2959 = vld [vmem:[%s981 + $0x28] sm:$0xf]
      %v2960 = vld [vmem:[%s981 + $0x2c] sm:$0x1]
      %v2961 = vld [vmem:[%s981 + $0x30] sm:$0xf]
      %v2962 = vld [vmem:[%s981 + $0x34] sm:$0xf]
      %v2963 = vld [vmem:[%s981 + $0x38] sm:$0x1]
      %v2964 = vld [vmem:[%s981 + $0x3c] sm:$0xf]
      %v2965 = vld [vmem:[%s981 + $0x40] sm:$0xf]
      %v2966 = vld [vmem:[%s981 + $0x44] sm:$0x1]
      %v2967 = vld [vmem:[%s981 + $0x48] sm:$0xf]
      %v2968 = vld [vmem:[%s981 + $0x4c] sm:$0xf]
      %v2969 = vld [vmem:[%s981 + $0x50] sm:$0x1]
      %v2970 = vld [vmem:[%s981 + $0x54] sm:$0xf]
      %v2971 = vld [vmem:[%s981 + $0x58] sm:$0xf]
      %v2972 = vld [vmem:[%s981 + $0x5c] sm:$0x1]
      %v2973 = vld [vmem:[%s981 + $0x60] sm:$0xf]
      %v2974 = vld [vmem:[%s981 + $0x64] sm:$0xf]
      %v2975 = vld [vmem:[%s981 + $0x68] sm:$0x1]
      %v2976 = vld [vmem:[%s981 + $0x6c] sm:$0xf]
      %v2977 = vld [vmem:[%s981 + $0x70] sm:$0xf]
      %v2978 = vld [vmem:[%s981 + $0x74] sm:$0x1]
      %v2979 = vld [vmem:[%s981 + $0x78] sm:$0xf]
      %v2980 = vld [vmem:[%s981 + $0x7c] sm:$0xf]
      %v2981 = vld [vmem:[%s981 + $0x80] sm:$0x1]
      %v2982 = vld [vmem:[%s981 + $0x84] sm:$0xf]
      %v2983 = vld [vmem:[%s981 + $0x88] sm:$0xf]
      %v2984 = vld [vmem:[%s981 + $0x8c] sm:$0x1]
      %v2985 = vld [vmem:[%s981 + $0x90] sm:$0xf]
      %v2986 = vld [vmem:[%s981 + $0x94] sm:$0xf]
      %v2987 = vld [vmem:[%s981 + $0x98] sm:$0x1]
      %v2988 = vld [vmem:[%s981 + $0x9c] sm:$0xf]
      %v2989 = vld [vmem:[%s981 + $0xa0] sm:$0xf]
      %v2990 = vld [vmem:[%s981 + $0xa4] sm:$0x1]
      %v2991 = vld [vmem:[%s981 + $0xa8] sm:$0xf]
      %v2992 = vld [vmem:[%s981 + $0xac] sm:$0xf]
      %v2993 = vld [vmem:[%s981 + $0xb0] sm:$0x1]
      %v2994 = vld [vmem:[%s981 + $0xb4] sm:$0xf]
      %v2995 = vld [vmem:[%s981 + $0xb8] sm:$0xf]
      %v2996 = vld [vmem:[%s981 + $0xbc] sm:$0x1]
      %v2998 = vshrl.u32 %v2949, 16
      %v3000 = vrot.slane %v2998, 4
      %v3001 = vshll.u32 %v2949, 16
      %v3003 = vrot.slane %v3001, 5
      %v3004 = vor.u32 %v3000, %v3003
      %v3005 = vrot.slane %v3004, 4
      %v3007 = vshll.u32 %v2950, 16
      %v3009 = vrot.slane %v3007, 5
      %v3010 = vsel %vm1150, %v3005, %v3009
      %v3011 = vshrl.u32 %v2950, 16
      %v3013 = vrot.slane %v3011, 4
      %v3014 = vor.u32 %v3013, %v3009
      %v3015 = vrot.slane %v3014, 4
      %v3017 = vshll.u32 %v2951, 16
      %v3019 = vrot.slane %v3017, 5
      %v3020 = vsel %vm1150, %v3015, %v3019
      %v3022 = vshrl.u32 %v2952, 16
      %v3024 = vrot.slane %v3022, 4
      %v3025 = vshll.u32 %v2952, 16
      %v3027 = vrot.slane %v3025, 5
      %v3028 = vor.u32 %v3024, %v3027
      %v3029 = vrot.slane %v3028, 4
      %v3031 = vshll.u32 %v2953, 16
      %v3033 = vrot.slane %v3031, 5
      %v3034 = vsel %vm1150, %v3029, %v3033
      %v3035 = vshrl.u32 %v2953, 16
      %v3037 = vrot.slane %v3035, 4
      %v3038 = vor.u32 %v3037, %v3033
      %v3039 = vrot.slane %v3038, 4
      %v3041 = vshll.u32 %v2954, 16
      %v3043 = vrot.slane %v3041, 5
      %v3044 = vsel %vm1150, %v3039, %v3043
      %v3046 = vshrl.u32 %v2955, 16
      %v3048 = vrot.slane %v3046, 4
      %v3049 = vshll.u32 %v2955, 16
      %v3051 = vrot.slane %v3049, 5
      %v3052 = vor.u32 %v3048, %v3051
      %v3053 = vrot.slane %v3052, 4
      %v3055 = vshll.u32 %v2956, 16
      %v3057 = vrot.slane %v3055, 5
      %v3058 = vsel %vm1150, %v3053, %v3057
      %v3059 = vshrl.u32 %v2956, 16
      %v3061 = vrot.slane %v3059, 4
      %v3062 = vor.u32 %v3061, %v3057
      %v3063 = vrot.slane %v3062, 4
      %v3065 = vshll.u32 %v2957, 16
      %v3067 = vrot.slane %v3065, 5
      %v3068 = vsel %vm1150, %v3063, %v3067
      %v3070 = vshrl.u32 %v2958, 16
      %v3072 = vrot.slane %v3070, 4
      %v3073 = vshll.u32 %v2958, 16
      %v3075 = vrot.slane %v3073, 5
      %v3076 = vor.u32 %v3072, %v3075
      %v3077 = vrot.slane %v3076, 4
      %v3079 = vshll.u32 %v2959, 16
      %v3081 = vrot.slane %v3079, 5
      %v3082 = vsel %vm1150, %v3077, %v3081
      %v3083 = vshrl.u32 %v2959, 16
      %v3085 = vrot.slane %v3083, 4
      %v3086 = vor.u32 %v3085, %v3081
      %v3087 = vrot.slane %v3086, 4
      %v3089 = vshll.u32 %v2960, 16
      %v3091 = vrot.slane %v3089, 5
      %v3092 = vsel %vm1150, %v3087, %v3091
      %v3094 = vshrl.u32 %v2961, 16
      %v3096 = vrot.slane %v3094, 4
      %v3097 = vshll.u32 %v2961, 16
      %v3099 = vrot.slane %v3097, 5
      %v3100 = vor.u32 %v3096, %v3099
      %v3101 = vrot.slane %v3100, 4
      %v3103 = vshll.u32 %v2962, 16
      %v3105 = vrot.slane %v3103, 5
      %v3106 = vsel %vm1150, %v3101, %v3105
      %v3107 = vshrl.u32 %v2962, 16
      %v3109 = vrot.slane %v3107, 4
      %v3110 = vor.u32 %v3109, %v3105
      %v3111 = vrot.slane %v3110, 4
      %v3113 = vshll.u32 %v2963, 16
      %v3115 = vrot.slane %v3113, 5
      %v3116 = vsel %vm1150, %v3111, %v3115
      %v3118 = vshrl.u32 %v2964, 16
      %v3120 = vrot.slane %v3118, 4
      %v3121 = vshll.u32 %v2964, 16
      %v3123 = vrot.slane %v3121, 5
      %v3124 = vor.u32 %v3120, %v3123
      %v3125 = vrot.slane %v3124, 4
      %v3127 = vshll.u32 %v2965, 16
      %v3129 = vrot.slane %v3127, 5
      %v3130 = vsel %vm1150, %v3125, %v3129
      %v3131 = vshrl.u32 %v2965, 16
      %v3133 = vrot.slane %v3131, 4
      %v3134 = vor.u32 %v3133, %v3129
      %v3135 = vrot.slane %v3134, 4
      %v3137 = vshll.u32 %v2966, 16
      %v3139 = vrot.slane %v3137, 5
      %v3140 = vsel %vm1150, %v3135, %v3139
      %v3142 = vshrl.u32 %v2967, 16
      %v3144 = vrot.slane %v3142, 4
      %v3145 = vshll.u32 %v2967, 16
      %v3147 = vrot.slane %v3145, 5
      %v3148 = vor.u32 %v3144, %v3147
      %v3149 = vrot.slane %v3148, 4
      %v3151 = vshll.u32 %v2968, 16
      %v3153 = vrot.slane %v3151, 5
      %v3154 = vsel %vm1150, %v3149, %v3153
      %v3155 = vshrl.u32 %v2968, 16
      %v3157 = vrot.slane %v3155, 4
      %v3158 = vor.u32 %v3157, %v3153
      %v3159 = vrot.slane %v3158, 4
      %v3161 = vshll.u32 %v2969, 16
      %v3163 = vrot.slane %v3161, 5
      %v3164 = vsel %vm1150, %v3159, %v3163
      %v3166 = vshrl.u32 %v2970, 16
      %v3168 = vrot.slane %v3166, 4
      %v3169 = vshll.u32 %v2970, 16
      %v3171 = vrot.slane %v3169, 5
      %v3172 = vor.u32 %v3168, %v3171
      %v3173 = vrot.slane %v3172, 4
      %v3175 = vshll.u32 %v2971, 16
      %v3177 = vrot.slane %v3175, 5
      %v3178 = vsel %vm1150, %v3173, %v3177
      %v3179 = vshrl.u32 %v2971, 16
      %v3181 = vrot.slane %v3179, 4
      %v3182 = vor.u32 %v3181, %v3177
      %v3183 = vrot.slane %v3182, 4
      %v3185 = vshll.u32 %v2972, 16
      %v3187 = vrot.slane %v3185, 5
      %v3188 = vsel %vm1150, %v3183, %v3187
      %v3190 = vshrl.u32 %v2973, 16
      %v3192 = vrot.slane %v3190, 4
      %v3193 = vshll.u32 %v2973, 16
      %v3195 = vrot.slane %v3193, 5
      %v3196 = vor.u32 %v3192, %v3195
      %v3197 = vrot.slane %v3196, 4
      %v3199 = vshll.u32 %v2974, 16
      %v3201 = vrot.slane %v3199, 5
      %v3202 = vsel %vm1150, %v3197, %v3201
      %v3203 = vshrl.u32 %v2974, 16
      %v3205 = vrot.slane %v3203, 4
      %v3206 = vor.u32 %v3205, %v3201
      %v3207 = vrot.slane %v3206, 4
      %v3209 = vshll.u32 %v2975, 16
      %v3211 = vrot.slane %v3209, 5
      %v3212 = vsel %vm1150, %v3207, %v3211
      %v3214 = vshrl.u32 %v2976, 16
      %v3216 = vrot.slane %v3214, 4
      %v3217 = vshll.u32 %v2976, 16
      %v3219 = vrot.slane %v3217, 5
      %v3220 = vor.u32 %v3216, %v3219
      %v3221 = vrot.slane %v3220, 4
      %v3223 = vshll.u32 %v2977, 16
      %v3225 = vrot.slane %v3223, 5
      %v3226 = vsel %vm1150, %v3221, %v3225
      %v3227 = vshrl.u32 %v2977, 16
      %v3229 = vrot.slane %v3227, 4
      %v3230 = vor.u32 %v3229, %v3225
      %v3231 = vrot.slane %v3230, 4
      %v3233 = vshll.u32 %v2978, 16
      %v3235 = vrot.slane %v3233, 5
      %v3236 = vsel %vm1150, %v3231, %v3235
      %v3238 = vshrl.u32 %v2979, 16
      %v3240 = vrot.slane %v3238, 4
      %v3241 = vshll.u32 %v2979, 16
      %v3243 = vrot.slane %v3241, 5
      %v3244 = vor.u32 %v3240, %v3243
      %v3245 = vrot.slane %v3244, 4
      %v3247 = vshll.u32 %v2980, 16
      %v3249 = vrot.slane %v3247, 5
      %v3250 = vsel %vm1150, %v3245, %v3249
      %v3251 = vshrl.u32 %v2980, 16
      %v3253 = vrot.slane %v3251, 4
      %v3254 = vor.u32 %v3253, %v3249
      %v3255 = vrot.slane %v3254, 4
      %v3257 = vshll.u32 %v2981, 16
      %v3259 = vrot.slane %v3257, 5
      %v3260 = vsel %vm1150, %v3255, %v3259
      %v3262 = vshrl.u32 %v2982, 16
      %v3264 = vrot.slane %v3262, 4
      %v3265 = vshll.u32 %v2982, 16
      %v3267 = vrot.slane %v3265, 5
      %v3268 = vor.u32 %v3264, %v3267
      %v3269 = vrot.slane %v3268, 4
      %v3271 = vshll.u32 %v2983, 16
      %v3273 = vrot.slane %v3271, 5
      %v3274 = vsel %vm1150, %v3269, %v3273
      %v3275 = vshrl.u32 %v2983, 16
      %v3277 = vrot.slane %v3275, 4
      %v3278 = vor.u32 %v3277, %v3273
      %v3279 = vrot.slane %v3278, 4
      %v3281 = vshll.u32 %v2984, 16
      %v3283 = vrot.slane %v3281, 5
      %v3284 = vsel %vm1150, %v3279, %v3283
      %v3286 = vshrl.u32 %v2985, 16
      %v3288 = vrot.slane %v3286, 4
      %v3289 = vshll.u32 %v2985, 16
      %v3291 = vrot.slane %v3289, 5
      %v3292 = vor.u32 %v3288, %v3291
      %v3293 = vrot.slane %v3292, 4
      %v3295 = vshll.u32 %v2986, 16
      %v3297 = vrot.slane %v3295, 5
      %v3298 = vsel %vm1150, %v3293, %v3297
      %v3299 = vshrl.u32 %v2986, 16
      %v3301 = vrot.slane %v3299, 4
      %v3302 = vor.u32 %v3301, %v3297
      %v3303 = vrot.slane %v3302, 4
      %v3305 = vshll.u32 %v2987, 16
      %v3307 = vrot.slane %v3305, 5
      %v3308 = vsel %vm1150, %v3303, %v3307
      %v3310 = vshrl.u32 %v2988, 16
      %v3312 = vrot.slane %v3310, 4
      %v3313 = vshll.u32 %v2988, 16
      %v3315 = vrot.slane %v3313, 5
      %v3316 = vor.u32 %v3312, %v3315
      %v3317 = vrot.slane %v3316, 4
      %v3319 = vshll.u32 %v2989, 16
      %v3321 = vrot.slane %v3319, 5
      %v3322 = vsel %vm1150, %v3317, %v3321
      %v3323 = vshrl.u32 %v2989, 16
      %v3325 = vrot.slane %v3323, 4
      %v3326 = vor.u32 %v3325, %v3321
      %v3327 = vrot.slane %v3326, 4
      %v3329 = vshll.u32 %v2990, 16
      %v3331 = vrot.slane %v3329, 5
      %v3332 = vsel %vm1150, %v3327, %v3331
      %v3334 = vshrl.u32 %v2991, 16
      %v3336 = vrot.slane %v3334, 4
      %v3337 = vshll.u32 %v2991, 16
      %v3339 = vrot.slane %v3337, 5
      %v3340 = vor.u32 %v3336, %v3339
      %v3341 = vrot.slane %v3340, 4
      %v3343 = vshll.u32 %v2992, 16
      %v3345 = vrot.slane %v3343, 5
      %v3346 = vsel %vm1150, %v3341, %v3345
      %v3347 = vshrl.u32 %v2992, 16
      %v3349 = vrot.slane %v3347, 4
      %v3350 = vor.u32 %v3349, %v3345
      %v3351 = vrot.slane %v3350, 4
      %v3353 = vshll.u32 %v2993, 16
      %v3355 = vrot.slane %v3353, 5
      %v3356 = vsel %vm1150, %v3351, %v3355
      %v3358 = vshrl.u32 %v2994, 16
      %v3360 = vrot.slane %v3358, 4
      %v3361 = vshll.u32 %v2994, 16
      %v3363 = vrot.slane %v3361, 5
      %v3364 = vor.u32 %v3360, %v3363
      %v3365 = vrot.slane %v3364, 4
      %v3367 = vshll.u32 %v2995, 16
      %v3369 = vrot.slane %v3367, 5
      %v3370 = vsel %vm1150, %v3365, %v3369
      %v3371 = vshrl.u32 %v2995, 16
      %v3373 = vrot.slane %v3371, 4
      %v3374 = vor.u32 %v3373, %v3369
      %v3375 = vrot.slane %v3374, 4
      %v3377 = vshll.u32 %v2996, 16
      %v3379 = vrot.slane %v3377, 5
      %v3380 = vsel %vm1150, %v3375, %v3379
      %s3381 = scalar_lea.vmem %s3, 64
      %v3382 = vld [vmem:[%s3381] sm:$0xf]
      %v3383 = vld [vmem:[%s3381 + $0x4] sm:$0xf]
      %v3384 = vld [vmem:[%s3381 + $0x8] sm:$0xf]
      %v3385 = vld [vmem:[%s3381 + $0xc] sm:$0xf]
      %v3386 = vunpack.c.l.b16 %v3010
      %v3387 = vunpack.c.l.b16 %v3020
      %v3388 = vunpack.c.l.b16 %v3034
      %v3389 = vunpack.c.l.b16 %v3044
      %v3390 = vunpack.c.l.b16 %v3058
      %v3391 = vunpack.c.l.b16 %v3068
      %v3392 = vunpack.c.l.b16 %v3082
      %v3393 = vunpack.c.l.b16 %v3092
      %v3394 = vunpack.c.l.b16 %v3106
      %v3395 = vunpack.c.l.b16 %v3116
      %v3396 = vunpack.c.l.b16 %v3130
      %v3397 = vunpack.c.l.b16 %v3140
      %v3398 = vunpack.c.l.b16 %v3154
      %v3399 = vunpack.c.l.b16 %v3164
      %v3400 = vunpack.c.l.b16 %v3178
      %v3401 = vunpack.c.l.b16 %v3188
      %v3402 = vunpack.c.l.b16 %v3202
      %v3403 = vunpack.c.l.b16 %v3212
      %v3404 = vunpack.c.l.b16 %v3226
      %v3405 = vunpack.c.l.b16 %v3236
      %v3406 = vunpack.c.l.b16 %v3250
      %v3407 = vunpack.c.l.b16 %v3260
      %v3408 = vunpack.c.l.b16 %v3274
      %v3409 = vunpack.c.l.b16 %v3284
      %v3410 = vunpack.c.l.b16 %v3298
      %v3411 = vunpack.c.l.b16 %v3308
      %v3412 = vunpack.c.l.b16 %v3322
      %v3413 = vunpack.c.l.b16 %v3332
      %v3414 = vunpack.c.l.b16 %v3346
      %v3415 = vunpack.c.l.b16 %v3356
      %v3416 = vunpack.c.l.b16 %v3370
      %v3417 = vunpack.c.l.b16 %v3380
      %v3418 = vpack.c.b16 %v3387, %v3386
      %v3419 = vpack.c.b16 %v3389, %v3388
      %v3420 = vpack.c.b16 %v3391, %v3390
      %v3421 = vpack.c.b16 %v3393, %v3392
      %v3422 = vpack.c.b16 %v3395, %v3394
      %v3423 = vpack.c.b16 %v3397, %v3396
      %v3424 = vpack.c.b16 %v3399, %v3398
      %v3425 = vpack.c.b16 %v3401, %v3400
      %v3426 = vpack.c.b16 %v3403, %v3402
      %v3427 = vpack.c.b16 %v3405, %v3404
      %v3428 = vpack.c.b16 %v3407, %v3406
      %v3429 = vpack.c.b16 %v3409, %v3408
      %v3430 = vpack.c.b16 %v3411, %v3410
      %v3431 = vpack.c.b16 %v3413, %v3412
      %v3432 = vpack.c.b16 %v3415, %v3414
      %v3433 = vpack.c.b16 %v3417, %v3416
      %v3438 = vunpack.c.l.b16 %v3382
      %v3439 = vunpack.c.l.b16 %v3383
      %v3440 = vunpack.c.l.b16 %v3384
      %v3441 = vunpack.c.l.b16 %v3385
      %v3442 = vpack.c.b16 %v3439, %v3438
      %v3443 = vpack.c.b16 %v3441, %v3440
      %v3447 = vsel %vm1094, %v3418, 0
      %v3450 = vsel %vm1094, %v3419, 0
      %v3453 = vsel %vm1094, %v3420, 0
      %v3456 = vsel %vm1094, %v3421, 0
      %v3459 = vsel %vm1094, %v3422, 0
      %v3462 = vsel %vm1094, %v3423, 0
      %v3465 = vsel %vm1094, %v3424, 0
      %v3468 = vsel %vm1094, %v3425, 0
      %v3471 = vsel %vm1094, %v3426, 0
      %v3474 = vsel %vm1094, %v3427, 0
      %v3477 = vsel %vm1094, %v3428, 0
      %v3480 = vsel %vm1094, %v3429, 0
      %v3483 = vsel %vm1094, %v3430, 0
      %v3486 = vsel %vm1094, %v3431, 0
      %v3489 = vsel %vm1094, %v3432, 0
      %v3492 = vsel %vm1094, %v3433, 0
      %3494 = vmatprep.subr.bf16.mxu0 0
      %3495 = vmatpush1.bf16.msra.mxu0 %v3442
      %3496 = vmatprep.subr.bf16.mxu0 0
      %3497 = vmatpush1.bf16.msra.mxu0 %v3443
      %3498 = vmatprep.subr.bf16.mxu0 0
      %3499 = vmatpush1.bf16.msra.mxu0 0
      %3500 = vmatprep.subr.bf16.mxu0 0
      %3501 = vmatpush1.bf16.msra.mxu0 0
      %3502 = vmatprep.subr.bf16.mxu0 0
      %3503 = vmatpush1.bf16.msra.mxu0 0
      %3504 = vmatprep.subr.bf16.mxu0 0
      %3505 = vmatpush1.bf16.msra.mxu0 0
      %3506 = vmatprep.subr.bf16.mxu0 0
      %3507 = vmatpush1.bf16.msra.mxu0 0
      %3508 = vmatprep.subr.bf16.mxu0 0
      %3509 = vmatpush1.bf16.msra.mxu0 0
      %3510 = vmatprep.subr.bf16.mxu0 0
      %3511 = vmatpush1.bf16.msra.mxu0 0
      %3512 = vmatprep.subr.bf16.mxu0 0
      %3513 = vmatpush1.bf16.msra.mxu0 0
      %3514 = vmatprep.subr.bf16.mxu0 0
      %3515 = vmatpush1.bf16.msra.mxu0 0
      %3516 = vmatprep.subr.bf16.mxu0 0
      %3517 = vmatpush1.bf16.msra.mxu0 0
      %3518 = vmatprep.subr.bf16.mxu0 0
      %3519 = vmatpush1.bf16.msra.mxu0 0
      %3520 = vmatprep.subr.bf16.mxu0 0
      %3521 = vmatpush1.bf16.msra.mxu0 0
      %3522 = vmatprep.subr.bf16.mxu0 0
      %3523 = vmatpush1.bf16.msra.mxu0 0
      %3524 = vmatprep.subr.bf16.mxu0 0
      %3525 = vmatpush1.bf16.msra.mxu0 0
      %3526 = vmatprep.mubr.bf16.mxu0 0
      %3527 = vmatmul.mubr.bf16.gmra.mrb[0].mxu0 %v3447
      %v3528 = vpop.f32.mrb[0].mxu0
      %v3529 = vadd.f32 0.0, %v3528
      %v3530 = vpop.f32.mrb[0].mxu0
      %v3531 = vpop.f32.mrb[0].mxu0
      %v3532 = vadd.f32 0.0, %v3531
      %v3533 = vpop.f32.mrb[0].mxu0
      %3534 = vmatprep.mubr.bf16.mxu0 0
      %3535 = vmatmul.mubr.bf16.gmra.mrb[0].mxu0 %v3450
      %v3536 = vpop.f32.mrb[0].mxu0
      %v3537 = vadd.f32 0.0, %v3536
      %v3538 = vpop.f32.mrb[0].mxu0
      %v3539 = vpop.f32.mrb[0].mxu0
      %v3540 = vadd.f32 0.0, %v3539
      %v3541 = vpop.f32.mrb[0].mxu0
      %3542 = vmatprep.mubr.bf16.mxu0 0
      %3543 = vmatmul.mubr.bf16.gmra.mrb[0].mxu0 %v3453
      %v3544 = vpop.f32.mrb[0].mxu0
      %v3545 = vadd.f32 0.0, %v3544
      %v3546 = vpop.f32.mrb[0].mxu0
      %v3547 = vpop.f32.mrb[0].mxu0
      %v3548 = vadd.f32 0.0, %v3547
      %v3549 = vpop.f32.mrb[0].mxu0
      %3550 = vmatprep.mubr.bf16.mxu0 0
      %3551 = vmatmul.mubr.bf16.gmra.mrb[0].mxu0 %v3456
      %v3552 = vpop.f32.mrb[0].mxu0
      %v3553 = vadd.f32 0.0, %v3552
      %v3554 = vpop.f32.mrb[0].mxu0
      %v3555 = vpop.f32.mrb[0].mxu0
      %v3556 = vadd.f32 0.0, %v3555
      %v3557 = vpop.f32.mrb[0].mxu0
      %3558 = vmatprep.mubr.bf16.mxu0 0
      %3559 = vmatmul.mubr.bf16.gmra.mrb[0].mxu0 %v3459
      %v3560 = vpop.f32.mrb[0].mxu0
      %v3561 = vadd.f32 0.0, %v3560
      %v3562 = vpop.f32.mrb[0].mxu0
      %v3563 = vpop.f32.mrb[0].mxu0
      %v3564 = vadd.f32 0.0, %v3563
      %v3565 = vpop.f32.mrb[0].mxu0
      %3566 = vmatprep.mubr.bf16.mxu0 0
      %3567 = vmatmul.mubr.bf16.gmra.mrb[0].mxu0 %v3462
      %v3568 = vpop.f32.mrb[0].mxu0
      %v3569 = vadd.f32 0.0, %v3568
      %v3570 = vpop.f32.mrb[0].mxu0
      %v3571 = vpop.f32.mrb[0].mxu0
      %v3572 = vadd.f32 0.0, %v3571
      %v3573 = vpop.f32.mrb[0].mxu0
      %3574 = vmatprep.mubr.bf16.mxu0 0
      %3575 = vmatmul.mubr.bf16.gmra.mrb[0].mxu0 %v3465
      %v3576 = vpop.f32.mrb[0].mxu0
      %v3577 = vadd.f32 0.0, %v3576
      %v3578 = vpop.f32.mrb[0].mxu0
      %v3579 = vpop.f32.mrb[0].mxu0
      %v3580 = vadd.f32 0.0, %v3579
      %v3581 = vpop.f32.mrb[0].mxu0
      %3582 = vmatprep.mubr.bf16.mxu0 0
      %3583 = vmatmul.mubr.bf16.gmra.mrb[0].mxu0 %v3468
      %v3584 = vpop.f32.mrb[0].mxu0
      %v3585 = vadd.f32 0.0, %v3584
      %v3586 = vpop.f32.mrb[0].mxu0
      %v3587 = vpop.f32.mrb[0].mxu0
      %v3588 = vadd.f32 0.0, %v3587
      %v3589 = vpop.f32.mrb[0].mxu0
      %3590 = vmatprep.mubr.bf16.mxu0 0
      %3591 = vmatmul.mubr.bf16.gmra.mrb[0].mxu0 %v3471
      %v3592 = vpop.f32.mrb[0].mxu0
      %v3593 = vadd.f32 0.0, %v3592
      %v3594 = vpop.f32.mrb[0].mxu0
      %v3595 = vpop.f32.mrb[0].mxu0
      %v3596 = vadd.f32 0.0, %v3595
      %v3597 = vpop.f32.mrb[0].mxu0
      %3598 = vmatprep.mubr.bf16.mxu0 0
      %3599 = vmatmul.mubr.bf16.gmra.mrb[0].mxu0 %v3474
      %v3600 = vpop.f32.mrb[0].mxu0
      %v3601 = vadd.f32 0.0, %v3600
      %v3602 = vpop.f32.mrb[0].mxu0
      %v3603 = vpop.f32.mrb[0].mxu0
      %v3604 = vadd.f32 0.0, %v3603
      %v3605 = vpop.f32.mrb[0].mxu0
      %3606 = vmatprep.mubr.bf16.mxu0 0
      %3607 = vmatmul.mubr.bf16.gmra.mrb[0].mxu0 %v3477
      %v3608 = vpop.f32.mrb[0].mxu0
      %v3609 = vadd.f32 0.0, %v3608
      %v3610 = vpop.f32.mrb[0].mxu0
      %v3611 = vpop.f32.mrb[0].mxu0
      %v3612 = vadd.f32 0.0, %v3611
      %v3613 = vpop.f32.mrb[0].mxu0
      %3614 = vmatprep.mubr.bf16.mxu0 0
      %3615 = vmatmul.mubr.bf16.gmra.mrb[0].mxu0 %v3480
      %v3616 = vpop.f32.mrb[0].mxu0
      %v3617 = vadd.f32 0.0, %v3616
      %v3618 = vpop.f32.mrb[0].mxu0
      %v3619 = vpop.f32.mrb[0].mxu0
      %v3620 = vadd.f32 0.0, %v3619
      %v3621 = vpop.f32.mrb[0].mxu0
      %3622 = vmatprep.mubr.bf16.mxu0 0
      %3623 = vmatmul.mubr.bf16.gmra.mrb[0].mxu0 %v3483
      %v3624 = vpop.f32.mrb[0].mxu0
      %v3625 = vadd.f32 0.0, %v3624
      %v3626 = vpop.f32.mrb[0].mxu0
      %v3627 = vpop.f32.mrb[0].mxu0
      %v3628 = vadd.f32 0.0, %v3627
      %v3629 = vpop.f32.mrb[0].mxu0
      %3630 = vmatprep.mubr.bf16.mxu0 0
      %3631 = vmatmul.mubr.bf16.gmra.mrb[0].mxu0 %v3486
      %v3632 = vpop.f32.mrb[0].mxu0
      %v3633 = vadd.f32 0.0, %v3632
      %v3634 = vpop.f32.mrb[0].mxu0
      %v3635 = vpop.f32.mrb[0].mxu0
      %v3636 = vadd.f32 0.0, %v3635
      %v3637 = vpop.f32.mrb[0].mxu0
      %3638 = vmatprep.mubr.bf16.mxu0 0
      %3639 = vmatmul.mubr.bf16.gmra.mrb[0].mxu0 %v3489
      %v3640 = vpop.f32.mrb[0].mxu0
      %v3641 = vadd.f32 0.0, %v3640
      %v3642 = vpop.f32.mrb[0].mxu0
      %v3643 = vpop.f32.mrb[0].mxu0
      %v3644 = vadd.f32 0.0, %v3643
      %v3645 = vpop.f32.mrb[0].mxu0
      %3646 = vmatprep.mubr.bf16.mxu0 0
      %3647 = vmatmul.mubr.bf16.gmra.mrb[0].mxu0 %v3492
      %v3648 = vpop.f32.mrb[0].mxu0
      %v3649 = vadd.f32 0.0, %v3648
      %v3650 = vpop.f32.mrb[0].mxu0
      %v3651 = vpop.f32.mrb[0].mxu0
      %v3652 = vadd.f32 0.0, %v3651
      %v3653 = vpop.f32.mrb[0].mxu0
      %3654 = vdwg.mxu0
      %v3655 = vadd.f32 %v2917, %v3529
      %v3656 = vadd.f32 %v2918, %v3532
      %v3657 = vadd.f32 %v2919, %v3537
      %v3658 = vadd.f32 %v2920, %v3540
      %v3659 = vadd.f32 %v2921, %v3545
      %v3660 = vadd.f32 %v2922, %v3548
      %v3661 = vadd.f32 %v2923, %v3553
      %v3662 = vadd.f32 %v2924, %v3556
      %v3663 = vadd.f32 %v2925, %v3561
      %v3664 = vadd.f32 %v2926, %v3564
      %v3665 = vadd.f32 %v2927, %v3569
      %v3666 = vadd.f32 %v2928, %v3572
      %v3667 = vadd.f32 %v2929, %v3577
      %v3668 = vadd.f32 %v2930, %v3580
      %v3669 = vadd.f32 %v2931, %v3585
      %v3670 = vadd.f32 %v2932, %v3588
      %v3671 = vadd.f32 %v2933, %v3593
      %v3672 = vadd.f32 %v2934, %v3596
      %v3673 = vadd.f32 %v2935, %v3601
      %v3674 = vadd.f32 %v2936, %v3604
      %v3675 = vadd.f32 %v2937, %v3609
      %v3676 = vadd.f32 %v2938, %v3612
      %v3677 = vadd.f32 %v2939, %v3617
      %v3678 = vadd.f32 %v2940, %v3620
      %v3679 = vadd.f32 %v2941, %v3625
      %v3680 = vadd.f32 %v2942, %v3628
      %v3681 = vadd.f32 %v2943, %v3633
      %v3682 = vadd.f32 %v2944, %v3636
      %v3683 = vadd.f32 %v2945, %v3641
      %v3684 = vadd.f32 %v2946, %v3644
      %v3685 = vadd.f32 %v2947, %v3649
      %v3686 = vadd.f32 %v2948, %v3652
      %v3687 = vld [vmem:[%s981] sm:$0xe]
      %v3688 = vld [vmem:[%s981 + $0xc] sm:$0xe]
      %v3689 = vld [vmem:[%s981 + $0x18] sm:$0xe]
      %v3690 = vld [vmem:[%s981 + $0x24] sm:$0xe]
      %v3691 = vld [vmem:[%s981 + $0x30] sm:$0xe]
      %v3692 = vld [vmem:[%s981 + $0x3c] sm:$0xe]
      %v3693 = vld [vmem:[%s981 + $0x48] sm:$0xe]
      %v3694 = vld [vmem:[%s981 + $0x54] sm:$0xe]
      %v3695 = vld [vmem:[%s981 + $0x60] sm:$0xe]
      %v3696 = vld [vmem:[%s981 + $0x6c] sm:$0xe]
      %v3697 = vld [vmem:[%s981 + $0x78] sm:$0xe]
      %v3698 = vld [vmem:[%s981 + $0x84] sm:$0xe]
      %v3699 = vld [vmem:[%s981 + $0x90] sm:$0xe]
      %v3700 = vld [vmem:[%s981 + $0x9c] sm:$0xe]
      %v3701 = vld [vmem:[%s981 + $0xa8] sm:$0xe]
      %v3702 = vld [vmem:[%s981 + $0xb4] sm:$0xe]
      %v3751 = vrot.slane %v3687, 5
      %v3752 = vrot.slane %v3751, 4
      %v3753 = vrot.slane %v2950, 5
      %v3754 = vsel %vm2160, %v3752, %v3753
      %v3755 = vrot.slane %v3753, 4
      %v3756 = vrot.slane %v2951, 5
      %v3757 = vsel %vm2160, %v3755, %v3756
      %v3758 = vrot.slane %v3688, 5
      %v3759 = vrot.slane %v3758, 4
      %v3760 = vrot.slane %v2953, 5
      %v3761 = vsel %vm2160, %v3759, %v3760
      %v3762 = vrot.slane %v3760, 4
      %v3763 = vrot.slane %v2954, 5
      %v3764 = vsel %vm2160, %v3762, %v3763
      %v3765 = vrot.slane %v3689, 5
      %v3766 = vrot.slane %v3765, 4
      %v3767 = vrot.slane %v2956, 5
      %v3768 = vsel %vm2160, %v3766, %v3767
      %v3769 = vrot.slane %v3767, 4
      %v3770 = vrot.slane %v2957, 5
      %v3771 = vsel %vm2160, %v3769, %v3770
      %v3772 = vrot.slane %v3690, 5
      %v3773 = vrot.slane %v3772, 4
      %v3774 = vrot.slane %v2959, 5
      %v3775 = vsel %vm2160, %v3773, %v3774
      %v3776 = vrot.slane %v3774, 4
      %v3777 = vrot.slane %v2960, 5
      %v3778 = vsel %vm2160, %v3776, %v3777
      %v3779 = vrot.slane %v3691, 5
      %v3780 = vrot.slane %v3779, 4
      %v3781 = vrot.slane %v2962, 5
      %v3782 = vsel %vm2160, %v3780, %v3781
      %v3783 = vrot.slane %v3781, 4
      %v3784 = vrot.slane %v2963, 5
      %v3785 = vsel %vm2160, %v3783, %v3784
      %v3786 = vrot.slane %v3692, 5
      %v3787 = vrot.slane %v3786, 4
      %v3788 = vrot.slane %v2965, 5
      %v3789 = vsel %vm2160, %v3787, %v3788
      %v3790 = vrot.slane %v3788, 4
      %v3791 = vrot.slane %v2966, 5
      %v3792 = vsel %vm2160, %v3790, %v3791
      %v3793 = vrot.slane %v3693, 5
      %v3794 = vrot.slane %v3793, 4
      %v3795 = vrot.slane %v2968, 5
      %v3796 = vsel %vm2160, %v3794, %v3795
      %v3797 = vrot.slane %v3795, 4
      %v3798 = vrot.slane %v2969, 5
      %v3799 = vsel %vm2160, %v3797, %v3798
      %v3800 = vrot.slane %v3694, 5
      %v3801 = vrot.slane %v3800, 4
      %v3802 = vrot.slane %v2971, 5
      %v3803 = vsel %vm2160, %v3801, %v3802
      %v3804 = vrot.slane %v3802, 4
      %v3805 = vrot.slane %v2972, 5
      %v3806 = vsel %vm2160, %v3804, %v3805
      %v3807 = vrot.slane %v3695, 5
      %v3808 = vrot.slane %v3807, 4
      %v3809 = vrot.slane %v2974, 5
      %v3810 = vsel %vm2160, %v3808, %v3809
      %v3811 = vrot.slane %v3809, 4
      %v3812 = vrot.slane %v2975, 5
      %v3813 = vsel %vm2160, %v3811, %v3812
      %v3814 = vrot.slane %v3696, 5
      %v3815 = vrot.slane %v3814, 4
      %v3816 = vrot.slane %v2977, 5
      %v3817 = vsel %vm2160, %v3815, %v3816
      %v3818 = vrot.slane %v3816, 4
      %v3819 = vrot.slane %v2978, 5
      %v3820 = vsel %vm2160, %v3818, %v3819
      %v3821 = vrot.slane %v3697, 5
      %v3822 = vrot.slane %v3821, 4
      %v3823 = vrot.slane %v2980, 5
      %v3824 = vsel %vm2160, %v3822, %v3823
      %v3825 = vrot.slane %v3823, 4
      %v3826 = vrot.slane %v2981, 5
      %v3827 = vsel %vm2160, %v3825, %v3826
      %v3828 = vrot.slane %v3698, 5
      %v3829 = vrot.slane %v3828, 4
      %v3830 = vrot.slane %v2983, 5
      %v3831 = vsel %vm2160, %v3829, %v3830
      %v3832 = vrot.slane %v3830, 4
      %v3833 = vrot.slane %v2984, 5
      %v3834 = vsel %vm2160, %v3832, %v3833
      %v3835 = vrot.slane %v3699, 5
      %v3836 = vrot.slane %v3835, 4
      %v3837 = vrot.slane %v2986, 5
      %v3838 = vsel %vm2160, %v3836, %v3837
      %v3839 = vrot.slane %v3837, 4
      %v3840 = vrot.slane %v2987, 5
      %v3841 = vsel %vm2160, %v3839, %v3840
      %v3842 = vrot.slane %v3700, 5
      %v3843 = vrot.slane %v3842, 4
      %v3844 = vrot.slane %v2989, 5
      %v3845 = vsel %vm2160, %v3843, %v3844
      %v3846 = vrot.slane %v3844, 4
      %v3847 = vrot.slane %v2990, 5
      %v3848 = vsel %vm2160, %v3846, %v3847
      %v3849 = vrot.slane %v3701, 5
      %v3850 = vrot.slane %v3849, 4
      %v3851 = vrot.slane %v2992, 5
      %v3852 = vsel %vm2160, %v3850, %v3851
      %v3853 = vrot.slane %v3851, 4
      %v3854 = vrot.slane %v2993, 5
      %v3855 = vsel %vm2160, %v3853, %v3854
      %v3856 = vrot.slane %v3702, 5
      %v3857 = vrot.slane %v3856, 4
      %v3858 = vrot.slane %v2995, 5
      %v3859 = vsel %vm2160, %v3857, %v3858
      %v3860 = vrot.slane %v3858, 4
      %v3861 = vrot.slane %v2996, 5
      %v3862 = vsel %vm2160, %v3860, %v3861
      %s3863 = scalar_lea.vmem %s3, 80
      %v3864 = vld [vmem:[%s3863] sm:$0xf]
      %v3865 = vld [vmem:[%s3863 + $0x4] sm:$0xf]
      %v3866 = vld [vmem:[%s3863 + $0x8] sm:$0xf]
      %v3867 = vld [vmem:[%s3863 + $0xc] sm:$0xf]
      %v3868 = vunpack.c.l.b16 %v3754
      %v3869 = vunpack.c.l.b16 %v3757
      %v3870 = vunpack.c.l.b16 %v3761
      %v3871 = vunpack.c.l.b16 %v3764
      %v3872 = vunpack.c.l.b16 %v3768
      %v3873 = vunpack.c.l.b16 %v3771
      %v3874 = vunpack.c.l.b16 %v3775
      %v3875 = vunpack.c.l.b16 %v3778
      %v3876 = vunpack.c.l.b16 %v3782
      %v3877 = vunpack.c.l.b16 %v3785
      %v3878 = vunpack.c.l.b16 %v3789
      %v3879 = vunpack.c.l.b16 %v3792
      %v3880 = vunpack.c.l.b16 %v3796
      %v3881 = vunpack.c.l.b16 %v3799
      %v3882 = vunpack.c.l.b16 %v3803
      %v3883 = vunpack.c.l.b16 %v3806
      %v3884 = vunpack.c.l.b16 %v3810
      %v3885 = vunpack.c.l.b16 %v3813
      %v3886 = vunpack.c.l.b16 %v3817
      %v3887 = vunpack.c.l.b16 %v3820
      %v3888 = vunpack.c.l.b16 %v3824
      %v3889 = vunpack.c.l.b16 %v3827
      %v3890 = vunpack.c.l.b16 %v3831
      %v3891 = vunpack.c.l.b16 %v3834
      %v3892 = vunpack.c.l.b16 %v3838
      %v3893 = vunpack.c.l.b16 %v3841
      %v3894 = vunpack.c.l.b16 %v3845
      %v3895 = vunpack.c.l.b16 %v3848
      %v3896 = vunpack.c.l.b16 %v3852
      %v3897 = vunpack.c.l.b16 %v3855
      %v3898 = vunpack.c.l.b16 %v3859
      %v3899 = vunpack.c.l.b16 %v3862
      %v3900 = vpack.c.b16 %v3869, %v3868
      %v3901 = vpack.c.b16 %v3871, %v3870
      %v3902 = vpack.c.b16 %v3873, %v3872
      %v3903 = vpack.c.b16 %v3875, %v3874
      %v3904 = vpack.c.b16 %v3877, %v3876
      %v3905 = vpack.c.b16 %v3879, %v3878
      %v3906 = vpack.c.b16 %v3881, %v3880
      %v3907 = vpack.c.b16 %v3883, %v3882
      %v3908 = vpack.c.b16 %v3885, %v3884
      %v3909 = vpack.c.b16 %v3887, %v3886
      %v3910 = vpack.c.b16 %v3889, %v3888
      %v3911 = vpack.c.b16 %v3891, %v3890
      %v3912 = vpack.c.b16 %v3893, %v3892
      %v3913 = vpack.c.b16 %v3895, %v3894
      %v3914 = vpack.c.b16 %v3897, %v3896
      %v3915 = vpack.c.b16 %v3899, %v3898
      %v3920 = vunpack.c.l.b16 %v3864
      %v3921 = vunpack.c.l.b16 %v3865
      %v3922 = vunpack.c.l.b16 %v3866
      %v3923 = vunpack.c.l.b16 %v3867
      %v3924 = vpack.c.b16 %v3921, %v3920
      %v3925 = vpack.c.b16 %v3923, %v3922
      %v3929 = vsel %vm1094, %v3900, 0
      %v3932 = vsel %vm1094, %v3901, 0
      %v3935 = vsel %vm1094, %v3902, 0
      %v3938 = vsel %vm1094, %v3903, 0
      %v3941 = vsel %vm1094, %v3904, 0
      %v3944 = vsel %vm1094, %v3905, 0
      %v3947 = vsel %vm1094, %v3906, 0
      %v3950 = vsel %vm1094, %v3907, 0
      %v3953 = vsel %vm1094, %v3908, 0
      %v3956 = vsel %vm1094, %v3909, 0
      %v3959 = vsel %vm1094, %v3910, 0
      %v3962 = vsel %vm1094, %v3911, 0
      %v3965 = vsel %vm1094, %v3912, 0
      %v3968 = vsel %vm1094, %v3913, 0
      %v3971 = vsel %vm1094, %v3914, 0
      %v3974 = vsel %vm1094, %v3915, 0
      %3976 = vmatprep.subr.bf16.mxu0 0
      %3977 = vmatpush1.bf16.msra.mxu0 %v3924
      %3978 = vmatprep.subr.bf16.mxu0 0
      %3979 = vmatpush1.bf16.msra.mxu0 %v3925
      %3980 = vmatprep.subr.bf16.mxu0 0
      %3981 = vmatpush1.bf16.msra.mxu0 0
      %3982 = vmatprep.subr.bf16.mxu0 0
      %3983 = vmatpush1.bf16.msra.mxu0 0
      %3984 = vmatprep.subr.bf16.mxu0 0
      %3985 = vmatpush1.bf16.msra.mxu0 0
      %3986 = vmatprep.subr.bf16.mxu0 0
      %3987 = vmatpush1.bf16.msra.mxu0 0
      %3988 = vmatprep.subr.bf16.mxu0 0
      %3989 = vmatpush1.bf16.msra.mxu0 0
      %3990 = vmatprep.subr.bf16.mxu0 0
      %3991 = vmatpush1.bf16.msra.mxu0 0
      %3992 = vmatprep.subr.bf16.mxu0 0
      %3993 = vmatpush1.bf16.msra.mxu0 0
      %3994 = vmatprep.subr.bf16.mxu0 0
      %3995 = vmatpush1.bf16.msra.mxu0 0
      %3996 = vmatprep.subr.bf16.mxu0 0
      %3997 = vmatpush1.bf16.msra.mxu0 0
      %3998 = vmatprep.subr.bf16.mxu0 0
      %3999 = vmatpush1.bf16.msra.mxu0 0
      %4000 = vmatprep.subr.bf16.mxu0 0
      %4001 = vmatpush1.bf16.msra.mxu0 0
      %4002 = vmatprep.subr.bf16.mxu0 0
      %4003 = vmatpush1.bf16.msra.mxu0 0
      %4004 = vmatprep.subr.bf16.mxu0 0
      %4005 = vmatpush1.bf16.msra.mxu0 0
      %4006 = vmatprep.subr.bf16.mxu0 0
      %4007 = vmatpush1.bf16.msra.mxu0 0
      %4008 = vmatprep.mubr.bf16.mxu0 0
      %4009 = vmatmul.mubr.bf16.gmra.mrb[0].mxu0 %v3929
      %v4010 = vpop.f32.mrb[0].mxu0
      %v4011 = vadd.f32 0.0, %v4010
      %v4012 = vpop.f32.mrb[0].mxu0
      %v4013 = vpop.f32.mrb[0].mxu0
      %v4014 = vadd.f32 0.0, %v4013
      %v4015 = vpop.f32.mrb[0].mxu0
      %4016 = vmatprep.mubr.bf16.mxu0 0
      %4017 = vmatmul.mubr.bf16.gmra.mrb[0].mxu0 %v3932
      %v4018 = vpop.f32.mrb[0].mxu0
      %v4019 = vadd.f32 0.0, %v4018
      %v4020 = vpop.f32.mrb[0].mxu0
      %v4021 = vpop.f32.mrb[0].mxu0
      %v4022 = vadd.f32 0.0, %v4021
      %v4023 = vpop.f32.mrb[0].mxu0
      %4024 = vmatprep.mubr.bf16.mxu0 0
      %4025 = vmatmul.mubr.bf16.gmra.mrb[0].mxu0 %v3935
      %v4026 = vpop.f32.mrb[0].mxu0
      %v4027 = vadd.f32 0.0, %v4026
      %v4028 = vpop.f32.mrb[0].mxu0
      %v4029 = vpop.f32.mrb[0].mxu0
      %v4030 = vadd.f32 0.0, %v4029
      %v4031 = vpop.f32.mrb[0].mxu0
      %4032 = vmatprep.mubr.bf16.mxu0 0
      %4033 = vmatmul.mubr.bf16.gmra.mrb[0].mxu0 %v3938
      %v4034 = vpop.f32.mrb[0].mxu0
      %v4035 = vadd.f32 0.0, %v4034
      %v4036 = vpop.f32.mrb[0].mxu0
      %v4037 = vpop.f32.mrb[0].mxu0
      %v4038 = vadd.f32 0.0, %v4037
      %v4039 = vpop.f32.mrb[0].mxu0
      %4040 = vmatprep.mubr.bf16.mxu0 0
      %4041 = vmatmul.mubr.bf16.gmra.mrb[0].mxu0 %v3941
      %v4042 = vpop.f32.mrb[0].mxu0
      %v4043 = vadd.f32 0.0, %v4042
      %v4044 = vpop.f32.mrb[0].mxu0
      %v4045 = vpop.f32.mrb[0].mxu0
      %v4046 = vadd.f32 0.0, %v4045
      %v4047 = vpop.f32.mrb[0].mxu0
      %4048 = vmatprep.mubr.bf16.mxu0 0
      %4049 = vmatmul.mubr.bf16.gmra.mrb[0].mxu0 %v3944
      %v4050 = vpop.f32.mrb[0].mxu0
      %v4051 = vadd.f32 0.0, %v4050
      %v4052 = vpop.f32.mrb[0].mxu0
      %v4053 = vpop.f32.mrb[0].mxu0
      %v4054 = vadd.f32 0.0, %v4053
      %v4055 = vpop.f32.mrb[0].mxu0
      %4056 = vmatprep.mubr.bf16.mxu0 0
      %4057 = vmatmul.mubr.bf16.gmra.mrb[0].mxu0 %v3947
      %v4058 = vpop.f32.mrb[0].mxu0
      %v4059 = vadd.f32 0.0, %v4058
      %v4060 = vpop.f32.mrb[0].mxu0
      %v4061 = vpop.f32.mrb[0].mxu0
      %v4062 = vadd.f32 0.0, %v4061
      %v4063 = vpop.f32.mrb[0].mxu0
      %4064 = vmatprep.mubr.bf16.mxu0 0
      %4065 = vmatmul.mubr.bf16.gmra.mrb[0].mxu0 %v3950
      %v4066 = vpop.f32.mrb[0].mxu0
      %v4067 = vadd.f32 0.0, %v4066
      %v4068 = vpop.f32.mrb[0].mxu0
      %v4069 = vpop.f32.mrb[0].mxu0
      %v4070 = vadd.f32 0.0, %v4069
      %v4071 = vpop.f32.mrb[0].mxu0
      %4072 = vmatprep.mubr.bf16.mxu0 0
      %4073 = vmatmul.mubr.bf16.gmra.mrb[0].mxu0 %v3953
      %v4074 = vpop.f32.mrb[0].mxu0
      %v4075 = vadd.f32 0.0, %v4074
      %v4076 = vpop.f32.mrb[0].mxu0
      %v4077 = vpop.f32.mrb[0].mxu0
      %v4078 = vadd.f32 0.0, %v4077
      %v4079 = vpop.f32.mrb[0].mxu0
      %4080 = vmatprep.mubr.bf16.mxu0 0
      %4081 = vmatmul.mubr.bf16.gmra.mrb[0].mxu0 %v3956
      %v4082 = vpop.f32.mrb[0].mxu0
      %v4083 = vadd.f32 0.0, %v4082
      %v4084 = vpop.f32.mrb[0].mxu0
      %v4085 = vpop.f32.mrb[0].mxu0
      %v4086 = vadd.f32 0.0, %v4085
      %v4087 = vpop.f32.mrb[0].mxu0
      %4088 = vmatprep.mubr.bf16.mxu0 0
      %4089 = vmatmul.mubr.bf16.gmra.mrb[0].mxu0 %v3959
      %v4090 = vpop.f32.mrb[0].mxu0
      %v4091 = vadd.f32 0.0, %v4090
      %v4092 = vpop.f32.mrb[0].mxu0
      %v4093 = vpop.f32.mrb[0].mxu0
      %v4094 = vadd.f32 0.0, %v4093
      %v4095 = vpop.f32.mrb[0].mxu0
      %4096 = vmatprep.mubr.bf16.mxu0 0
      %4097 = vmatmul.mubr.bf16.gmra.mrb[0].mxu0 %v3962
      %v4098 = vpop.f32.mrb[0].mxu0
      %v4099 = vadd.f32 0.0, %v4098
      %v4100 = vpop.f32.mrb[0].mxu0
      %v4101 = vpop.f32.mrb[0].mxu0
      %v4102 = vadd.f32 0.0, %v4101
      %v4103 = vpop.f32.mrb[0].mxu0
      %4104 = vmatprep.mubr.bf16.mxu0 0
      %4105 = vmatmul.mubr.bf16.gmra.mrb[0].mxu0 %v3965
      %v4106 = vpop.f32.mrb[0].mxu0
      %v4107 = vadd.f32 0.0, %v4106
      %v4108 = vpop.f32.mrb[0].mxu0
      %v4109 = vpop.f32.mrb[0].mxu0
      %v4110 = vadd.f32 0.0, %v4109
      %v4111 = vpop.f32.mrb[0].mxu0
      %4112 = vmatprep.mubr.bf16.mxu0 0
      %4113 = vmatmul.mubr.bf16.gmra.mrb[0].mxu0 %v3968
      %v4114 = vpop.f32.mrb[0].mxu0
      %v4115 = vadd.f32 0.0, %v4114
      %v4116 = vpop.f32.mrb[0].mxu0
      %v4117 = vpop.f32.mrb[0].mxu0
      %v4118 = vadd.f32 0.0, %v4117
      %v4119 = vpop.f32.mrb[0].mxu0
      %4120 = vmatprep.mubr.bf16.mxu0 0
      %4121 = vmatmul.mubr.bf16.gmra.mrb[0].mxu0 %v3971
      %v4122 = vpop.f32.mrb[0].mxu0
      %v4123 = vadd.f32 0.0, %v4122
      %v4124 = vpop.f32.mrb[0].mxu0
      %v4125 = vpop.f32.mrb[0].mxu0
      %v4126 = vadd.f32 0.0, %v4125
      %v4127 = vpop.f32.mrb[0].mxu0
      %4128 = vmatprep.mubr.bf16.mxu0 0
      %4129 = vmatmul.mubr.bf16.gmra.mrb[0].mxu0 %v3974
      %v4130 = vpop.f32.mrb[0].mxu0
      %v4131 = vadd.f32 0.0, %v4130
      %v4132 = vpop.f32.mrb[0].mxu0
      %v4133 = vpop.f32.mrb[0].mxu0
      %v4134 = vadd.f32 0.0, %v4133
      %v4135 = vpop.f32.mrb[0].mxu0
      %4136 = vdwg.mxu0
      %v4137 = vadd.f32 %v3655, %v4011
      %v4138 = vadd.f32 %v3656, %v4014
      %v4139 = vadd.f32 %v3657, %v4019
      %v4140 = vadd.f32 %v3658, %v4022
      %v4141 = vadd.f32 %v3659, %v4027
      %v4142 = vadd.f32 %v3660, %v4030
      %v4143 = vadd.f32 %v3661, %v4035
      %v4144 = vadd.f32 %v3662, %v4038
      %v4145 = vadd.f32 %v3663, %v4043
      %v4146 = vadd.f32 %v3664, %v4046
      %v4147 = vadd.f32 %v3665, %v4051
      %v4148 = vadd.f32 %v3666, %v4054
      %v4149 = vadd.f32 %v3667, %v4059
      %v4150 = vadd.f32 %v3668, %v4062
      %v4151 = vadd.f32 %v3669, %v4067
      %v4152 = vadd.f32 %v3670, %v4070
      %v4153 = vadd.f32 %v3671, %v4075
      %v4154 = vadd.f32 %v3672, %v4078
      %v4155 = vadd.f32 %v3673, %v4083
      %v4156 = vadd.f32 %v3674, %v4086
      %v4157 = vadd.f32 %v3675, %v4091
      %v4158 = vadd.f32 %v3676, %v4094
      %v4159 = vadd.f32 %v3677, %v4099
      %v4160 = vadd.f32 %v3678, %v4102
      %v4161 = vadd.f32 %v3679, %v4107
      %v4162 = vadd.f32 %v3680, %v4110
      %v4163 = vadd.f32 %v3681, %v4115
      %v4164 = vadd.f32 %v3682, %v4118
      %v4165 = vadd.f32 %v3683, %v4123
      %v4166 = vadd.f32 %v3684, %v4126
      %v4167 = vadd.f32 %v3685, %v4131
      %v4168 = vadd.f32 %v3686, %v4134
      %4169 = vxpose.xlu0.b32.start [1/16] %v4137, 128
      %4170 = vxpose.xlu0.b32.cont [2/16] %v4138, 128
      %4171 = vxpose.xlu0.b32.cont [3/16] %v4139, 128
      %4172 = vxpose.xlu0.b32.cont [4/16] %v4140, 128
      %4173 = vxpose.xlu0.b32.cont [5/16] %v4141, 128
      %4174 = vxpose.xlu0.b32.cont [6/16] %v4142, 128
      %4175 = vxpose.xlu0.b32.cont [7/16] %v4143, 128
      %4176 = vxpose.xlu0.b32.cont [8/16] %v4144, 128
      %4177 = vxpose.xlu0.b32.cont [9/16] %v4145, 128
      %4178 = vxpose.xlu0.b32.cont [10/16] %v4146, 128
      %4179 = vxpose.xlu0.b32.cont [11/16] %v4147, 128
      %4180 = vxpose.xlu0.b32.cont [12/16] %v4148, 128
      %4181 = vxpose.xlu0.b32.cont [13/16] %v4149, 128
      %4182 = vxpose.xlu0.b32.cont [14/16] %v4150, 128
      %4183 = vxpose.xlu0.b32.cont [15/16] %v4151, 128
      %4184 = vxpose.xlu0.b32.end [16/16] %v4152, 128
      %v4185 = vpop.trf.xlu0
      %v4186 = vpop.trf.xlu0
      %v4187 = vpop.trf.xlu0
      %v4188 = vpop.trf.xlu0
      %v4189 = vpop.trf.xlu0
      %v4190 = vpop.trf.xlu0
      %v4191 = vpop.trf.xlu0
      %v4192 = vpop.trf.xlu0
      %v4193 = vpop.trf.xlu0
      %v4194 = vpop.trf.xlu0
      %v4195 = vpop.trf.xlu0
      %v4196 = vpop.trf.xlu0
      %v4197 = vpop.trf.xlu0
      %v4198 = vpop.trf.xlu0
      %v4199 = vpop.trf.xlu0
      %v4200 = vpop.trf.xlu0
      %4201 = vxpose.xlu0.b32.start [1/16] %v4153, 128
      %4202 = vxpose.xlu0.b32.cont [2/16] %v4154, 128
      %4203 = vxpose.xlu0.b32.cont [3/16] %v4155, 128
      %4204 = vxpose.xlu0.b32.cont [4/16] %v4156, 128
      %4205 = vxpose.xlu0.b32.cont [5/16] %v4157, 128
      %4206 = vxpose.xlu0.b32.cont [6/16] %v4158, 128
      %4207 = vxpose.xlu0.b32.cont [7/16] %v4159, 128
      %4208 = vxpose.xlu0.b32.cont [8/16] %v4160, 128
      %4209 = vxpose.xlu0.b32.cont [9/16] %v4161, 128
      %4210 = vxpose.xlu0.b32.cont [10/16] %v4162, 128
      %4211 = vxpose.xlu0.b32.cont [11/16] %v4163, 128
      %4212 = vxpose.xlu0.b32.cont [12/16] %v4164, 128
      %4213 = vxpose.xlu0.b32.cont [13/16] %v4165, 128
      %4214 = vxpose.xlu0.b32.cont [14/16] %v4166, 128
      %4215 = vxpose.xlu0.b32.cont [15/16] %v4167, 128
      %4216 = vxpose.xlu0.b32.end [16/16] %v4168, 128
      %v4217 = vpop.trf.xlu0
      %v4218 = vpop.trf.xlu0
      %v4219 = vpop.trf.xlu0
      %v4220 = vpop.trf.xlu0
      %v4221 = vpop.trf.xlu0
      %v4222 = vpop.trf.xlu0
      %v4223 = vpop.trf.xlu0
      %v4224 = vpop.trf.xlu0
      %v4225 = vpop.trf.xlu0
      %v4226 = vpop.trf.xlu0
      %v4227 = vpop.trf.xlu0
      %v4228 = vpop.trf.xlu0
      %v4229 = vpop.trf.xlu0
      %v4230 = vpop.trf.xlu0
      %v4231 = vpop.trf.xlu0
      %v4232 = vpop.trf.xlu0
      %4233 = vst [vmem:[%s238] sm:$0xff] %v4185
      %4234 = vst [vmem:[%s238 + $0x8] sm:$0xff] %v4217
      %p4235 = scmp.lt.s32.totalorder %s19, 1
      %s4236 = scalar_select %p4235, %s19, 1
      %p4237 = scmp.lt.s32.totalorder %s20, 0
      %s4238 = scalar_select %p4237, %s20, 0
      %s4239 = smul.addr %s4238, 2
      %s4240 = smul.addr %s4236, 2
      %s4241 = sadd.s32 %s4239, %s4240
      %s4242 = smul.addr %s4241, 8
      %s4243 = scalar_lea.vmem %s4, %s4242
      // Predicated region
      $region41: #{dense_layer_mask_forward.5} parent=35 // pred_check
        %p4244 = pneg %p138
      $region42: #{dense_layer_mask_forward.5} parent=35 // pred_check_branch
        %4246 = sbr.rel (%p4244) target = $region44
      $region43: #{dense_layer_mask_forward.5} parent=35 // pred_region
        _
      $region44: #{dense_layer_mask_forward.5} parent=35 // pred_fallthru
        _
    $region36: #{dense_layer_mask_forward.5} parent=5 // pred_fallthru
      _
    %p4247 = scmp.le.s32.totalorder 2, %s10
    // Predicated region
    $region45: #{dense_layer_mask_forward.5} parent=5 // pred_check
      %p4248 = pneg %p4247
    $region46: #{dense_layer_mask_forward.5} parent=5 // pred_check_branch
      %4250 = sbr.rel (%p4248) target = $region48
    $region47: #{dense_layer_mask_forward.5} parent=5 // pred_region
      %s4251 = ssub.s32 %s10, 2
      // Predicated region
      $region49: #{dense_layer_mask_forward.5} parent=47 // pred_check
        %p4252 = pneg %p144
      $region50: #{dense_layer_mask_forward.5} parent=47 // pred_check_branch
        %4254 = sbr.rel (%p4252) target = $region52
      $region51: #{dense_layer_mask_forward.5} parent=47 // pred_region
        %p4255 = scmp.lt.s32.totalorder %s21, 1
        %s4256 = scalar_select %p4255, %s21, 1
        %p4257 = scmp.lt.s32.totalorder %s22, 0
        %s4258 = scalar_select %p4257, %s22, 0
        %s4259 = smul.addr %s4258, 2
        %s4260 = smul.addr %s4256, 2
        %s4261 = sadd.s32 %s4259, %s4260
        %s4262 = smul.addr %s4261, 8
        %s4263 = scalar_lea.vmem %s4, %s4262
      $region52: #{dense_layer_mask_forward.5} parent=47 // pred_fallthru
        _
    $region48: #{dense_layer_mask_forward.5} parent=5 // pred_fallthru
      _
  $region6: #{dense_layer_mask_forward.5} parent=0 // loop_footer
    %s14 = sadd.s32 1, %s10
  $region7: #{dense_layer_mask_forward.5} parent=0 // loop_footer_branch
    %9 = sbr.rel target = $region3
  $region8: #{dense_layer_mask_forward.5} parent=0 // loop_exit
    _

</llo_original>
